<compile_context>
chip_gen: v6e
topology: v6e:2x2x1
jax: 0.10.0
libtpu: 0.0.40
codegen_flags: <defaults>
</compile_context>

<pallas_src>
from functools import partial

import jax
import jax.numpy as jnp
from jax.experimental import pallas as pl
from jax.experimental.pallas import tpu as pltpu


def _mxu(a, b):
    """MXU matmul: bf16 inputs (full rate on v5e/v6e/v7x), f32 accumulation."""
    return jnp.dot(a.astype(jnp.bfloat16), b.astype(jnp.bfloat16),
                   preferred_element_type=jnp.float32)


# ----------------------------------------------------------------------------
# Fused encoder + decode-loop kernel.
# ----------------------------------------------------------------------------
def seq2seq_kernel(tf_ref,                 # SMEM [T] int32 teacher-force flags
                   trg_ref,                # [T,B,1] int32 target token ids
                   x_ref,                  # [B,L,C] flattened image features
                   cw_ref, cb_ref,         # conv stem (1x1)        [C,E],[1,E]
                   hw_ref, hb_ref,         # init_h                 [E,D],[1,D]
                   uw_ref, ub_ref,         # attention U            [E,A],[1,A]
                   aw_ref,                 # attention A weight     [1,A]
                   whid_ref, bhid_ref,     # fused [Ww|Whh]   [D,A+3D],[1,A+3D]
                   emb_ref,                # embedding table        [Vp,M]
                   wemb_ref,               # fused [fcm|Wih_e]      [M,Vp+3D]
                   wwgt_ref,               # fused [fce|Wih_c]      [E,Vp+3D]
                   bih_ref,                # GRU input bias         [1,3D]
                   fch_ref, fcb_ref,       # fc_out hidden part     [D,Vp],[1,Vp]
                   out_ref,                # [T,B,Vp] output
                   h_sc, oh_sc):           # scratch [B,D], [B,Vp]
    T, B, Vp = out_ref.shape
    D = h_sc.shape[1]
    A = aw_ref.shape[1]

    # ---------------- encoder (stem + U(enc) hoisted + init_h) --------------
    Bx, L, C = x_ref.shape
    x2d = x_ref[...].reshape(Bx * L, C)
    f2d = jnp.maximum(_mxu(x2d, cw_ref[...]) + cb_ref[...], 0.0)      # [B*L,E]
    u2d = _mxu(f2d, uw_ref[...]) + ub_ref[...]                        # [B*L,A]
    enc = f2d.reshape(B, L, -1)                 # encoder_outputs  [B,L,E]
    uhs = u2d.reshape(B, L, A)                  # U(enc), constant over steps
    mean = jnp.mean(enc, axis=1)                                      # [B,E]
    h_sc[...] = _mxu(mean, hw_ref[...]) + hb_ref[...]                 # init h

    # ---------------- decode-loop constants (hoisted) ------------------------
    aw = aw_ref[...]                                                  # [1,A]
    iota_v = jax.lax.broadcasted_iota(jnp.int32, (B, Vp), 1)

    out_ref[0] = jnp.zeros((B, Vp), jnp.float32)       # outputs[0] stays zero
    oh_sc[...] = (iota_v == trg_ref[0]).astype(jnp.float32)  # input = trg[0]

    @pl.loop(1, T, unroll=True)
    def _step(t):
        hidden = h_sc[...]                                            # [B,D]
        inp_oh = oh_sc[...]                                           # [B,Vp]

        # embedding (dropout == identity at inference)
        embedded = _mxu(inp_oh, emb_ref[...])                         # [B,M]

        # fused hidden projection: [Ww | Whh] (+ [Wb | bhh]) -> 128 lanes
        hf = _mxu(hidden, whid_ref[...]) + bhid_ref[...]              # [B,A+3D]
        w_ah = hf[:, :A]                                              # [B,A]
        gh = hf[:, A:]                                                # [B,3D]

        # attention (keys u_hs hoisted; A bias dropped: softmax shift-invariant)
        combined = jnp.tanh(uhs + w_ah[:, None, :])                   # [B,L,A]
        scores = jnp.sum(combined * aw, axis=2)                       # [B,L]
        m = jnp.max(scores, axis=1, keepdims=True)
        e = jnp.exp(scores - m)
        attn = e * pl.reciprocal(jnp.sum(e, axis=1, keepdims=True), approx=True)
        weighted = jnp.sum(attn[:, :, None] * enc, axis=1)            # [B,E]

        # fused input projections: columns = [fc_out part (Vp) | GRU gates (3D)]
        ef = _mxu(embedded, wemb_ref[...])                            # [B,Vp+3D]
        wf = _mxu(weighted, wwgt_ref[...])                            # [B,Vp+3D]

        # GRU cell (gate order r|z|n, PyTorch bias placement: r * (Whh h + bhh))
        gi = ef[:, Vp:] + wf[:, Vp:] + bih_ref[...]                   # [B,3D]
        r = jax.nn.sigmoid(gi[:, :D] + gh[:, :D])
        z = jax.nn.sigmoid(gi[:, D:2 * D] + gh[:, D:2 * D])
        n = jnp.tanh(gi[:, 2 * D:] + r * gh[:, 2 * D:])
        h_new = (1.0 - z) * n + z * hidden                            # [B,D]

        # prediction: fc_out(cat(output, weighted, embedded)); padded columns
        # carry fcb = -1e30 so they never win the argmax below.
        pred = (_mxu(h_new, fch_ref[...]) + ef[:, :Vp] + wf[:, :Vp]
                + fcb_ref[...])                                       # [B,Vp]
        out_ref[t] = pred
        h_sc[...] = h_new

        # next input: teacher forcing (trg[t]) vs greedy argmax, pl.when-gated
        tf = tf_ref[t]

        @pl.when(tf == 1)
        def _():
            oh_sc[...] = (iota_v == trg_ref[t]).astype(jnp.float32)

        @pl.when(tf == 0)
        def _():
            mx = jnp.max(pred, axis=1, keepdims=True)
            idx = jnp.min(jnp.where(pred == mx, iota_v, Vp),
                          axis=1, keepdims=True)                      # first max
            oh_sc[...] = (iota_v == idx).astype(jnp.float32)


# ----------------------------------------------------------------------------
# Seq2Seq forward (thin JAX glue; all hot work inside the single kernel)
# ----------------------------------------------------------------------------
@partial(jax.jit, static_argnames=("stride", "vocab"))
def seq2seq_forward(src, trg, tf_flags, params, stride=4, vocab=64):
    B = src.shape[0]
    T = trg.shape[0]

    # "ResNet" stem stand-in: strided subsample, NCHW -> [B, L, C]
    xs = src[:, :, ::stride, ::stride]
    xs = jnp.transpose(xs, (0, 2, 3, 1))
    x_flat = xs.reshape(B, -1, xs.shape[-1]).astype(jnp.float32)

    trg_ids = trg.astype(jnp.int32).reshape(T, B, 1)
    tf_i = tf_flags.astype(jnp.int32).reshape(T)

    order = ["conv_w", "conv_b", "ih_w", "ih_b", "Uw", "Ub", "Aw",
             "Whid", "bhid", "emb", "Wemb", "Wwgt", "bih", "fch", "fcb"]
    ops = [params[k] for k in order]

    V_pad = params["emb"].shape[0]
    D = params["ih_w"].shape[1]

    out_pad = pl.pallas_call(
        seq2seq_kernel,
        out_shape=jax.ShapeDtypeStruct((T, B, V_pad), jnp.float32),
        in_specs=([pl.BlockSpec(memory_space=pltpu.MemorySpace.SMEM)]       # tf
                  + [pl.BlockSpec(memory_space=pltpu.MemorySpace.VMEM)]
                  * (2 + len(ops))),
        out_specs=pl.BlockSpec(memory_space=pltpu.MemorySpace.VMEM),
        scratch_shapes=[pltpu.VMEM((B, D), jnp.float32),        # hidden state
                        pltpu.VMEM((B, V_pad), jnp.float32)],   # input one-hot
    )(tf_i, trg_ids, x_flat, *ops)

    return out_pad[:, :, :vocab]


# ----------------------------------------------------------------------------
def make_params(key, C_in, E, D, A, M, V):
    V_pad = ((V + 127) // 128) * 128
    ks = jax.random.split(key, 16)
    nrm = lambda k, s: 0.1 * jax.random.normal(k, s, dtype=jnp.float32)
    bf = jnp.bfloat16  # MXU-side weights stored bf16

    # PyTorch-layout weights
    wih = nrm(ks[6], (3 * D, M + E))       # GRU weight_ih (rows r|z|n), in=cat(emb,ctx)
    whh = nrm(ks[7], (3 * D, D))           # GRU weight_hh
    b_ih = nrm(ks[8], (3 * D,))
    b_hh = nrm(ks[9], (3 * D,))
    fcw = nrm(ks[15], (V, D + E + M))      # fc_out on cat(output, weighted, embedded)
    Ww = nrm(ks[10], (D, A))
    Wb = nrm(ks[11], (1, A))
    Aw = nrm(ks[12], (1, A))               # A: Linear(A,1); bias dropped (softmax inv.)

    def padc(a):                           # pad lane axis to V_pad
        return jnp.pad(a, ((0, 0), (0, V_pad - a.shape[1])))

    fch = fcw[:, :D].T                     # [D,V]
    fce = fcw[:, D:D + E].T                # [E,V]
    fcm = fcw[:, D + E:].T                 # [M,V]
    Wih_e = wih[:, :M].T                   # [M,3D]
    Wih_c = wih[:, M:].T                   # [E,3D]

    emb = jnp.pad(nrm(ks[14], (V, M)), ((0, V_pad - V), (0, 0)))       # [Vp,M]
    fcb = jnp.concatenate([jnp.zeros((1, V), jnp.float32),
                           jnp.full((1, V_pad - V), -1e30, jnp.float32)], axis=1)

    return {
        # encoder (1x1 conv stem + init_h), stored transposed for x @ W
        "conv_w": nrm(ks[0], (C_in, E)).astype(bf), "conv_b": nrm(ks[1], (1, E)),
        "ih_w": nrm(ks[2], (E, D)).astype(bf),      "ih_b": nrm(ks[3], (1, D)),
        # attention
        "Uw": nrm(ks[4], (E, A)).astype(bf),        "Ub": nrm(ks[5], (1, A)),
        "Aw": Aw,
        # fused hidden projection: [Ww | Whh^T] -> [D, A+3D] (=128 lanes)
        "Whid": jnp.concatenate([Ww, whh.T], axis=1).astype(bf),
        "bhid": jnp.concatenate([Wb, b_hh.reshape(1, 3 * D)], axis=1),
        # embedding (rows padded to V_pad)
        "emb": emb.astype(bf),
        # fused per-LHS projections (columns = [fc_out part | GRU gate part])
        "Wemb": jnp.concatenate([padc(fcm), Wih_e], axis=1).astype(bf),  # [M,Vp+3D]
        "Wwgt": jnp.concatenate([padc(fce), Wih_c], axis=1).astype(bf),  # [E,Vp+3D]
        "bih": b_ih.reshape(1, 3 * D),
        # fc_out hidden part + padded bias
        "fch": padc(fch).astype(bf),
        "fcb": fcb,
    }


if __name__ == "__main__":
    # small, module-consistent shapes
    B, C_in, H, W = 2, 3, 16, 16          # src images (NCHW)
    E, D, A, M, V = 32, 32, 32, 16, 64    # encoder/decoder/attn/emb dims, vocab
    T = 6                                 # trg_length
    teacher_forcing_ratio = 0.5
    stride = 4                            # stem stride -> L = (H/4)*(W/4) = 16

    key = jax.random.PRNGKey(0)
    k_src, k_trg, k_tf, k_par = jax.random.split(key, 4)
    src = jax.random.normal(k_src, (B, C_in, H, W), dtype=jnp.float32)
    trg = jax.random.randint(k_trg, (T, B), 0, V, dtype=jnp.int32)
    # deterministic per-step teacher-forcing coin flips (entry 0 unused)
    tf_flags = (jax.random.uniform(k_tf, (T,)) < teacher_forcing_ratio
                ).astype(jnp.int32)
    params = make_params(k_par, C_in, E, D, A, M, V)

    out = seq2seq_forward(src, trg, tf_flags, params, stride=stride, vocab=V)
    jax.block_until_ready(out)
    assert out.shape == (T, B, V)
    print("KERNEL_OK")
</pallas_src>

<mosaic_0001>
module attributes {stable_mosaic.version = 11 : i64} {
  func.func @seq2seq_kernel(%arg0: memref<6xi32, #tpu.memory_space<smem>>, %arg1: memref<6x2x1xi32, #tpu.memory_space<vmem>>, %arg2: memref<2x16x3xf32, #tpu.memory_space<vmem>>, %arg3: memref<3x32xbf16, #tpu.memory_space<vmem>>, %arg4: memref<1x32xf32, #tpu.memory_space<vmem>>, %arg5: memref<32x32xbf16, #tpu.memory_space<vmem>>, %arg6: memref<1x32xf32, #tpu.memory_space<vmem>>, %arg7: memref<32x32xbf16, #tpu.memory_space<vmem>>, %arg8: memref<1x32xf32, #tpu.memory_space<vmem>>, %arg9: memref<1x32xf32, #tpu.memory_space<vmem>>, %arg10: memref<32x128xbf16, #tpu.memory_space<vmem>>, %arg11: memref<1x128xf32, #tpu.memory_space<vmem>>, %arg12: memref<128x16xbf16, #tpu.memory_space<vmem>>, %arg13: memref<16x224xbf16, #tpu.memory_space<vmem>>, %arg14: memref<32x224xbf16, #tpu.memory_space<vmem>>, %arg15: memref<1x96xf32, #tpu.memory_space<vmem>>, %arg16: memref<32x128xbf16, #tpu.memory_space<vmem>>, %arg17: memref<1x128xf32, #tpu.memory_space<vmem>>, %arg18: memref<6x2x128xf32, #tpu.memory_space<vmem>>, %arg19: memref<2x32xf32, #tpu.memory_space<vmem>>, %arg20: memref<2x128xf32, #tpu.memory_space<vmem>>) attributes {dimension_semantics = [], scalar_prefetch = 0 : i64, scratch_operands = 2 : i64, tpu.core_type = #tpu.core_type<tc>} {
    %c0 = arith.constant 0 : index
    %c0_0 = arith.constant 0 : index
    %c0_1 = arith.constant 0 : index
    %0 = vector.load %arg2[%c0, %c0_0, %c0_1] : memref<2x16x3xf32, #tpu.memory_space<vmem>>, vector<2x16x3xf32>
    %1 = vector.shape_cast %0 : vector<2x16x3xf32> to vector<32x3xf32>
    %c0_2 = arith.constant 0 : index
    %c0_3 = arith.constant 0 : index
    %2 = vector.load %arg3[%c0_2, %c0_3] : memref<3x32xbf16, #tpu.memory_space<vmem>>, vector<3x32xbf16>
    %3 = arith.truncf %1 : vector<32x3xf32> to vector<32x3xbf16>
    %cst = arith.constant dense<0.000000e+00> : vector<32x32xf32>
    %4 = tpu.matmul %3, %2, %cst {dimension_numbers = #tpu.dot_dimension_numbers<[1], [0], [0], [1], [0, 0, 1, 1], [], []>} : vector<32x3xbf16>, vector<3x32xbf16>, vector<32x32xf32> -> vector<32x32xf32>
    %c0_4 = arith.constant 0 : index
    %c0_5 = arith.constant 0 : index
    %5 = vector.load %arg4[%c0_4, %c0_5] : memref<1x32xf32, #tpu.memory_space<vmem>>, vector<1x32xf32>
    %6 = vector.broadcast %5 : vector<1x32xf32> to vector<32x32xf32>
    %7 = arith.addf %4, %6 : vector<32x32xf32>
    %cst_6 = arith.constant 0.000000e+00 : f32
    %8 = vector.broadcast %cst_6 : f32 to vector<32x32xf32>
    %9 = arith.maximumf %7, %8 : vector<32x32xf32>
    %c0_7 = arith.constant 0 : index
    %c0_8 = arith.constant 0 : index
    %10 = vector.load %arg7[%c0_7, %c0_8] : memref<32x32xbf16, #tpu.memory_space<vmem>>, vector<32x32xbf16>
    %11 = arith.truncf %9 : vector<32x32xf32> to vector<32x32xbf16>
    %cst_9 = arith.constant dense<0.000000e+00> : vector<32x32xf32>
    %12 = tpu.matmul %11, %10, %cst_9 {dimension_numbers = #tpu.dot_dimension_numbers<[1], [0], [0], [1], [0, 0, 1, 1], [], []>} : vector<32x32xbf16>, vector<32x32xbf16>, vector<32x32xf32> -> vector<32x32xf32>
    %c0_10 = arith.constant 0 : index
    %c0_11 = arith.constant 0 : index
    %13 = vector.load %arg8[%c0_10, %c0_11] : memref<1x32xf32, #tpu.memory_space<vmem>>, vector<1x32xf32>
    %14 = vector.broadcast %13 : vector<1x32xf32> to vector<32x32xf32>
    %15 = arith.addf %12, %14 : vector<32x32xf32>
    %16 = vector.shape_cast %9 : vector<32x32xf32> to vector<2x16x32xf32>
    %17 = vector.shape_cast %15 : vector<32x32xf32> to vector<2x16x32xf32>
    %cst_12 = arith.constant dense<0.000000e+00> : vector<2x32xf32>
    %18 = vector.multi_reduction <add>, %16, %cst_12 [1] : vector<2x16x32xf32> to vector<2x32xf32>
    %cst_13 = arith.constant 1.600000e+01 : f32
    %19 = vector.broadcast %cst_13 : f32 to vector<2x32xf32>
    %20 = arith.divf %18, %19 : vector<2x32xf32>
    %c0_14 = arith.constant 0 : index
    %c0_15 = arith.constant 0 : index
    %21 = vector.load %arg5[%c0_14, %c0_15] : memref<32x32xbf16, #tpu.memory_space<vmem>>, vector<32x32xbf16>
    %22 = arith.truncf %20 : vector<2x32xf32> to vector<2x32xbf16>
    %cst_16 = arith.constant dense<0.000000e+00> : vector<2x32xf32>
    %23 = tpu.matmul %22, %21, %cst_16 {dimension_numbers = #tpu.dot_dimension_numbers<[1], [0], [0], [1], [0, 0, 1, 1], [], []>} : vector<2x32xbf16>, vector<32x32xbf16>, vector<2x32xf32> -> vector<2x32xf32>
    %c0_17 = arith.constant 0 : index
    %c0_18 = arith.constant 0 : index
    %24 = vector.load %arg6[%c0_17, %c0_18] : memref<1x32xf32, #tpu.memory_space<vmem>>, vector<1x32xf32>
    %25 = vector.broadcast %24 : vector<1x32xf32> to vector<2x32xf32>
    %26 = arith.addf %23, %25 : vector<2x32xf32>
    %c0_19 = arith.constant 0 : index
    %c0_20 = arith.constant 0 : index
    %27 = vector.load %arg19[%c0_19, %c0_20] : memref<2x32xf32, #tpu.memory_space<vmem>>, vector<2x32xf32>
    tpu.vector_store %arg19[%c0_19, %c0_20], %26 {strides = array<i32>} : memref<2x32xf32, #tpu.memory_space<vmem>>, vector<2x32xf32>,
    %c0_21 = arith.constant 0 : index
    %c0_22 = arith.constant 0 : index
    %28 = vector.load %arg9[%c0_21, %c0_22] : memref<1x32xf32, #tpu.memory_space<vmem>>, vector<1x32xf32>
    %29 = tpu.iota {dimensions = array<i32: 1>} : vector<2x128xi32>
    %cst_23 = arith.constant 0.000000e+00 : f32
    %30 = vector.broadcast %cst_23 : f32 to vector<2x128xf32>
    %c0_24 = arith.constant 0 : index
    %c0_25 = arith.constant 0 : index
    %c0_26 = arith.constant 0 : index
    %31 = vector.load %arg18[%c0_24, %c0_25, %c0_26] : memref<6x2x128xf32, #tpu.memory_space<vmem>>, vector<1x2x128xf32>
    %32 = vector.shape_cast %31 : vector<1x2x128xf32> to vector<2x128xf32>
    %33 = vector.shape_cast %30 : vector<2x128xf32> to vector<1x2x128xf32>
    tpu.vector_store %arg18[%c0_24, %c0_25, %c0_26], %33 {strides = array<i32>} : memref<6x2x128xf32, #tpu.memory_space<vmem>>, vector<1x2x128xf32>,
    %c0_27 = arith.constant 0 : index
    %c0_28 = arith.constant 0 : index
    %c0_29 = arith.constant 0 : index
    %34 = vector.load %arg1[%c0_27, %c0_28, %c0_29] : memref<6x2x1xi32, #tpu.memory_space<vmem>>, vector<1x2x1xi32>
    %35 = vector.shape_cast %34 : vector<1x2x1xi32> to vector<2x1xi32>
    %36 = vector.broadcast %35 : vector<2x1xi32> to vector<2x128xi32>
    %37 = arith.cmpi eq, %29, %36 : vector<2x128xi32>
    %38 = arith.extui %37 : vector<2x128xi1> to vector<2x128xi32>
    %39 = arith.sitofp %38 : vector<2x128xi32> to vector<2x128xf32>
    %c0_30 = arith.constant 0 : index
    %c0_31 = arith.constant 0 : index
    %40 = vector.load %arg20[%c0_30, %c0_31] : memref<2x128xf32, #tpu.memory_space<vmem>>, vector<2x128xf32>
    tpu.vector_store %arg20[%c0_30, %c0_31], %39 {strides = array<i32>} : memref<2x128xf32, #tpu.memory_space<vmem>>, vector<2x128xf32>,
    %c0_i32 = arith.constant 0 : i32
    %c1_i32 = arith.constant 1 : i32
    %41 = arith.muli %c0_i32, %c1_i32 : i32
    %c1_i32_32 = arith.constant 1 : i32
    %42 = arith.addi %c1_i32_32, %41 : i32
    %c0_33 = arith.constant 0 : index
    %c0_34 = arith.constant 0 : index
    %43 = vector.load %arg19[%c0_33, %c0_34] : memref<2x32xf32, #tpu.memory_space<vmem>>, vector<2x32xf32>
    %c0_35 = arith.constant 0 : index
    %c0_36 = arith.constant 0 : index
    %44 = vector.load %arg20[%c0_35, %c0_36] : memref<2x128xf32, #tpu.memory_space<vmem>>, vector<2x128xf32>
    %c0_37 = arith.constant 0 : index
    %c0_38 = arith.constant 0 : index
    %45 = vector.load %arg12[%c0_37, %c0_38] : memref<128x16xbf16, #tpu.memory_space<vmem>>, vector<128x16xbf16>
    %46 = arith.truncf %44 : vector<2x128xf32> to vector<2x128xbf16>
    %cst_39 = arith.constant dense<0.000000e+00> : vector<2x16xf32>
    %47 = tpu.matmul %46, %45, %cst_39 {dimension_numbers = #tpu.dot_dimension_numbers<[1], [0], [0], [1], [0, 0, 1, 1], [], []>} : vector<2x128xbf16>, vector<128x16xbf16>, vector<2x16xf32> -> vector<2x16xf32>
    %c0_40 = arith.constant 0 : index
    %c0_41 = arith.constant 0 : index
    %48 = vector.load %arg10[%c0_40, %c0_41] : memref<32x128xbf16, #tpu.memory_space<vmem>>, vector<32x128xbf16>
    %49 = arith.truncf %43 : vector<2x32xf32> to vector<2x32xbf16>
    %cst_42 = arith.constant dense<0.000000e+00> : vector<2x128xf32>
    %50 = tpu.matmul %49, %48, %cst_42 {dimension_numbers = #tpu.dot_dimension_numbers<[1], [0], [0], [1], [0, 0, 1, 1], [], []>} : vector<2x32xbf16>, vector<32x128xbf16>, vector<2x128xf32> -> vector<2x128xf32>
    %c0_43 = arith.constant 0 : index
    %c0_44 = arith.constant 0 : index
    %51 = vector.load %arg11[%c0_43, %c0_44] : memref<1x128xf32, #tpu.memory_space<vmem>>, vector<1x128xf32>
    %52 = vector.broadcast %51 : vector<1x128xf32> to vector<2x128xf32>
    %53 = arith.addf %50, %52 : vector<2x128xf32>
    %54 = vector.extract_strided_slice %53 {offsets = [0, 0], sizes = [2, 32], strides = [1, 1]} : vector<2x128xf32> to vector<2x32xf32>
    %55 = vector.extract_strided_slice %53 {offsets = [0, 32], sizes = [2, 96], strides = [1, 1]} : vector<2x128xf32> to vector<2x96xf32>
    %56 = vector.shape_cast %54 : vector<2x32xf32> to vector<2x1x32xf32>
    %57 = vector.broadcast %56 : vector<2x1x32xf32> to vector<2x16x32xf32>
    %58 = arith.addf %17, %57 : vector<2x16x32xf32>
    %59 = math.tanh %58 : vector<2x16x32xf32>
    %60 = vector.shape_cast %28 : vector<1x32xf32> to vector<1x1x32xf32>
    %61 = vector.broadcast %60 : vector<1x1x32xf32> to vector<2x16x32xf32>
    %62 = arith.mulf %59, %61 : vector<2x16x32xf32>
    %cst_45 = arith.constant dense<0.000000e+00> : vector<2x16xf32>
    %63 = vector.multi_reduction <add>, %62, %cst_45 [2] : vector<2x16x32xf32> to vector<2x16xf32>
    %cst_46 = arith.constant dense<0xFF800000> : vector<2xf32>
    %64 = vector.multi_reduction <maximumf>, %63, %cst_46 [1] : vector<2x16xf32> to vector<2xf32>
    %65 = vector.shape_cast %64 : vector<2xf32> to vector<2x1xf32>
    %66 = vector.broadcast %65 : vector<2x1xf32> to vector<2x16xf32>
    %67 = arith.subf %63, %66 : vector<2x16xf32>
    %68 = math.exp %67 : vector<2x16xf32>
    %cst_47 = arith.constant dense<0.000000e+00> : vector<2xf32>
    %69 = vector.multi_reduction <add>, %68, %cst_47 [1] : vector<2x16xf32> to vector<2xf32>
    %70 = vector.shape_cast %69 : vector<2xf32> to vector<2x1xf32>
    %71 = tpu.reciprocal %70 {approx = true} : vector<2x1xf32> -> vector<2x1xf32>
    %72 = vector.broadcast %71 : vector<2x1xf32> to vector<2x16xf32>
    %73 = arith.mulf %68, %72 : vector<2x16xf32>
    %74 = vector.shape_cast %73 : vector<2x16xf32> to vector<2x16x1xf32>
    %75 = vector.broadcast %74 : vector<2x16x1xf32> to vector<2x16x32xf32>
    %76 = arith.mulf %75, %16 : vector<2x16x32xf32>
    %cst_48 = arith.constant dense<0.000000e+00> : vector<2x32xf32>
    %77 = vector.multi_reduction <add>, %76, %cst_48 [1] : vector<2x16x32xf32> to vector<2x32xf32>
    %c0_49 = arith.constant 0 : index
    %c0_50 = arith.constant 0 : index
    %78 = vector.load %arg13[%c0_49, %c0_50] : memref<16x224xbf16, #tpu.memory_space<vmem>>, vector<16x224xbf16>
    %79 = arith.truncf %47 : vector<2x16xf32> to vector<2x16xbf16>
    %cst_51 = arith.constant dense<0.000000e+00> : vector<2x224xf32>
    %80 = tpu.matmul %79, %78, %cst_51 {dimension_numbers = #tpu.dot_dimension_numbers<[1], [0], [0], [1], [0, 0, 1, 1], [], []>} : vector<2x16xbf16>, vector<16x224xbf16>, vector<2x224xf32> -> vector<2x224xf32>
    %c0_52 = arith.constant 0 : index
    %c0_53 = arith.constant 0 : index
    %81 = vector.load %arg14[%c0_52, %c0_53] : memref<32x224xbf16, #tpu.memory_space<vmem>>, vector<32x224xbf16>
    %82 = arith.truncf %77 : vector<2x32xf32> to vector<2x32xbf16>
    %cst_54 = arith.constant dense<0.000000e+00> : vector<2x224xf32>
    %83 = tpu.matmul %82, %81, %cst_54 {dimension_numbers = #tpu.dot_dimension_numbers<[1], [0], [0], [1], [0, 0, 1, 1], [], []>} : vector<2x32xbf16>, vector<32x224xbf16>, vector<2x224xf32> -> vector<2x224xf32>
    %84 = vector.extract_strided_slice %80 {offsets = [0, 128], sizes = [2, 96], strides = [1, 1]} : vector<2x224xf32> to vector<2x96xf32>
    %85 = vector.extract_strided_slice %83 {offsets = [0, 128], sizes = [2, 96], strides = [1, 1]} : vector<2x224xf32> to vector<2x96xf32>
    %86 = arith.addf %84, %85 : vector<2x96xf32>
    %c0_55 = arith.constant 0 : index
    %c0_56 = arith.constant 0 : index
    %87 = vector.load %arg15[%c0_55, %c0_56] : memref<1x96xf32, #tpu.memory_space<vmem>>, vector<1x96xf32>
    %88 = vector.broadcast %87 : vector<1x96xf32> to vector<2x96xf32>
    %89 = arith.addf %86, %88 : vector<2x96xf32>
    %90 = vector.extract_strided_slice %89 {offsets = [0, 0], sizes = [2, 32], strides = [1, 1]} : vector<2x96xf32> to vector<2x32xf32>
    %91 = vector.extract_strided_slice %55 {offsets = [0, 0], sizes = [2, 32], strides = [1, 1]} : vector<2x96xf32> to vector<2x32xf32>
    %92 = arith.addf %90, %91 : vector<2x32xf32>
    %93 = arith.negf %92 : vector<2x32xf32>
    %94 = math.exp %93 : vector<2x32xf32>
    %cst_57 = arith.constant 1.000000e+00 : f32
    %95 = vector.broadcast %cst_57 : f32 to vector<2x32xf32>
    %96 = arith.addf %95, %94 : vector<2x32xf32>
    %97 = arith.divf %95, %96 : vector<2x32xf32>
    %98 = vector.extract_strided_slice %89 {offsets = [0, 32], sizes = [2, 32], strides = [1, 1]} : vector<2x96xf32> to vector<2x32xf32>
    %99 = vector.extract_strided_slice %55 {offsets = [0, 32], sizes = [2, 32], strides = [1, 1]} : vector<2x96xf32> to vector<2x32xf32>
    %100 = arith.addf %98, %99 : vector<2x32xf32>
    %101 = arith.negf %100 : vector<2x32xf32>
    %102 = math.exp %101 : vector<2x32xf32>
    %cst_58 = arith.constant 1.000000e+00 : f32
    %103 = vector.broadcast %cst_58 : f32 to vector<2x32xf32>
    %104 = arith.addf %103, %102 : vector<2x32xf32>
    %105 = arith.divf %103, %104 : vector<2x32xf32>
    %106 = vector.extract_strided_slice %89 {offsets = [0, 64], sizes = [2, 32], strides = [1, 1]} : vector<2x96xf32> to vector<2x32xf32>
    %107 = vector.extract_strided_slice %55 {offsets = [0, 64], sizes = [2, 32], strides = [1, 1]} : vector<2x96xf32> to vector<2x32xf32>
    %108 = arith.mulf %97, %107 : vector<2x32xf32>
    %109 = arith.addf %106, %108 : vector<2x32xf32>
    %110 = math.tanh %109 : vector<2x32xf32>
    %cst_59 = arith.constant 1.000000e+00 : f32
    %111 = vector.broadcast %cst_59 : f32 to vector<2x32xf32>
    %112 = arith.subf %111, %105 : vector<2x32xf32>
    %113 = arith.mulf %112, %110 : vector<2x32xf32>
    %114 = arith.mulf %105, %43 : vector<2x32xf32>
    %115 = arith.addf %113, %114 : vector<2x32xf32>
    %c0_60 = arith.constant 0 : index
    %c0_61 = arith.constant 0 : index
    %116 = vector.load %arg16[%c0_60, %c0_61] : memref<32x128xbf16, #tpu.memory_space<vmem>>, vector<32x128xbf16>
    %117 = arith.truncf %115 : vector<2x32xf32> to vector<2x32xbf16>
    %cst_62 = arith.constant dense<0.000000e+00> : vector<2x128xf32>
    %118 = tpu.matmul %117, %116, %cst_62 {dimension_numbers = #tpu.dot_dimension_numbers<[1], [0], [0], [1], [0, 0, 1, 1], [], []>} : vector<2x32xbf16>, vector<32x128xbf16>, vector<2x128xf32> -> vector<2x128xf32>
    %119 = vector.extract_strided_slice %80 {offsets = [0, 0], sizes = [2, 128], strides = [1, 1]} : vector<2x224xf32> to vector<2x128xf32>
    %120 = arith.addf %118, %119 : vector<2x128xf32>
    %121 = vector.extract_strided_slice %83 {offsets = [0, 0], sizes = [2, 128], strides = [1, 1]} : vector<2x224xf32> to vector<2x128xf32>
    %122 = arith.addf %120, %121 : vector<2x128xf32>
    %c0_63 = arith.constant 0 : index
    %c0_64 = arith.constant 0 : index
    %123 = vector.load %arg17[%c0_63, %c0_64] : memref<1x128xf32, #tpu.memory_space<vmem>>, vector<1x128xf32>
    %124 = vector.broadcast %123 : vector<1x128xf32> to vector<2x128xf32>
    %125 = arith.addf %122, %124 : vector<2x128xf32>
    %126 = arith.index_cast %42 : i32 to index
    %c0_65 = arith.constant 0 : index
    %c0_66 = arith.constant 0 : index
    %127 = vector.load %arg18[%126, %c0_65, %c0_66] : memref<6x2x128xf32, #tpu.memory_space<vmem>>, vector<1x2x128xf32>
    %128 = vector.shape_cast %127 : vector<1x2x128xf32> to vector<2x128xf32>
    %129 = vector.shape_cast %125 : vector<2x128xf32> to vector<1x2x128xf32>
    tpu.vector_store %arg18[%126, %c0_65, %c0_66], %129 {strides = array<i32>} : memref<6x2x128xf32, #tpu.memory_space<vmem>>, vector<1x2x128xf32>,
    %c0_67 = arith.constant 0 : index
    %c0_68 = arith.constant 0 : index
    %130 = vector.load %arg19[%c0_67, %c0_68] : memref<2x32xf32, #tpu.memory_space<vmem>>, vector<2x32xf32>
    tpu.vector_store %arg19[%c0_67, %c0_68], %115 {strides = array<i32>} : memref<2x32xf32, #tpu.memory_space<vmem>>, vector<2x32xf32>,
    %131 = arith.index_cast %42 : i32 to index
    %132 = memref.load %arg0[%131] : memref<6xi32, #tpu.memory_space<smem>>
    %c1_i32_69 = arith.constant 1 : i32
    %133 = arith.cmpi eq, %132, %c1_i32_69 : i32
    %134 = arith.extui %133 : i1 to i32
    %c0_i32_70 = arith.constant 0 : i32
    %135 = arith.cmpi ne, %134, %c0_i32_70 : i32
    scf.if %135 {
      %531 = arith.index_cast %42 : i32 to index
      %c0_242 = arith.constant 0 : index
      %c0_243 = arith.constant 0 : index
      %532 = vector.load %arg1[%531, %c0_242, %c0_243] : memref<6x2x1xi32, #tpu.memory_space<vmem>>, vector<1x2x1xi32>
      %533 = vector.shape_cast %532 : vector<1x2x1xi32> to vector<2x1xi32>
      %534 = vector.broadcast %533 : vector<2x1xi32> to vector<2x128xi32>
      %535 = arith.cmpi eq, %29, %534 : vector<2x128xi32>
      %536 = arith.extui %535 : vector<2x128xi1> to vector<2x128xi32>
      %537 = arith.sitofp %536 : vector<2x128xi32> to vector<2x128xf32>
      %c0_244 = arith.constant 0 : index
      %c0_245 = arith.constant 0 : index
      %538 = vector.load %arg20[%c0_244, %c0_245] : memref<2x128xf32, #tpu.memory_space<vmem>>, vector<2x128xf32>
      tpu.vector_store %arg20[%c0_244, %c0_245], %537 {strides = array<i32>} : memref<2x128xf32, #tpu.memory_space<vmem>>, vector<2x128xf32>,
    } else {
    }
    %c0_i32_71 = arith.constant 0 : i32
    %136 = arith.cmpi eq, %132, %c0_i32_71 : i32
    %137 = arith.extui %136 : i1 to i32
    %c0_i32_72 = arith.constant 0 : i32
    %138 = arith.cmpi ne, %137, %c0_i32_72 : i32
    scf.if %138 {
      %cst_242 = arith.constant dense<0xFF800000> : vector<2xf32>
      %531 = vector.multi_reduction <maximumf>, %125, %cst_242 [1] : vector<2x128xf32> to vector<2xf32>
      %532 = vector.shape_cast %531 : vector<2xf32> to vector<2x1xf32>
      %533 = vector.broadcast %532 : vector<2x1xf32> to vector<2x128xf32>
      %534 = arith.cmpf oeq, %125, %533 : vector<2x128xf32>
      %c128_i32 = arith.constant 128 : i32
      %535 = vector.broadcast %c128_i32 : i32 to vector<2x128xi32>
      %536 = arith.select %534, %29, %535 : vector<2x128xi1>, vector<2x128xi32>
      %cst_243 = arith.constant dense<2147483647> : vector<2xi32>
      %537 = vector.multi_reduction <minsi>, %536, %cst_243 [1] : vector<2x128xi32> to vector<2xi32>
      %538 = vector.shape_cast %537 : vector<2xi32> to vector<2x1xi32>
      %539 = vector.broadcast %538 : vector<2x1xi32> to vector<2x128xi32>
      %540 = arith.cmpi eq, %29, %539 : vector<2x128xi32>
      %541 = arith.extui %540 : vector<2x128xi1> to vector<2x128xi32>
      %542 = arith.sitofp %541 : vector<2x128xi32> to vector<2x128xf32>
      %c0_244 = arith.constant 0 : index
      %c0_245 = arith.constant 0 : index
      %543 = vector.load %arg20[%c0_244, %c0_245] : memref<2x128xf32, #tpu.memory_space<vmem>>, vector<2x128xf32>
      tpu.vector_store %arg20[%c0_244, %c0_245], %542 {strides = array<i32>} : memref<2x128xf32, #tpu.memory_space<vmem>>, vector<2x128xf32>,
    } else {
    }
    %c1_i32_73 = arith.constant 1 : i32
    %c1_i32_74 = arith.constant 1 : i32
    %139 = arith.muli %c1_i32_73, %c1_i32_74 : i32
    %c1_i32_75 = arith.constant 1 : i32
    %140 = arith.addi %c1_i32_75, %139 : i32
    %c0_76 = arith.constant 0 : index
    %c0_77 = arith.constant 0 : index
    %141 = vector.load %arg19[%c0_76, %c0_77] : memref<2x32xf32, #tpu.memory_space<vmem>>, vector<2x32xf32>
    %c0_78 = arith.constant 0 : index
    %c0_79 = arith.constant 0 : index
    %142 = vector.load %arg20[%c0_78, %c0_79] : memref<2x128xf32, #tpu.memory_space<vmem>>, vector<2x128xf32>
    %c0_80 = arith.constant 0 : index
    %c0_81 = arith.constant 0 : index
    %143 = vector.load %arg12[%c0_80, %c0_81] : memref<128x16xbf16, #tpu.memory_space<vmem>>, vector<128x16xbf16>
    %144 = arith.truncf %142 : vector<2x128xf32> to vector<2x128xbf16>
    %cst_82 = arith.constant dense<0.000000e+00> : vector<2x16xf32>
    %145 = tpu.matmul %144, %143, %cst_82 {dimension_numbers = #tpu.dot_dimension_numbers<[1], [0], [0], [1], [0, 0, 1, 1], [], []>} : vector<2x128xbf16>, vector<128x16xbf16>, vector<2x16xf32> -> vector<2x16xf32>
    %c0_83 = arith.constant 0 : index
    %c0_84 = arith.constant 0 : index
    %146 = vector.load %arg10[%c0_83, %c0_84] : memref<32x128xbf16, #tpu.memory_space<vmem>>, vector<32x128xbf16>
    %147 = arith.truncf %141 : vector<2x32xf32> to vector<2x32xbf16>
    %cst_85 = arith.constant dense<0.000000e+00> : vector<2x128xf32>
    %148 = tpu.matmul %147, %146, %cst_85 {dimension_numbers = #tpu.dot_dimension_numbers<[1], [0], [0], [1], [0, 0, 1, 1], [], []>} : vector<2x32xbf16>, vector<32x128xbf16>, vector<2x128xf32> -> vector<2x128xf32>
    %c0_86 = arith.constant 0 : index
    %c0_87 = arith.constant 0 : index
    %149 = vector.load %arg11[%c0_86, %c0_87] : memref<1x128xf32, #tpu.memory_space<vmem>>, vector<1x128xf32>
    %150 = vector.broadcast %149 : vector<1x128xf32> to vector<2x128xf32>
    %151 = arith.addf %148, %150 : vector<2x128xf32>
    %152 = vector.extract_strided_slice %151 {offsets = [0, 0], sizes = [2, 32], strides = [1, 1]} : vector<2x128xf32> to vector<2x32xf32>
    %153 = vector.extract_strided_slice %151 {offsets = [0, 32], sizes = [2, 96], strides = [1, 1]} : vector<2x128xf32> to vector<2x96xf32>
    %154 = vector.shape_cast %152 : vector<2x32xf32> to vector<2x1x32xf32>
    %155 = vector.broadcast %154 : vector<2x1x32xf32> to vector<2x16x32xf32>
    %156 = arith.addf %17, %155 : vector<2x16x32xf32>
    %157 = math.tanh %156 : vector<2x16x32xf32>
    %158 = vector.shape_cast %28 : vector<1x32xf32> to vector<1x1x32xf32>
    %159 = vector.broadcast %158 : vector<1x1x32xf32> to vector<2x16x32xf32>
    %160 = arith.mulf %157, %159 : vector<2x16x32xf32>
    %cst_88 = arith.constant dense<0.000000e+00> : vector<2x16xf32>
    %161 = vector.multi_reduction <add>, %160, %cst_88 [2] : vector<2x16x32xf32> to vector<2x16xf32>
    %cst_89 = arith.constant dense<0xFF800000> : vector<2xf32>
    %162 = vector.multi_reduction <maximumf>, %161, %cst_89 [1] : vector<2x16xf32> to vector<2xf32>
    %163 = vector.shape_cast %162 : vector<2xf32> to vector<2x1xf32>
    %164 = vector.broadcast %163 : vector<2x1xf32> to vector<2x16xf32>
    %165 = arith.subf %161, %164 : vector<2x16xf32>
    %166 = math.exp %165 : vector<2x16xf32>
    %cst_90 = arith.constant dense<0.000000e+00> : vector<2xf32>
    %167 = vector.multi_reduction <add>, %166, %cst_90 [1] : vector<2x16xf32> to vector<2xf32>
    %168 = vector.shape_cast %167 : vector<2xf32> to vector<2x1xf32>
    %169 = tpu.reciprocal %168 {approx = true} : vector<2x1xf32> -> vector<2x1xf32>
    %170 = vector.broadcast %169 : vector<2x1xf32> to vector<2x16xf32>
    %171 = arith.mulf %166, %170 : vector<2x16xf32>
    %172 = vector.shape_cast %171 : vector<2x16xf32> to vector<2x16x1xf32>
    %173 = vector.broadcast %172 : vector<2x16x1xf32> to vector<2x16x32xf32>
    %174 = arith.mulf %173, %16 : vector<2x16x32xf32>
    %cst_91 = arith.constant dense<0.000000e+00> : vector<2x32xf32>
    %175 = vector.multi_reduction <add>, %174, %cst_91 [1] : vector<2x16x32xf32> to vector<2x32xf32>
    %c0_92 = arith.constant 0 : index
    %c0_93 = arith.constant 0 : index
    %176 = vector.load %arg13[%c0_92, %c0_93] : memref<16x224xbf16, #tpu.memory_space<vmem>>, vector<16x224xbf16>
    %177 = arith.truncf %145 : vector<2x16xf32> to vector<2x16xbf16>
    %cst_94 = arith.constant dense<0.000000e+00> : vector<2x224xf32>
    %178 = tpu.matmul %177, %176, %cst_94 {dimension_numbers = #tpu.dot_dimension_numbers<[1], [0], [0], [1], [0, 0, 1, 1], [], []>} : vector<2x16xbf16>, vector<16x224xbf16>, vector<2x224xf32> -> vector<2x224xf32>
    %c0_95 = arith.constant 0 : index
    %c0_96 = arith.constant 0 : index
    %179 = vector.load %arg14[%c0_95, %c0_96] : memref<32x224xbf16, #tpu.memory_space<vmem>>, vector<32x224xbf16>
    %180 = arith.truncf %175 : vector<2x32xf32> to vector<2x32xbf16>
    %cst_97 = arith.constant dense<0.000000e+00> : vector<2x224xf32>
    %181 = tpu.matmul %180, %179, %cst_97 {dimension_numbers = #tpu.dot_dimension_numbers<[1], [0], [0], [1], [0, 0, 1, 1], [], []>} : vector<2x32xbf16>, vector<32x224xbf16>, vector<2x224xf32> -> vector<2x224xf32>
    %182 = vector.extract_strided_slice %178 {offsets = [0, 128], sizes = [2, 96], strides = [1, 1]} : vector<2x224xf32> to vector<2x96xf32>
    %183 = vector.extract_strided_slice %181 {offsets = [0, 128], sizes = [2, 96], strides = [1, 1]} : vector<2x224xf32> to vector<2x96xf32>
    %184 = arith.addf %182, %183 : vector<2x96xf32>
    %c0_98 = arith.constant 0 : index
    %c0_99 = arith.constant 0 : index
    %185 = vector.load %arg15[%c0_98, %c0_99] : memref<1x96xf32, #tpu.memory_space<vmem>>, vector<1x96xf32>
    %186 = vector.broadcast %185 : vector<1x96xf32> to vector<2x96xf32>
    %187 = arith.addf %184, %186 : vector<2x96xf32>
    %188 = vector.extract_strided_slice %187 {offsets = [0, 0], sizes = [2, 32], strides = [1, 1]} : vector<2x96xf32> to vector<2x32xf32>
    %189 = vector.extract_strided_slice %153 {offsets = [0, 0], sizes = [2, 32], strides = [1, 1]} : vector<2x96xf32> to vector<2x32xf32>
    %190 = arith.addf %188, %189 : vector<2x32xf32>
    %191 = arith.negf %190 : vector<2x32xf32>
    %192 = math.exp %191 : vector<2x32xf32>
    %cst_100 = arith.constant 1.000000e+00 : f32
    %193 = vector.broadcast %cst_100 : f32 to vector<2x32xf32>
    %194 = arith.addf %193, %192 : vector<2x32xf32>
    %195 = arith.divf %193, %194 : vector<2x32xf32>
    %196 = vector.extract_strided_slice %187 {offsets = [0, 32], sizes = [2, 32], strides = [1, 1]} : vector<2x96xf32> to vector<2x32xf32>
    %197 = vector.extract_strided_slice %153 {offsets = [0, 32], sizes = [2, 32], strides = [1, 1]} : vector<2x96xf32> to vector<2x32xf32>
    %198 = arith.addf %196, %197 : vector<2x32xf32>
    %199 = arith.negf %198 : vector<2x32xf32>
    %200 = math.exp %199 : vector<2x32xf32>
    %cst_101 = arith.constant 1.000000e+00 : f32
    %201 = vector.broadcast %cst_101 : f32 to vector<2x32xf32>
    %202 = arith.addf %201, %200 : vector<2x32xf32>
    %203 = arith.divf %201, %202 : vector<2x32xf32>
    %204 = vector.extract_strided_slice %187 {offsets = [0, 64], sizes = [2, 32], strides = [1, 1]} : vector<2x96xf32> to vector<2x32xf32>
    %205 = vector.extract_strided_slice %153 {offsets = [0, 64], sizes = [2, 32], strides = [1, 1]} : vector<2x96xf32> to vector<2x32xf32>
    %206 = arith.mulf %195, %205 : vector<2x32xf32>
    %207 = arith.addf %204, %206 : vector<2x32xf32>
    %208 = math.tanh %207 : vector<2x32xf32>
    %cst_102 = arith.constant 1.000000e+00 : f32
    %209 = vector.broadcast %cst_102 : f32 to vector<2x32xf32>
    %210 = arith.subf %209, %203 : vector<2x32xf32>
    %211 = arith.mulf %210, %208 : vector<2x32xf32>
    %212 = arith.mulf %203, %141 : vector<2x32xf32>
    %213 = arith.addf %211, %212 : vector<2x32xf32>
    %c0_103 = arith.constant 0 : index
    %c0_104 = arith.constant 0 : index
    %214 = vector.load %arg16[%c0_103, %c0_104] : memref<32x128xbf16, #tpu.memory_space<vmem>>, vector<32x128xbf16>
    %215 = arith.truncf %213 : vector<2x32xf32> to vector<2x32xbf16>
    %cst_105 = arith.constant dense<0.000000e+00> : vector<2x128xf32>
    %216 = tpu.matmul %215, %214, %cst_105 {dimension_numbers = #tpu.dot_dimension_numbers<[1], [0], [0], [1], [0, 0, 1, 1], [], []>} : vector<2x32xbf16>, vector<32x128xbf16>, vector<2x128xf32> -> vector<2x128xf32>
    %217 = vector.extract_strided_slice %178 {offsets = [0, 0], sizes = [2, 128], strides = [1, 1]} : vector<2x224xf32> to vector<2x128xf32>
    %218 = arith.addf %216, %217 : vector<2x128xf32>
    %219 = vector.extract_strided_slice %181 {offsets = [0, 0], sizes = [2, 128], strides = [1, 1]} : vector<2x224xf32> to vector<2x128xf32>
    %220 = arith.addf %218, %219 : vector<2x128xf32>
    %c0_106 = arith.constant 0 : index
    %c0_107 = arith.constant 0 : index
    %221 = vector.load %arg17[%c0_106, %c0_107] : memref<1x128xf32, #tpu.memory_space<vmem>>, vector<1x128xf32>
    %222 = vector.broadcast %221 : vector<1x128xf32> to vector<2x128xf32>
    %223 = arith.addf %220, %222 : vector<2x128xf32>
    %224 = arith.index_cast %140 : i32 to index
    %c0_108 = arith.constant 0 : index
    %c0_109 = arith.constant 0 : index
    %225 = vector.load %arg18[%224, %c0_108, %c0_109] : memref<6x2x128xf32, #tpu.memory_space<vmem>>, vector<1x2x128xf32>
    %226 = vector.shape_cast %225 : vector<1x2x128xf32> to vector<2x128xf32>
    %227 = vector.shape_cast %223 : vector<2x128xf32> to vector<1x2x128xf32>
    tpu.vector_store %arg18[%224, %c0_108, %c0_109], %227 {strides = array<i32>} : memref<6x2x128xf32, #tpu.memory_space<vmem>>, vector<1x2x128xf32>,
    %c0_110 = arith.constant 0 : index
    %c0_111 = arith.constant 0 : index
    %228 = vector.load %arg19[%c0_110, %c0_111] : memref<2x32xf32, #tpu.memory_space<vmem>>, vector<2x32xf32>
    tpu.vector_store %arg19[%c0_110, %c0_111], %213 {strides = array<i32>} : memref<2x32xf32, #tpu.memory_space<vmem>>, vector<2x32xf32>,
    %229 = arith.index_cast %140 : i32 to index
    %230 = memref.load %arg0[%229] : memref<6xi32, #tpu.memory_space<smem>>
    %c1_i32_112 = arith.constant 1 : i32
    %231 = arith.cmpi eq, %230, %c1_i32_112 : i32
    %232 = arith.extui %231 : i1 to i32
    %c0_i32_113 = arith.constant 0 : i32
    %233 = arith.cmpi ne, %232, %c0_i32_113 : i32
    scf.if %233 {
      %531 = arith.index_cast %140 : i32 to index
      %c0_242 = arith.constant 0 : index
      %c0_243 = arith.constant 0 : index
      %532 = vector.load %arg1[%531, %c0_242, %c0_243] : memref<6x2x1xi32, #tpu.memory_space<vmem>>, vector<1x2x1xi32>
      %533 = vector.shape_cast %532 : vector<1x2x1xi32> to vector<2x1xi32>
      %534 = vector.broadcast %533 : vector<2x1xi32> to vector<2x128xi32>
      %535 = arith.cmpi eq, %29, %534 : vector<2x128xi32>
      %536 = arith.extui %535 : vector<2x128xi1> to vector<2x128xi32>
      %537 = arith.sitofp %536 : vector<2x128xi32> to vector<2x128xf32>
      %c0_244 = arith.constant 0 : index
      %c0_245 = arith.constant 0 : index
      %538 = vector.load %arg20[%c0_244, %c0_245] : memref<2x128xf32, #tpu.memory_space<vmem>>, vector<2x128xf32>
      tpu.vector_store %arg20[%c0_244, %c0_245], %537 {strides = array<i32>} : memref<2x128xf32, #tpu.memory_space<vmem>>, vector<2x128xf32>,
    } else {
    }
    %c0_i32_114 = arith.constant 0 : i32
    %234 = arith.cmpi eq, %230, %c0_i32_114 : i32
    %235 = arith.extui %234 : i1 to i32
    %c0_i32_115 = arith.constant 0 : i32
    %236 = arith.cmpi ne, %235, %c0_i32_115 : i32
    scf.if %236 {
      %cst_242 = arith.constant dense<0xFF800000> : vector<2xf32>
      %531 = vector.multi_reduction <maximumf>, %223, %cst_242 [1] : vector<2x128xf32> to vector<2xf32>
      %532 = vector.shape_cast %531 : vector<2xf32> to vector<2x1xf32>
      %533 = vector.broadcast %532 : vector<2x1xf32> to vector<2x128xf32>
      %534 = arith.cmpf oeq, %223, %533 : vector<2x128xf32>
      %c128_i32 = arith.constant 128 : i32
      %535 = vector.broadcast %c128_i32 : i32 to vector<2x128xi32>
      %536 = arith.select %534, %29, %535 : vector<2x128xi1>, vector<2x128xi32>
      %cst_243 = arith.constant dense<2147483647> : vector<2xi32>
      %537 = vector.multi_reduction <minsi>, %536, %cst_243 [1] : vector<2x128xi32> to vector<2xi32>
      %538 = vector.shape_cast %537 : vector<2xi32> to vector<2x1xi32>
      %539 = vector.broadcast %538 : vector<2x1xi32> to vector<2x128xi32>
      %540 = arith.cmpi eq, %29, %539 : vector<2x128xi32>
      %541 = arith.extui %540 : vector<2x128xi1> to vector<2x128xi32>
      %542 = arith.sitofp %541 : vector<2x128xi32> to vector<2x128xf32>
      %c0_244 = arith.constant 0 : index
      %c0_245 = arith.constant 0 : index
      %543 = vector.load %arg20[%c0_244, %c0_245] : memref<2x128xf32, #tpu.memory_space<vmem>>, vector<2x128xf32>
      tpu.vector_store %arg20[%c0_244, %c0_245], %542 {strides = array<i32>} : memref<2x128xf32, #tpu.memory_space<vmem>>, vector<2x128xf32>,
    } else {
    }
    %c2_i32 = arith.constant 2 : i32
    %c1_i32_116 = arith.constant 1 : i32
    %237 = arith.muli %c2_i32, %c1_i32_116 : i32
    %c1_i32_117 = arith.constant 1 : i32
    %238 = arith.addi %c1_i32_117, %237 : i32
    %c0_118 = arith.constant 0 : index
    %c0_119 = arith.constant 0 : index
    %239 = vector.load %arg19[%c0_118, %c0_119] : memref<2x32xf32, #tpu.memory_space<vmem>>, vector<2x32xf32>
    %c0_120 = arith.constant 0 : index
    %c0_121 = arith.constant 0 : index
    %240 = vector.load %arg20[%c0_120, %c0_121] : memref<2x128xf32, #tpu.memory_space<vmem>>, vector<2x128xf32>
    %c0_122 = arith.constant 0 : index
    %c0_123 = arith.constant 0 : index
    %241 = vector.load %arg12[%c0_122, %c0_123] : memref<128x16xbf16, #tpu.memory_space<vmem>>, vector<128x16xbf16>
    %242 = arith.truncf %240 : vector<2x128xf32> to vector<2x128xbf16>
    %cst_124 = arith.constant dense<0.000000e+00> : vector<2x16xf32>
    %243 = tpu.matmul %242, %241, %cst_124 {dimension_numbers = #tpu.dot_dimension_numbers<[1], [0], [0], [1], [0, 0, 1, 1], [], []>} : vector<2x128xbf16>, vector<128x16xbf16>, vector<2x16xf32> -> vector<2x16xf32>
    %c0_125 = arith.constant 0 : index
    %c0_126 = arith.constant 0 : index
    %244 = vector.load %arg10[%c0_125, %c0_126] : memref<32x128xbf16, #tpu.memory_space<vmem>>, vector<32x128xbf16>
    %245 = arith.truncf %239 : vector<2x32xf32> to vector<2x32xbf16>
    %cst_127 = arith.constant dense<0.000000e+00> : vector<2x128xf32>
    %246 = tpu.matmul %245, %244, %cst_127 {dimension_numbers = #tpu.dot_dimension_numbers<[1], [0], [0], [1], [0, 0, 1, 1], [], []>} : vector<2x32xbf16>, vector<32x128xbf16>, vector<2x128xf32> -> vector<2x128xf32>
    %c0_128 = arith.constant 0 : index
    %c0_129 = arith.constant 0 : index
    %247 = vector.load %arg11[%c0_128, %c0_129] : memref<1x128xf32, #tpu.memory_space<vmem>>, vector<1x128xf32>
    %248 = vector.broadcast %247 : vector<1x128xf32> to vector<2x128xf32>
    %249 = arith.addf %246, %248 : vector<2x128xf32>
    %250 = vector.extract_strided_slice %249 {offsets = [0, 0], sizes = [2, 32], strides = [1, 1]} : vector<2x128xf32> to vector<2x32xf32>
    %251 = vector.extract_strided_slice %249 {offsets = [0, 32], sizes = [2, 96], strides = [1, 1]} : vector<2x128xf32> to vector<2x96xf32>
    %252 = vector.shape_cast %250 : vector<2x32xf32> to vector<2x1x32xf32>
    %253 = vector.broadcast %252 : vector<2x1x32xf32> to vector<2x16x32xf32>
    %254 = arith.addf %17, %253 : vector<2x16x32xf32>
    %255 = math.tanh %254 : vector<2x16x32xf32>
    %256 = vector.shape_cast %28 : vector<1x32xf32> to vector<1x1x32xf32>
    %257 = vector.broadcast %256 : vector<1x1x32xf32> to vector<2x16x32xf32>
    %258 = arith.mulf %255, %257 : vector<2x16x32xf32>
    %cst_130 = arith.constant dense<0.000000e+00> : vector<2x16xf32>
    %259 = vector.multi_reduction <add>, %258, %cst_130 [2] : vector<2x16x32xf32> to vector<2x16xf32>
    %cst_131 = arith.constant dense<0xFF800000> : vector<2xf32>
    %260 = vector.multi_reduction <maximumf>, %259, %cst_131 [1] : vector<2x16xf32> to vector<2xf32>
    %261 = vector.shape_cast %260 : vector<2xf32> to vector<2x1xf32>
    %262 = vector.broadcast %261 : vector<2x1xf32> to vector<2x16xf32>
    %263 = arith.subf %259, %262 : vector<2x16xf32>
    %264 = math.exp %263 : vector<2x16xf32>
    %cst_132 = arith.constant dense<0.000000e+00> : vector<2xf32>
    %265 = vector.multi_reduction <add>, %264, %cst_132 [1] : vector<2x16xf32> to vector<2xf32>
    %266 = vector.shape_cast %265 : vector<2xf32> to vector<2x1xf32>
    %267 = tpu.reciprocal %266 {approx = true} : vector<2x1xf32> -> vector<2x1xf32>
    %268 = vector.broadcast %267 : vector<2x1xf32> to vector<2x16xf32>
    %269 = arith.mulf %264, %268 : vector<2x16xf32>
    %270 = vector.shape_cast %269 : vector<2x16xf32> to vector<2x16x1xf32>
    %271 = vector.broadcast %270 : vector<2x16x1xf32> to vector<2x16x32xf32>
    %272 = arith.mulf %271, %16 : vector<2x16x32xf32>
    %cst_133 = arith.constant dense<0.000000e+00> : vector<2x32xf32>
    %273 = vector.multi_reduction <add>, %272, %cst_133 [1] : vector<2x16x32xf32> to vector<2x32xf32>
    %c0_134 = arith.constant 0 : index
    %c0_135 = arith.constant 0 : index
    %274 = vector.load %arg13[%c0_134, %c0_135] : memref<16x224xbf16, #tpu.memory_space<vmem>>, vector<16x224xbf16>
    %275 = arith.truncf %243 : vector<2x16xf32> to vector<2x16xbf16>
    %cst_136 = arith.constant dense<0.000000e+00> : vector<2x224xf32>
    %276 = tpu.matmul %275, %274, %cst_136 {dimension_numbers = #tpu.dot_dimension_numbers<[1], [0], [0], [1], [0, 0, 1, 1], [], []>} : vector<2x16xbf16>, vector<16x224xbf16>, vector<2x224xf32> -> vector<2x224xf32>
    %c0_137 = arith.constant 0 : index
    %c0_138 = arith.constant 0 : index
    %277 = vector.load %arg14[%c0_137, %c0_138] : memref<32x224xbf16, #tpu.memory_space<vmem>>, vector<32x224xbf16>
    %278 = arith.truncf %273 : vector<2x32xf32> to vector<2x32xbf16>
    %cst_139 = arith.constant dense<0.000000e+00> : vector<2x224xf32>
    %279 = tpu.matmul %278, %277, %cst_139 {dimension_numbers = #tpu.dot_dimension_numbers<[1], [0], [0], [1], [0, 0, 1, 1], [], []>} : vector<2x32xbf16>, vector<32x224xbf16>, vector<2x224xf32> -> vector<2x224xf32>
    %280 = vector.extract_strided_slice %276 {offsets = [0, 128], sizes = [2, 96], strides = [1, 1]} : vector<2x224xf32> to vector<2x96xf32>
    %281 = vector.extract_strided_slice %279 {offsets = [0, 128], sizes = [2, 96], strides = [1, 1]} : vector<2x224xf32> to vector<2x96xf32>
    %282 = arith.addf %280, %281 : vector<2x96xf32>
    %c0_140 = arith.constant 0 : index
    %c0_141 = arith.constant 0 : index
    %283 = vector.load %arg15[%c0_140, %c0_141] : memref<1x96xf32, #tpu.memory_space<vmem>>, vector<1x96xf32>
    %284 = vector.broadcast %283 : vector<1x96xf32> to vector<2x96xf32>
    %285 = arith.addf %282, %284 : vector<2x96xf32>
    %286 = vector.extract_strided_slice %285 {offsets = [0, 0], sizes = [2, 32], strides = [1, 1]} : vector<2x96xf32> to vector<2x32xf32>
    %287 = vector.extract_strided_slice %251 {offsets = [0, 0], sizes = [2, 32], strides = [1, 1]} : vector<2x96xf32> to vector<2x32xf32>
    %288 = arith.addf %286, %287 : vector<2x32xf32>
    %289 = arith.negf %288 : vector<2x32xf32>
    %290 = math.exp %289 : vector<2x32xf32>
    %cst_142 = arith.constant 1.000000e+00 : f32
    %291 = vector.broadcast %cst_142 : f32 to vector<2x32xf32>
    %292 = arith.addf %291, %290 : vector<2x32xf32>
    %293 = arith.divf %291, %292 : vector<2x32xf32>
    %294 = vector.extract_strided_slice %285 {offsets = [0, 32], sizes = [2, 32], strides = [1, 1]} : vector<2x96xf32> to vector<2x32xf32>
    %295 = vector.extract_strided_slice %251 {offsets = [0, 32], sizes = [2, 32], strides = [1, 1]} : vector<2x96xf32> to vector<2x32xf32>
    %296 = arith.addf %294, %295 : vector<2x32xf32>
    %297 = arith.negf %296 : vector<2x32xf32>
    %298 = math.exp %297 : vector<2x32xf32>
    %cst_143 = arith.constant 1.000000e+00 : f32
    %299 = vector.broadcast %cst_143 : f32 to vector<2x32xf32>
    %300 = arith.addf %299, %298 : vector<2x32xf32>
    %301 = arith.divf %299, %300 : vector<2x32xf32>
    %302 = vector.extract_strided_slice %285 {offsets = [0, 64], sizes = [2, 32], strides = [1, 1]} : vector<2x96xf32> to vector<2x32xf32>
    %303 = vector.extract_strided_slice %251 {offsets = [0, 64], sizes = [2, 32], strides = [1, 1]} : vector<2x96xf32> to vector<2x32xf32>
    %304 = arith.mulf %293, %303 : vector<2x32xf32>
    %305 = arith.addf %302, %304 : vector<2x32xf32>
    %306 = math.tanh %305 : vector<2x32xf32>
    %cst_144 = arith.constant 1.000000e+00 : f32
    %307 = vector.broadcast %cst_144 : f32 to vector<2x32xf32>
    %308 = arith.subf %307, %301 : vector<2x32xf32>
    %309 = arith.mulf %308, %306 : vector<2x32xf32>
    %310 = arith.mulf %301, %239 : vector<2x32xf32>
    %311 = arith.addf %309, %310 : vector<2x32xf32>
    %c0_145 = arith.constant 0 : index
    %c0_146 = arith.constant 0 : index
    %312 = vector.load %arg16[%c0_145, %c0_146] : memref<32x128xbf16, #tpu.memory_space<vmem>>, vector<32x128xbf16>
    %313 = arith.truncf %311 : vector<2x32xf32> to vector<2x32xbf16>
    %cst_147 = arith.constant dense<0.000000e+00> : vector<2x128xf32>
    %314 = tpu.matmul %313, %312, %cst_147 {dimension_numbers = #tpu.dot_dimension_numbers<[1], [0], [0], [1], [0, 0, 1, 1], [], []>} : vector<2x32xbf16>, vector<32x128xbf16>, vector<2x128xf32> -> vector<2x128xf32>
    %315 = vector.extract_strided_slice %276 {offsets = [0, 0], sizes = [2, 128], strides = [1, 1]} : vector<2x224xf32> to vector<2x128xf32>
    %316 = arith.addf %314, %315 : vector<2x128xf32>
    %317 = vector.extract_strided_slice %279 {offsets = [0, 0], sizes = [2, 128], strides = [1, 1]} : vector<2x224xf32> to vector<2x128xf32>
    %318 = arith.addf %316, %317 : vector<2x128xf32>
    %c0_148 = arith.constant 0 : index
    %c0_149 = arith.constant 0 : index
    %319 = vector.load %arg17[%c0_148, %c0_149] : memref<1x128xf32, #tpu.memory_space<vmem>>, vector<1x128xf32>
    %320 = vector.broadcast %319 : vector<1x128xf32> to vector<2x128xf32>
    %321 = arith.addf %318, %320 : vector<2x128xf32>
    %322 = arith.index_cast %238 : i32 to index
    %c0_150 = arith.constant 0 : index
    %c0_151 = arith.constant 0 : index
    %323 = vector.load %arg18[%322, %c0_150, %c0_151] : memref<6x2x128xf32, #tpu.memory_space<vmem>>, vector<1x2x128xf32>
    %324 = vector.shape_cast %323 : vector<1x2x128xf32> to vector<2x128xf32>
    %325 = vector.shape_cast %321 : vector<2x128xf32> to vector<1x2x128xf32>
    tpu.vector_store %arg18[%322, %c0_150, %c0_151], %325 {strides = array<i32>} : memref<6x2x128xf32, #tpu.memory_space<vmem>>, vector<1x2x128xf32>,
    %c0_152 = arith.constant 0 : index
    %c0_153 = arith.constant 0 : index
    %326 = vector.load %arg19[%c0_152, %c0_153] : memref<2x32xf32, #tpu.memory_space<vmem>>, vector<2x32xf32>
    tpu.vector_store %arg19[%c0_152, %c0_153], %311 {strides = array<i32>} : memref<2x32xf32, #tpu.memory_space<vmem>>, vector<2x32xf32>,
    %327 = arith.index_cast %238 : i32 to index
    %328 = memref.load %arg0[%327] : memref<6xi32, #tpu.memory_space<smem>>
    %c1_i32_154 = arith.constant 1 : i32
    %329 = arith.cmpi eq, %328, %c1_i32_154 : i32
    %330 = arith.extui %329 : i1 to i32
    %c0_i32_155 = arith.constant 0 : i32
    %331 = arith.cmpi ne, %330, %c0_i32_155 : i32
    scf.if %331 {
      %531 = arith.index_cast %238 : i32 to index
      %c0_242 = arith.constant 0 : index
      %c0_243 = arith.constant 0 : index
      %532 = vector.load %arg1[%531, %c0_242, %c0_243] : memref<6x2x1xi32, #tpu.memory_space<vmem>>, vector<1x2x1xi32>
      %533 = vector.shape_cast %532 : vector<1x2x1xi32> to vector<2x1xi32>
      %534 = vector.broadcast %533 : vector<2x1xi32> to vector<2x128xi32>
      %535 = arith.cmpi eq, %29, %534 : vector<2x128xi32>
      %536 = arith.extui %535 : vector<2x128xi1> to vector<2x128xi32>
      %537 = arith.sitofp %536 : vector<2x128xi32> to vector<2x128xf32>
      %c0_244 = arith.constant 0 : index
      %c0_245 = arith.constant 0 : index
      %538 = vector.load %arg20[%c0_244, %c0_245] : memref<2x128xf32, #tpu.memory_space<vmem>>, vector<2x128xf32>
      tpu.vector_store %arg20[%c0_244, %c0_245], %537 {strides = array<i32>} : memref<2x128xf32, #tpu.memory_space<vmem>>, vector<2x128xf32>,
    } else {
    }
    %c0_i32_156 = arith.constant 0 : i32
    %332 = arith.cmpi eq, %328, %c0_i32_156 : i32
    %333 = arith.extui %332 : i1 to i32
    %c0_i32_157 = arith.constant 0 : i32
    %334 = arith.cmpi ne, %333, %c0_i32_157 : i32
    scf.if %334 {
      %cst_242 = arith.constant dense<0xFF800000> : vector<2xf32>
      %531 = vector.multi_reduction <maximumf>, %321, %cst_242 [1] : vector<2x128xf32> to vector<2xf32>
      %532 = vector.shape_cast %531 : vector<2xf32> to vector<2x1xf32>
      %533 = vector.broadcast %532 : vector<2x1xf32> to vector<2x128xf32>
      %534 = arith.cmpf oeq, %321, %533 : vector<2x128xf32>
      %c128_i32 = arith.constant 128 : i32
      %535 = vector.broadcast %c128_i32 : i32 to vector<2x128xi32>
      %536 = arith.select %534, %29, %535 : vector<2x128xi1>, vector<2x128xi32>
      %cst_243 = arith.constant dense<2147483647> : vector<2xi32>
      %537 = vector.multi_reduction <minsi>, %536, %cst_243 [1] : vector<2x128xi32> to vector<2xi32>
      %538 = vector.shape_cast %537 : vector<2xi32> to vector<2x1xi32>
      %539 = vector.broadcast %538 : vector<2x1xi32> to vector<2x128xi32>
      %540 = arith.cmpi eq, %29, %539 : vector<2x128xi32>
      %541 = arith.extui %540 : vector<2x128xi1> to vector<2x128xi32>
      %542 = arith.sitofp %541 : vector<2x128xi32> to vector<2x128xf32>
      %c0_244 = arith.constant 0 : index
      %c0_245 = arith.constant 0 : index
      %543 = vector.load %arg20[%c0_244, %c0_245] : memref<2x128xf32, #tpu.memory_space<vmem>>, vector<2x128xf32>
      tpu.vector_store %arg20[%c0_244, %c0_245], %542 {strides = array<i32>} : memref<2x128xf32, #tpu.memory_space<vmem>>, vector<2x128xf32>,
    } else {
    }
    %c3_i32 = arith.constant 3 : i32
    %c1_i32_158 = arith.constant 1 : i32
    %335 = arith.muli %c3_i32, %c1_i32_158 : i32
    %c1_i32_159 = arith.constant 1 : i32
    %336 = arith.addi %c1_i32_159, %335 : i32
    %c0_160 = arith.constant 0 : index
    %c0_161 = arith.constant 0 : index
    %337 = vector.load %arg19[%c0_160, %c0_161] : memref<2x32xf32, #tpu.memory_space<vmem>>, vector<2x32xf32>
    %c0_162 = arith.constant 0 : index
    %c0_163 = arith.constant 0 : index
    %338 = vector.load %arg20[%c0_162, %c0_163] : memref<2x128xf32, #tpu.memory_space<vmem>>, vector<2x128xf32>
    %c0_164 = arith.constant 0 : index
    %c0_165 = arith.constant 0 : index
    %339 = vector.load %arg12[%c0_164, %c0_165] : memref<128x16xbf16, #tpu.memory_space<vmem>>, vector<128x16xbf16>
    %340 = arith.truncf %338 : vector<2x128xf32> to vector<2x128xbf16>
    %cst_166 = arith.constant dense<0.000000e+00> : vector<2x16xf32>
    %341 = tpu.matmul %340, %339, %cst_166 {dimension_numbers = #tpu.dot_dimension_numbers<[1], [0], [0], [1], [0, 0, 1, 1], [], []>} : vector<2x128xbf16>, vector<128x16xbf16>, vector<2x16xf32> -> vector<2x16xf32>
    %c0_167 = arith.constant 0 : index
    %c0_168 = arith.constant 0 : index
    %342 = vector.load %arg10[%c0_167, %c0_168] : memref<32x128xbf16, #tpu.memory_space<vmem>>, vector<32x128xbf16>
    %343 = arith.truncf %337 : vector<2x32xf32> to vector<2x32xbf16>
    %cst_169 = arith.constant dense<0.000000e+00> : vector<2x128xf32>
    %344 = tpu.matmul %343, %342, %cst_169 {dimension_numbers = #tpu.dot_dimension_numbers<[1], [0], [0], [1], [0, 0, 1, 1], [], []>} : vector<2x32xbf16>, vector<32x128xbf16>, vector<2x128xf32> -> vector<2x128xf32>
    %c0_170 = arith.constant 0 : index
    %c0_171 = arith.constant 0 : index
    %345 = vector.load %arg11[%c0_170, %c0_171] : memref<1x128xf32, #tpu.memory_space<vmem>>, vector<1x128xf32>
    %346 = vector.broadcast %345 : vector<1x128xf32> to vector<2x128xf32>
    %347 = arith.addf %344, %346 : vector<2x128xf32>
    %348 = vector.extract_strided_slice %347 {offsets = [0, 0], sizes = [2, 32], strides = [1, 1]} : vector<2x128xf32> to vector<2x32xf32>
    %349 = vector.extract_strided_slice %347 {offsets = [0, 32], sizes = [2, 96], strides = [1, 1]} : vector<2x128xf32> to vector<2x96xf32>
    %350 = vector.shape_cast %348 : vector<2x32xf32> to vector<2x1x32xf32>
    %351 = vector.broadcast %350 : vector<2x1x32xf32> to vector<2x16x32xf32>
    %352 = arith.addf %17, %351 : vector<2x16x32xf32>
    %353 = math.tanh %352 : vector<2x16x32xf32>
    %354 = vector.shape_cast %28 : vector<1x32xf32> to vector<1x1x32xf32>
    %355 = vector.broadcast %354 : vector<1x1x32xf32> to vector<2x16x32xf32>
    %356 = arith.mulf %353, %355 : vector<2x16x32xf32>
    %cst_172 = arith.constant dense<0.000000e+00> : vector<2x16xf32>
    %357 = vector.multi_reduction <add>, %356, %cst_172 [2] : vector<2x16x32xf32> to vector<2x16xf32>
    %cst_173 = arith.constant dense<0xFF800000> : vector<2xf32>
    %358 = vector.multi_reduction <maximumf>, %357, %cst_173 [1] : vector<2x16xf32> to vector<2xf32>
    %359 = vector.shape_cast %358 : vector<2xf32> to vector<2x1xf32>
    %360 = vector.broadcast %359 : vector<2x1xf32> to vector<2x16xf32>
    %361 = arith.subf %357, %360 : vector<2x16xf32>
    %362 = math.exp %361 : vector<2x16xf32>
    %cst_174 = arith.constant dense<0.000000e+00> : vector<2xf32>
    %363 = vector.multi_reduction <add>, %362, %cst_174 [1] : vector<2x16xf32> to vector<2xf32>
    %364 = vector.shape_cast %363 : vector<2xf32> to vector<2x1xf32>
    %365 = tpu.reciprocal %364 {approx = true} : vector<2x1xf32> -> vector<2x1xf32>
    %366 = vector.broadcast %365 : vector<2x1xf32> to vector<2x16xf32>
    %367 = arith.mulf %362, %366 : vector<2x16xf32>
    %368 = vector.shape_cast %367 : vector<2x16xf32> to vector<2x16x1xf32>
    %369 = vector.broadcast %368 : vector<2x16x1xf32> to vector<2x16x32xf32>
    %370 = arith.mulf %369, %16 : vector<2x16x32xf32>
    %cst_175 = arith.constant dense<0.000000e+00> : vector<2x32xf32>
    %371 = vector.multi_reduction <add>, %370, %cst_175 [1] : vector<2x16x32xf32> to vector<2x32xf32>
    %c0_176 = arith.constant 0 : index
    %c0_177 = arith.constant 0 : index
    %372 = vector.load %arg13[%c0_176, %c0_177] : memref<16x224xbf16, #tpu.memory_space<vmem>>, vector<16x224xbf16>
    %373 = arith.truncf %341 : vector<2x16xf32> to vector<2x16xbf16>
    %cst_178 = arith.constant dense<0.000000e+00> : vector<2x224xf32>
    %374 = tpu.matmul %373, %372, %cst_178 {dimension_numbers = #tpu.dot_dimension_numbers<[1], [0], [0], [1], [0, 0, 1, 1], [], []>} : vector<2x16xbf16>, vector<16x224xbf16>, vector<2x224xf32> -> vector<2x224xf32>
    %c0_179 = arith.constant 0 : index
    %c0_180 = arith.constant 0 : index
    %375 = vector.load %arg14[%c0_179, %c0_180] : memref<32x224xbf16, #tpu.memory_space<vmem>>, vector<32x224xbf16>
    %376 = arith.truncf %371 : vector<2x32xf32> to vector<2x32xbf16>
    %cst_181 = arith.constant dense<0.000000e+00> : vector<2x224xf32>
    %377 = tpu.matmul %376, %375, %cst_181 {dimension_numbers = #tpu.dot_dimension_numbers<[1], [0], [0], [1], [0, 0, 1, 1], [], []>} : vector<2x32xbf16>, vector<32x224xbf16>, vector<2x224xf32> -> vector<2x224xf32>
    %378 = vector.extract_strided_slice %374 {offsets = [0, 128], sizes = [2, 96], strides = [1, 1]} : vector<2x224xf32> to vector<2x96xf32>
    %379 = vector.extract_strided_slice %377 {offsets = [0, 128], sizes = [2, 96], strides = [1, 1]} : vector<2x224xf32> to vector<2x96xf32>
    %380 = arith.addf %378, %379 : vector<2x96xf32>
    %c0_182 = arith.constant 0 : index
    %c0_183 = arith.constant 0 : index
    %381 = vector.load %arg15[%c0_182, %c0_183] : memref<1x96xf32, #tpu.memory_space<vmem>>, vector<1x96xf32>
    %382 = vector.broadcast %381 : vector<1x96xf32> to vector<2x96xf32>
    %383 = arith.addf %380, %382 : vector<2x96xf32>
    %384 = vector.extract_strided_slice %383 {offsets = [0, 0], sizes = [2, 32], strides = [1, 1]} : vector<2x96xf32> to vector<2x32xf32>
    %385 = vector.extract_strided_slice %349 {offsets = [0, 0], sizes = [2, 32], strides = [1, 1]} : vector<2x96xf32> to vector<2x32xf32>
    %386 = arith.addf %384, %385 : vector<2x32xf32>
    %387 = arith.negf %386 : vector<2x32xf32>
    %388 = math.exp %387 : vector<2x32xf32>
    %cst_184 = arith.constant 1.000000e+00 : f32
    %389 = vector.broadcast %cst_184 : f32 to vector<2x32xf32>
    %390 = arith.addf %389, %388 : vector<2x32xf32>
    %391 = arith.divf %389, %390 : vector<2x32xf32>
    %392 = vector.extract_strided_slice %383 {offsets = [0, 32], sizes = [2, 32], strides = [1, 1]} : vector<2x96xf32> to vector<2x32xf32>
    %393 = vector.extract_strided_slice %349 {offsets = [0, 32], sizes = [2, 32], strides = [1, 1]} : vector<2x96xf32> to vector<2x32xf32>
    %394 = arith.addf %392, %393 : vector<2x32xf32>
    %395 = arith.negf %394 : vector<2x32xf32>
    %396 = math.exp %395 : vector<2x32xf32>
    %cst_185 = arith.constant 1.000000e+00 : f32
    %397 = vector.broadcast %cst_185 : f32 to vector<2x32xf32>
    %398 = arith.addf %397, %396 : vector<2x32xf32>
    %399 = arith.divf %397, %398 : vector<2x32xf32>
    %400 = vector.extract_strided_slice %383 {offsets = [0, 64], sizes = [2, 32], strides = [1, 1]} : vector<2x96xf32> to vector<2x32xf32>
    %401 = vector.extract_strided_slice %349 {offsets = [0, 64], sizes = [2, 32], strides = [1, 1]} : vector<2x96xf32> to vector<2x32xf32>
    %402 = arith.mulf %391, %401 : vector<2x32xf32>
    %403 = arith.addf %400, %402 : vector<2x32xf32>
    %404 = math.tanh %403 : vector<2x32xf32>
    %cst_186 = arith.constant 1.000000e+00 : f32
    %405 = vector.broadcast %cst_186 : f32 to vector<2x32xf32>
    %406 = arith.subf %405, %399 : vector<2x32xf32>
    %407 = arith.mulf %406, %404 : vector<2x32xf32>
    %408 = arith.mulf %399, %337 : vector<2x32xf32>
    %409 = arith.addf %407, %408 : vector<2x32xf32>
    %c0_187 = arith.constant 0 : index
    %c0_188 = arith.constant 0 : index
    %410 = vector.load %arg16[%c0_187, %c0_188] : memref<32x128xbf16, #tpu.memory_space<vmem>>, vector<32x128xbf16>
    %411 = arith.truncf %409 : vector<2x32xf32> to vector<2x32xbf16>
    %cst_189 = arith.constant dense<0.000000e+00> : vector<2x128xf32>
    %412 = tpu.matmul %411, %410, %cst_189 {dimension_numbers = #tpu.dot_dimension_numbers<[1], [0], [0], [1], [0, 0, 1, 1], [], []>} : vector<2x32xbf16>, vector<32x128xbf16>, vector<2x128xf32> -> vector<2x128xf32>
    %413 = vector.extract_strided_slice %374 {offsets = [0, 0], sizes = [2, 128], strides = [1, 1]} : vector<2x224xf32> to vector<2x128xf32>
    %414 = arith.addf %412, %413 : vector<2x128xf32>
    %415 = vector.extract_strided_slice %377 {offsets = [0, 0], sizes = [2, 128], strides = [1, 1]} : vector<2x224xf32> to vector<2x128xf32>
    %416 = arith.addf %414, %415 : vector<2x128xf32>
    %c0_190 = arith.constant 0 : index
    %c0_191 = arith.constant 0 : index
    %417 = vector.load %arg17[%c0_190, %c0_191] : memref<1x128xf32, #tpu.memory_space<vmem>>, vector<1x128xf32>
    %418 = vector.broadcast %417 : vector<1x128xf32> to vector<2x128xf32>
    %419 = arith.addf %416, %418 : vector<2x128xf32>
    %420 = arith.index_cast %336 : i32 to index
    %c0_192 = arith.constant 0 : index
    %c0_193 = arith.constant 0 : index
    %421 = vector.load %arg18[%420, %c0_192, %c0_193] : memref<6x2x128xf32, #tpu.memory_space<vmem>>, vector<1x2x128xf32>
    %422 = vector.shape_cast %421 : vector<1x2x128xf32> to vector<2x128xf32>
    %423 = vector.shape_cast %419 : vector<2x128xf32> to vector<1x2x128xf32>
    tpu.vector_store %arg18[%420, %c0_192, %c0_193], %423 {strides = array<i32>} : memref<6x2x128xf32, #tpu.memory_space<vmem>>, vector<1x2x128xf32>,
    %c0_194 = arith.constant 0 : index
    %c0_195 = arith.constant 0 : index
    %424 = vector.load %arg19[%c0_194, %c0_195] : memref<2x32xf32, #tpu.memory_space<vmem>>, vector<2x32xf32>
    tpu.vector_store %arg19[%c0_194, %c0_195], %409 {strides = array<i32>} : memref<2x32xf32, #tpu.memory_space<vmem>>, vector<2x32xf32>,
    %425 = arith.index_cast %336 : i32 to index
    %426 = memref.load %arg0[%425] : memref<6xi32, #tpu.memory_space<smem>>
    %c1_i32_196 = arith.constant 1 : i32
    %427 = arith.cmpi eq, %426, %c1_i32_196 : i32
    %428 = arith.extui %427 : i1 to i32
    %c0_i32_197 = arith.constant 0 : i32
    %429 = arith.cmpi ne, %428, %c0_i32_197 : i32
    scf.if %429 {
      %531 = arith.index_cast %336 : i32 to index
      %c0_242 = arith.constant 0 : index
      %c0_243 = arith.constant 0 : index
      %532 = vector.load %arg1[%531, %c0_242, %c0_243] : memref<6x2x1xi32, #tpu.memory_space<vmem>>, vector<1x2x1xi32>
      %533 = vector.shape_cast %532 : vector<1x2x1xi32> to vector<2x1xi32>
      %534 = vector.broadcast %533 : vector<2x1xi32> to vector<2x128xi32>
      %535 = arith.cmpi eq, %29, %534 : vector<2x128xi32>
      %536 = arith.extui %535 : vector<2x128xi1> to vector<2x128xi32>
      %537 = arith.sitofp %536 : vector<2x128xi32> to vector<2x128xf32>
      %c0_244 = arith.constant 0 : index
      %c0_245 = arith.constant 0 : index
      %538 = vector.load %arg20[%c0_244, %c0_245] : memref<2x128xf32, #tpu.memory_space<vmem>>, vector<2x128xf32>
      tpu.vector_store %arg20[%c0_244, %c0_245], %537 {strides = array<i32>} : memref<2x128xf32, #tpu.memory_space<vmem>>, vector<2x128xf32>,
    } else {
    }
    %c0_i32_198 = arith.constant 0 : i32
    %430 = arith.cmpi eq, %426, %c0_i32_198 : i32
    %431 = arith.extui %430 : i1 to i32
    %c0_i32_199 = arith.constant 0 : i32
    %432 = arith.cmpi ne, %431, %c0_i32_199 : i32
    scf.if %432 {
      %cst_242 = arith.constant dense<0xFF800000> : vector<2xf32>
      %531 = vector.multi_reduction <maximumf>, %419, %cst_242 [1] : vector<2x128xf32> to vector<2xf32>
      %532 = vector.shape_cast %531 : vector<2xf32> to vector<2x1xf32>
      %533 = vector.broadcast %532 : vector<2x1xf32> to vector<2x128xf32>
      %534 = arith.cmpf oeq, %419, %533 : vector<2x128xf32>
      %c128_i32 = arith.constant 128 : i32
      %535 = vector.broadcast %c128_i32 : i32 to vector<2x128xi32>
      %536 = arith.select %534, %29, %535 : vector<2x128xi1>, vector<2x128xi32>
      %cst_243 = arith.constant dense<2147483647> : vector<2xi32>
      %537 = vector.multi_reduction <minsi>, %536, %cst_243 [1] : vector<2x128xi32> to vector<2xi32>
      %538 = vector.shape_cast %537 : vector<2xi32> to vector<2x1xi32>
      %539 = vector.broadcast %538 : vector<2x1xi32> to vector<2x128xi32>
      %540 = arith.cmpi eq, %29, %539 : vector<2x128xi32>
      %541 = arith.extui %540 : vector<2x128xi1> to vector<2x128xi32>
      %542 = arith.sitofp %541 : vector<2x128xi32> to vector<2x128xf32>
      %c0_244 = arith.constant 0 : index
      %c0_245 = arith.constant 0 : index
      %543 = vector.load %arg20[%c0_244, %c0_245] : memref<2x128xf32, #tpu.memory_space<vmem>>, vector<2x128xf32>
      tpu.vector_store %arg20[%c0_244, %c0_245], %542 {strides = array<i32>} : memref<2x128xf32, #tpu.memory_space<vmem>>, vector<2x128xf32>,
    } else {
    }
    %c4_i32 = arith.constant 4 : i32
    %c1_i32_200 = arith.constant 1 : i32
    %433 = arith.muli %c4_i32, %c1_i32_200 : i32
    %c1_i32_201 = arith.constant 1 : i32
    %434 = arith.addi %c1_i32_201, %433 : i32
    %c0_202 = arith.constant 0 : index
    %c0_203 = arith.constant 0 : index
    %435 = vector.load %arg19[%c0_202, %c0_203] : memref<2x32xf32, #tpu.memory_space<vmem>>, vector<2x32xf32>
    %c0_204 = arith.constant 0 : index
    %c0_205 = arith.constant 0 : index
    %436 = vector.load %arg20[%c0_204, %c0_205] : memref<2x128xf32, #tpu.memory_space<vmem>>, vector<2x128xf32>
    %c0_206 = arith.constant 0 : index
    %c0_207 = arith.constant 0 : index
    %437 = vector.load %arg12[%c0_206, %c0_207] : memref<128x16xbf16, #tpu.memory_space<vmem>>, vector<128x16xbf16>
    %438 = arith.truncf %436 : vector<2x128xf32> to vector<2x128xbf16>
    %cst_208 = arith.constant dense<0.000000e+00> : vector<2x16xf32>
    %439 = tpu.matmul %438, %437, %cst_208 {dimension_numbers = #tpu.dot_dimension_numbers<[1], [0], [0], [1], [0, 0, 1, 1], [], []>} : vector<2x128xbf16>, vector<128x16xbf16>, vector<2x16xf32> -> vector<2x16xf32>
    %c0_209 = arith.constant 0 : index
    %c0_210 = arith.constant 0 : index
    %440 = vector.load %arg10[%c0_209, %c0_210] : memref<32x128xbf16, #tpu.memory_space<vmem>>, vector<32x128xbf16>
    %441 = arith.truncf %435 : vector<2x32xf32> to vector<2x32xbf16>
    %cst_211 = arith.constant dense<0.000000e+00> : vector<2x128xf32>
    %442 = tpu.matmul %441, %440, %cst_211 {dimension_numbers = #tpu.dot_dimension_numbers<[1], [0], [0], [1], [0, 0, 1, 1], [], []>} : vector<2x32xbf16>, vector<32x128xbf16>, vector<2x128xf32> -> vector<2x128xf32>
    %c0_212 = arith.constant 0 : index
    %c0_213 = arith.constant 0 : index
    %443 = vector.load %arg11[%c0_212, %c0_213] : memref<1x128xf32, #tpu.memory_space<vmem>>, vector<1x128xf32>
    %444 = vector.broadcast %443 : vector<1x128xf32> to vector<2x128xf32>
    %445 = arith.addf %442, %444 : vector<2x128xf32>
    %446 = vector.extract_strided_slice %445 {offsets = [0, 0], sizes = [2, 32], strides = [1, 1]} : vector<2x128xf32> to vector<2x32xf32>
    %447 = vector.extract_strided_slice %445 {offsets = [0, 32], sizes = [2, 96], strides = [1, 1]} : vector<2x128xf32> to vector<2x96xf32>
    %448 = vector.shape_cast %446 : vector<2x32xf32> to vector<2x1x32xf32>
    %449 = vector.broadcast %448 : vector<2x1x32xf32> to vector<2x16x32xf32>
    %450 = arith.addf %17, %449 : vector<2x16x32xf32>
    %451 = math.tanh %450 : vector<2x16x32xf32>
    %452 = vector.shape_cast %28 : vector<1x32xf32> to vector<1x1x32xf32>
    %453 = vector.broadcast %452 : vector<1x1x32xf32> to vector<2x16x32xf32>
    %454 = arith.mulf %451, %453 : vector<2x16x32xf32>
    %cst_214 = arith.constant dense<0.000000e+00> : vector<2x16xf32>
    %455 = vector.multi_reduction <add>, %454, %cst_214 [2] : vector<2x16x32xf32> to vector<2x16xf32>
    %cst_215 = arith.constant dense<0xFF800000> : vector<2xf32>
    %456 = vector.multi_reduction <maximumf>, %455, %cst_215 [1] : vector<2x16xf32> to vector<2xf32>
    %457 = vector.shape_cast %456 : vector<2xf32> to vector<2x1xf32>
    %458 = vector.broadcast %457 : vector<2x1xf32> to vector<2x16xf32>
    %459 = arith.subf %455, %458 : vector<2x16xf32>
    %460 = math.exp %459 : vector<2x16xf32>
    %cst_216 = arith.constant dense<0.000000e+00> : vector<2xf32>
    %461 = vector.multi_reduction <add>, %460, %cst_216 [1] : vector<2x16xf32> to vector<2xf32>
    %462 = vector.shape_cast %461 : vector<2xf32> to vector<2x1xf32>
    %463 = tpu.reciprocal %462 {approx = true} : vector<2x1xf32> -> vector<2x1xf32>
    %464 = vector.broadcast %463 : vector<2x1xf32> to vector<2x16xf32>
    %465 = arith.mulf %460, %464 : vector<2x16xf32>
    %466 = vector.shape_cast %465 : vector<2x16xf32> to vector<2x16x1xf32>
    %467 = vector.broadcast %466 : vector<2x16x1xf32> to vector<2x16x32xf32>
    %468 = arith.mulf %467, %16 : vector<2x16x32xf32>
    %cst_217 = arith.constant dense<0.000000e+00> : vector<2x32xf32>
    %469 = vector.multi_reduction <add>, %468, %cst_217 [1] : vector<2x16x32xf32> to vector<2x32xf32>
    %c0_218 = arith.constant 0 : index
    %c0_219 = arith.constant 0 : index
    %470 = vector.load %arg13[%c0_218, %c0_219] : memref<16x224xbf16, #tpu.memory_space<vmem>>, vector<16x224xbf16>
    %471 = arith.truncf %439 : vector<2x16xf32> to vector<2x16xbf16>
    %cst_220 = arith.constant dense<0.000000e+00> : vector<2x224xf32>
    %472 = tpu.matmul %471, %470, %cst_220 {dimension_numbers = #tpu.dot_dimension_numbers<[1], [0], [0], [1], [0, 0, 1, 1], [], []>} : vector<2x16xbf16>, vector<16x224xbf16>, vector<2x224xf32> -> vector<2x224xf32>
    %c0_221 = arith.constant 0 : index
    %c0_222 = arith.constant 0 : index
    %473 = vector.load %arg14[%c0_221, %c0_222] : memref<32x224xbf16, #tpu.memory_space<vmem>>, vector<32x224xbf16>
    %474 = arith.truncf %469 : vector<2x32xf32> to vector<2x32xbf16>
    %cst_223 = arith.constant dense<0.000000e+00> : vector<2x224xf32>
    %475 = tpu.matmul %474, %473, %cst_223 {dimension_numbers = #tpu.dot_dimension_numbers<[1], [0], [0], [1], [0, 0, 1, 1], [], []>} : vector<2x32xbf16>, vector<32x224xbf16>, vector<2x224xf32> -> vector<2x224xf32>
    %476 = vector.extract_strided_slice %472 {offsets = [0, 128], sizes = [2, 96], strides = [1, 1]} : vector<2x224xf32> to vector<2x96xf32>
    %477 = vector.extract_strided_slice %475 {offsets = [0, 128], sizes = [2, 96], strides = [1, 1]} : vector<2x224xf32> to vector<2x96xf32>
    %478 = arith.addf %476, %477 : vector<2x96xf32>
    %c0_224 = arith.constant 0 : index
    %c0_225 = arith.constant 0 : index
    %479 = vector.load %arg15[%c0_224, %c0_225] : memref<1x96xf32, #tpu.memory_space<vmem>>, vector<1x96xf32>
    %480 = vector.broadcast %479 : vector<1x96xf32> to vector<2x96xf32>
    %481 = arith.addf %478, %480 : vector<2x96xf32>
    %482 = vector.extract_strided_slice %481 {offsets = [0, 0], sizes = [2, 32], strides = [1, 1]} : vector<2x96xf32> to vector<2x32xf32>
    %483 = vector.extract_strided_slice %447 {offsets = [0, 0], sizes = [2, 32], strides = [1, 1]} : vector<2x96xf32> to vector<2x32xf32>
    %484 = arith.addf %482, %483 : vector<2x32xf32>
    %485 = arith.negf %484 : vector<2x32xf32>
    %486 = math.exp %485 : vector<2x32xf32>
    %cst_226 = arith.constant 1.000000e+00 : f32
    %487 = vector.broadcast %cst_226 : f32 to vector<2x32xf32>
    %488 = arith.addf %487, %486 : vector<2x32xf32>
    %489 = arith.divf %487, %488 : vector<2x32xf32>
    %490 = vector.extract_strided_slice %481 {offsets = [0, 32], sizes = [2, 32], strides = [1, 1]} : vector<2x96xf32> to vector<2x32xf32>
    %491 = vector.extract_strided_slice %447 {offsets = [0, 32], sizes = [2, 32], strides = [1, 1]} : vector<2x96xf32> to vector<2x32xf32>
    %492 = arith.addf %490, %491 : vector<2x32xf32>
    %493 = arith.negf %492 : vector<2x32xf32>
    %494 = math.exp %493 : vector<2x32xf32>
    %cst_227 = arith.constant 1.000000e+00 : f32
    %495 = vector.broadcast %cst_227 : f32 to vector<2x32xf32>
    %496 = arith.addf %495, %494 : vector<2x32xf32>
    %497 = arith.divf %495, %496 : vector<2x32xf32>
    %498 = vector.extract_strided_slice %481 {offsets = [0, 64], sizes = [2, 32], strides = [1, 1]} : vector<2x96xf32> to vector<2x32xf32>
    %499 = vector.extract_strided_slice %447 {offsets = [0, 64], sizes = [2, 32], strides = [1, 1]} : vector<2x96xf32> to vector<2x32xf32>
    %500 = arith.mulf %489, %499 : vector<2x32xf32>
    %501 = arith.addf %498, %500 : vector<2x32xf32>
    %502 = math.tanh %501 : vector<2x32xf32>
    %cst_228 = arith.constant 1.000000e+00 : f32
    %503 = vector.broadcast %cst_228 : f32 to vector<2x32xf32>
    %504 = arith.subf %503, %497 : vector<2x32xf32>
    %505 = arith.mulf %504, %502 : vector<2x32xf32>
    %506 = arith.mulf %497, %435 : vector<2x32xf32>
    %507 = arith.addf %505, %506 : vector<2x32xf32>
    %c0_229 = arith.constant 0 : index
    %c0_230 = arith.constant 0 : index
    %508 = vector.load %arg16[%c0_229, %c0_230] : memref<32x128xbf16, #tpu.memory_space<vmem>>, vector<32x128xbf16>
    %509 = arith.truncf %507 : vector<2x32xf32> to vector<2x32xbf16>
    %cst_231 = arith.constant dense<0.000000e+00> : vector<2x128xf32>
    %510 = tpu.matmul %509, %508, %cst_231 {dimension_numbers = #tpu.dot_dimension_numbers<[1], [0], [0], [1], [0, 0, 1, 1], [], []>} : vector<2x32xbf16>, vector<32x128xbf16>, vector<2x128xf32> -> vector<2x128xf32>
    %511 = vector.extract_strided_slice %472 {offsets = [0, 0], sizes = [2, 128], strides = [1, 1]} : vector<2x224xf32> to vector<2x128xf32>
    %512 = arith.addf %510, %511 : vector<2x128xf32>
    %513 = vector.extract_strided_slice %475 {offsets = [0, 0], sizes = [2, 128], strides = [1, 1]} : vector<2x224xf32> to vector<2x128xf32>
    %514 = arith.addf %512, %513 : vector<2x128xf32>
    %c0_232 = arith.constant 0 : index
    %c0_233 = arith.constant 0 : index
    %515 = vector.load %arg17[%c0_232, %c0_233] : memref<1x128xf32, #tpu.memory_space<vmem>>, vector<1x128xf32>
    %516 = vector.broadcast %515 : vector<1x128xf32> to vector<2x128xf32>
    %517 = arith.addf %514, %516 : vector<2x128xf32>
    %518 = arith.index_cast %434 : i32 to index
    %c0_234 = arith.constant 0 : index
    %c0_235 = arith.constant 0 : index
    %519 = vector.load %arg18[%518, %c0_234, %c0_235] : memref<6x2x128xf32, #tpu.memory_space<vmem>>, vector<1x2x128xf32>
    %520 = vector.shape_cast %519 : vector<1x2x128xf32> to vector<2x128xf32>
    %521 = vector.shape_cast %517 : vector<2x128xf32> to vector<1x2x128xf32>
    tpu.vector_store %arg18[%518, %c0_234, %c0_235], %521 {strides = array<i32>} : memref<6x2x128xf32, #tpu.memory_space<vmem>>, vector<1x2x128xf32>,
    %c0_236 = arith.constant 0 : index
    %c0_237 = arith.constant 0 : index
    %522 = vector.load %arg19[%c0_236, %c0_237] : memref<2x32xf32, #tpu.memory_space<vmem>>, vector<2x32xf32>
    tpu.vector_store %arg19[%c0_236, %c0_237], %507 {strides = array<i32>} : memref<2x32xf32, #tpu.memory_space<vmem>>, vector<2x32xf32>,
    %523 = arith.index_cast %434 : i32 to index
    %524 = memref.load %arg0[%523] : memref<6xi32, #tpu.memory_space<smem>>
    %c1_i32_238 = arith.constant 1 : i32
    %525 = arith.cmpi eq, %524, %c1_i32_238 : i32
    %526 = arith.extui %525 : i1 to i32
    %c0_i32_239 = arith.constant 0 : i32
    %527 = arith.cmpi ne, %526, %c0_i32_239 : i32
    scf.if %527 {
      %531 = arith.index_cast %434 : i32 to index
      %c0_242 = arith.constant 0 : index
      %c0_243 = arith.constant 0 : index
      %532 = vector.load %arg1[%531, %c0_242, %c0_243] : memref<6x2x1xi32, #tpu.memory_space<vmem>>, vector<1x2x1xi32>
      %533 = vector.shape_cast %532 : vector<1x2x1xi32> to vector<2x1xi32>
      %534 = vector.broadcast %533 : vector<2x1xi32> to vector<2x128xi32>
      %535 = arith.cmpi eq, %29, %534 : vector<2x128xi32>
      %536 = arith.extui %535 : vector<2x128xi1> to vector<2x128xi32>
      %537 = arith.sitofp %536 : vector<2x128xi32> to vector<2x128xf32>
      %c0_244 = arith.constant 0 : index
      %c0_245 = arith.constant 0 : index
      %538 = vector.load %arg20[%c0_244, %c0_245] : memref<2x128xf32, #tpu.memory_space<vmem>>, vector<2x128xf32>
      tpu.vector_store %arg20[%c0_244, %c0_245], %537 {strides = array<i32>} : memref<2x128xf32, #tpu.memory_space<vmem>>, vector<2x128xf32>,
    } else {
    }
    %c0_i32_240 = arith.constant 0 : i32
    %528 = arith.cmpi eq, %524, %c0_i32_240 : i32
    %529 = arith.extui %528 : i1 to i32
    %c0_i32_241 = arith.constant 0 : i32
    %530 = arith.cmpi ne, %529, %c0_i32_241 : i32
    scf.if %530 {
      %cst_242 = arith.constant dense<0xFF800000> : vector<2xf32>
      %531 = vector.multi_reduction <maximumf>, %517, %cst_242 [1] : vector<2x128xf32> to vector<2xf32>
      %532 = vector.shape_cast %531 : vector<2xf32> to vector<2x1xf32>
      %533 = vector.broadcast %532 : vector<2x1xf32> to vector<2x128xf32>
      %534 = arith.cmpf oeq, %517, %533 : vector<2x128xf32>
      %c128_i32 = arith.constant 128 : i32
      %535 = vector.broadcast %c128_i32 : i32 to vector<2x128xi32>
      %536 = arith.select %534, %29, %535 : vector<2x128xi1>, vector<2x128xi32>
      %cst_243 = arith.constant dense<2147483647> : vector<2xi32>
      %537 = vector.multi_reduction <minsi>, %536, %cst_243 [1] : vector<2x128xi32> to vector<2xi32>
      %538 = vector.shape_cast %537 : vector<2xi32> to vector<2x1xi32>
      %539 = vector.broadcast %538 : vector<2x1xi32> to vector<2x128xi32>
      %540 = arith.cmpi eq, %29, %539 : vector<2x128xi32>
      %541 = arith.extui %540 : vector<2x128xi1> to vector<2x128xi32>
      %542 = arith.sitofp %541 : vector<2x128xi32> to vector<2x128xf32>
      %c0_244 = arith.constant 0 : index
      %c0_245 = arith.constant 0 : index
      %543 = vector.load %arg20[%c0_244, %c0_245] : memref<2x128xf32, #tpu.memory_space<vmem>>, vector<2x128xf32>
      tpu.vector_store %arg20[%c0_244, %c0_245], %542 {strides = array<i32>} : memref<2x128xf32, #tpu.memory_space<vmem>>, vector<2x128xf32>,
    } else {
    }
    %c5_i32 = arith.constant 5 : i32
    return
  }
}

</mosaic_0001>

<llo_original>
// kernel: seq2seq_forward.1
$region0: #{seq2seq_forward.1}
  #allocation0 [shape = 'u32[]', space=smem, size = 0x4, offset = 0x4, fixed_abs, tag = 'smem constant byte address 0x4 - core index']
  #allocation1 [shape = 'u32[144,128]{1,0:T(1,128)}', space=vmem, size = 0x12000, scoped, tag = 'internal scratch']
  #allocation2 [shape = 'f32[2,32]{1,0:T(2,128)}', space=vmem, size = 0x400, scoped, tag = 'scratch operand']
  #allocation3 [shape = 'f32[2,128]{1,0:T(2,128)}', space=vmem, size = 0x400, scoped, tag = 'scratch operand']
  %s0 = inlined_call_operand.vmem [shape: s32[6], index: 0, kind: input, shape index: {}]
  %s1 = inlined_call_operand.vmem [shape: s32[6,2,1], index: 1, kind: input, shape index: {}]
  %s2 = inlined_call_operand.vmem [shape: f32[2,16,3], index: 2, kind: input, shape index: {}]
  %s3 = inlined_call_operand.vmem [shape: bf16[3,32], index: 3, kind: input, shape index: {}]
  %s4 = inlined_call_operand.vmem [shape: f32[1,32], index: 4, kind: input, shape index: {}]
  %s5 = inlined_call_operand.vmem [shape: bf16[32,32], index: 5, kind: input, shape index: {}]
  %s6 = inlined_call_operand.vmem [shape: f32[1,32], index: 6, kind: input, shape index: {}]
  %s7 = inlined_call_operand.vmem [shape: bf16[32,32], index: 7, kind: input, shape index: {}]
  %s8 = inlined_call_operand.vmem [shape: f32[1,32], index: 8, kind: input, shape index: {}]
  %s9 = inlined_call_operand.vmem [shape: f32[1,32], index: 9, kind: input, shape index: {}]
  %s10 = inlined_call_operand.vmem [shape: bf16[32,128], index: 10, kind: input, shape index: {}]
  %s11 = inlined_call_operand.vmem [shape: f32[1,128], index: 11, kind: input, shape index: {}]
  %s12 = inlined_call_operand.vmem [shape: bf16[128,16], index: 12, kind: input, shape index: {}]
  %s13 = inlined_call_operand.vmem [shape: bf16[16,224], index: 13, kind: input, shape index: {}]
  %s14 = inlined_call_operand.vmem [shape: bf16[32,224], index: 14, kind: input, shape index: {}]
  %s15 = inlined_call_operand.vmem [shape: f32[1,96], index: 15, kind: input, shape index: {}]
  %s16 = inlined_call_operand.vmem [shape: bf16[32,128], index: 16, kind: input, shape index: {}]
  %s17 = inlined_call_operand.vmem [shape: f32[1,128], index: 17, kind: input, shape index: {}]
  %s18 = inlined_call_operand.hbm [shape: f32[6,2,128], index: 18, kind: output, shape index: {}]
  %s19 = sld [smem:[#allocation0]]
  $region126: #{seq2seq_forward.1} parent=0
    _
  %s21 = ssub.s32 1, %s19
  %s22 = scalar_select 0, %s21, %s19
  $region1: #{seq2seq_forward.1} parent=0
    #allocation4 [shape = 'u8[512]{0}', space=smem, size = 0x200, scoped, tag = 'input window, operand 0, single buffered']
    #allocation5 [shape = 's32[1]{0}', space=sflag, size = 0x4, scoped, tag = 'scoped memory for seq2seq_forward.1']
    #allocation6 [shape = 's32[1]{0}', space=sflag, size = 0x4, scoped, tag = 'scoped memory for seq2seq_forward.1']
    #allocation7 [shape = 'u8[6144]{0}', space=vmem, size = 0x1800, scoped, tag = 'output window, operand 0, single buffered']
    %23 = vsyncpa [#allocation6], 0
    %24 = vsyncpa [#allocation5], 0
    // Predicated region
    $region2: #{seq2seq_forward.1} parent=1 // pred_check
      _
    $region3: #{seq2seq_forward.1} parent=1 // pred_check_branch
      %26 = sbr.rel (0) target = $region5
    $region4: #{seq2seq_forward.1} parent=1 // pred_region
      %s28 = ssub.s32 16, 16
      %29 = vsyncadd [#allocation6], %s28
      %s31 = sshll.u32 %s0, 4
      %s32 = int_to_ptr.vmem [resolvable:$true] %s31
      %34 = dma.vmem_to_smem %s32, 16, [#allocation4], [#allocation6]
    $region5: #{seq2seq_forward.1} parent=1 // pred_fallthru
      _
    // Predicated region
    $region6: #{seq2seq_forward.1} parent=1 // pred_check
      _
    $region7: #{seq2seq_forward.1} parent=1 // pred_check_branch
      %36 = sbr.rel (0) target = $region9
    $region8: #{seq2seq_forward.1} parent=1 // pred_region
      _
    $region9: #{seq2seq_forward.1} parent=1 // pred_fallthru
      _
    // Predicated region
    $region10: #{seq2seq_forward.1} parent=1 // pred_check
      _
    $region11: #{seq2seq_forward.1} parent=1 // pred_check_branch
      %38 = sbr.rel (0) target = $region13
    $region12: #{seq2seq_forward.1} parent=1 // pred_region
      _
    $region13: #{seq2seq_forward.1} parent=1 // pred_fallthru
      _
    // Predicated region
    $region14: #{seq2seq_forward.1} parent=1 // pred_check
      _
    $region15: #{seq2seq_forward.1} parent=1 // pred_check_branch
      %40 = sbr.rel (0) target = $region17
    $region16: #{seq2seq_forward.1} parent=1 // pred_region
      _
    $region17: #{seq2seq_forward.1} parent=1 // pred_fallthru
      _
    // Predicated region
    $region18: #{seq2seq_forward.1} parent=1 // pred_check
      _
    $region19: #{seq2seq_forward.1} parent=1 // pred_check_branch
      %42 = sbr.rel (0) target = $region21
    $region20: #{seq2seq_forward.1} parent=1 // pred_region
      _
    $region21: #{seq2seq_forward.1} parent=1 // pred_fallthru
      _
    // Predicated region
    $region22: #{seq2seq_forward.1} parent=1 // pred_check
      _
    $region23: #{seq2seq_forward.1} parent=1 // pred_check_branch
      %44 = sbr.rel (0) target = $region25
    $region24: #{seq2seq_forward.1} parent=1 // pred_region
      _
    $region25: #{seq2seq_forward.1} parent=1 // pred_fallthru
      _
    // Predicated region
    $region26: #{seq2seq_forward.1} parent=1 // pred_check
      _
    $region27: #{seq2seq_forward.1} parent=1 // pred_check_branch
      %46 = sbr.rel (0) target = $region29
    $region28: #{seq2seq_forward.1} parent=1 // pred_region
      _
    $region29: #{seq2seq_forward.1} parent=1 // pred_fallthru
      _
    // Predicated region
    $region30: #{seq2seq_forward.1} parent=1 // pred_check
      _
    $region31: #{seq2seq_forward.1} parent=1 // pred_check_branch
      %48 = sbr.rel (0) target = $region33
    $region32: #{seq2seq_forward.1} parent=1 // pred_region
      _
    $region33: #{seq2seq_forward.1} parent=1 // pred_fallthru
      _
    // Predicated region
    $region34: #{seq2seq_forward.1} parent=1 // pred_check
      _
    $region35: #{seq2seq_forward.1} parent=1 // pred_check_branch
      %50 = sbr.rel (0) target = $region37
    $region36: #{seq2seq_forward.1} parent=1 // pred_region
      _
    $region37: #{seq2seq_forward.1} parent=1 // pred_fallthru
      _
    // Predicated region
    $region38: #{seq2seq_forward.1} parent=1 // pred_check
      _
    $region39: #{seq2seq_forward.1} parent=1 // pred_check_branch
      %52 = sbr.rel (0) target = $region41
    $region40: #{seq2seq_forward.1} parent=1 // pred_region
      _
    $region41: #{seq2seq_forward.1} parent=1 // pred_fallthru
      _
    // Predicated region
    $region42: #{seq2seq_forward.1} parent=1 // pred_check
      _
    $region43: #{seq2seq_forward.1} parent=1 // pred_check_branch
      %54 = sbr.rel (0) target = $region45
    $region44: #{seq2seq_forward.1} parent=1 // pred_region
      _
    $region45: #{seq2seq_forward.1} parent=1 // pred_fallthru
      _
    // Predicated region
    $region46: #{seq2seq_forward.1} parent=1 // pred_check
      _
    $region47: #{seq2seq_forward.1} parent=1 // pred_check_branch
      %56 = sbr.rel (0) target = $region49
    $region48: #{seq2seq_forward.1} parent=1 // pred_region
      _
    $region49: #{seq2seq_forward.1} parent=1 // pred_fallthru
      _
    // Predicated region
    $region50: #{seq2seq_forward.1} parent=1 // pred_check
      _
    $region51: #{seq2seq_forward.1} parent=1 // pred_check_branch
      %58 = sbr.rel (0) target = $region53
    $region52: #{seq2seq_forward.1} parent=1 // pred_region
      _
    $region53: #{seq2seq_forward.1} parent=1 // pred_fallthru
      _
    // Predicated region
    $region54: #{seq2seq_forward.1} parent=1 // pred_check
      _
    $region55: #{seq2seq_forward.1} parent=1 // pred_check_branch
      %60 = sbr.rel (0) target = $region57
    $region56: #{seq2seq_forward.1} parent=1 // pred_region
      _
    $region57: #{seq2seq_forward.1} parent=1 // pred_fallthru
      _
    // Predicated region
    $region58: #{seq2seq_forward.1} parent=1 // pred_check
      _
    $region59: #{seq2seq_forward.1} parent=1 // pred_check_branch
      %62 = sbr.rel (0) target = $region61
    $region60: #{seq2seq_forward.1} parent=1 // pred_region
      _
    $region61: #{seq2seq_forward.1} parent=1 // pred_fallthru
      _
    // Predicated region
    $region62: #{seq2seq_forward.1} parent=1 // pred_check
      _
    $region63: #{seq2seq_forward.1} parent=1 // pred_check_branch
      %64 = sbr.rel (0) target = $region65
    $region64: #{seq2seq_forward.1} parent=1 // pred_region
      _
    $region65: #{seq2seq_forward.1} parent=1 // pred_fallthru
      _
    // Predicated region
    $region66: #{seq2seq_forward.1} parent=1 // pred_check
      _
    $region67: #{seq2seq_forward.1} parent=1 // pred_check_branch
      %66 = sbr.rel (0) target = $region69
    $region68: #{seq2seq_forward.1} parent=1 // pred_region
      _
    $region69: #{seq2seq_forward.1} parent=1 // pred_fallthru
      _
    // Predicated region
    $region70: #{seq2seq_forward.1} parent=1 // pred_check
      _
    $region71: #{seq2seq_forward.1} parent=1 // pred_check_branch
      %68 = sbr.rel (0) target = $region73
    $region72: #{seq2seq_forward.1} parent=1 // pred_region
      _
    $region73: #{seq2seq_forward.1} parent=1 // pred_fallthru
      _
    // Predicated region
    $region74: #{seq2seq_forward.1} parent=1 // pred_check
      _
    $region75: #{seq2seq_forward.1} parent=1 // pred_check_branch
      %70 = sbr.rel (0) target = $region77
    $region76: #{seq2seq_forward.1} parent=1 // pred_region
      %71 = dma.done [#allocation6], 16
    $region77: #{seq2seq_forward.1} parent=1 // pred_fallthru
      _
    %72 = sfence
    %v74 = vld [vmem:[%s2] sm:$0xff]
    %v75 = vld [vmem:[%s2 + $0x8] sm:$0xff]
    %v76 = vld [vmem:[%s2 + $0x10] sm:$0xff]
    %v77 = vld [vmem:[%s2 + $0x18] sm:$0xff]
    %v78 = vld [vmem:[%s3] sm:$0x3]
    %v79 = vpack.c.bf16 %v75, %v74
    %v80 = vpack.c.bf16 %v77, %v76
    %v81 = vld [vmem:[%s4] sm:$0x1]
    %v83 = vlaneseq
    %v84 = vshrl.u32 %v83, 7
    %v85 = vsub.s32 0, %v84
    %v86 = vrot.slane %v81, %v85
    %vm88 = vcmask 23552
    %v90 = vsel %vm88, %v79, 0
    %v93 = vsel %vm88, %v80, 0
    %vm95 = vcmask 1040384
    %vm96 = vcmask 1041408
    %v97 = vsel %vm95, 4294967295, 65535
    %v98 = vsel %vm96, %v97, 0
    %v100 = vand.u32 %v78, %v98
    %102 = vmatprep.subr.bf16.mxu0 0
    %103 = vmatpush1.bf16.msra.mxu0 0
    %104 = vmatprep.subr.bf16.mxu0 0
    %105 = vmatpush1.bf16.msra.mxu0 0
    %106 = vmatprep.subr.bf16.mxu0 0
    %107 = vmatpush1.bf16.msra.mxu0 0
    %108 = vmatprep.subr.bf16.mxu0 0
    %109 = vmatpush1.bf16.msra.mxu0 0
    %110 = vmatprep.subr.bf16.mxu0 0
    %111 = vmatpush1.bf16.msra.mxu0 0
    %112 = vmatprep.subr.bf16.mxu0 0
    %113 = vmatpush1.bf16.msra.mxu0 0
    %114 = vmatprep.subr.bf16.mxu0 0
    %115 = vmatpush1.bf16.msra.mxu0 0
    %116 = vmatprep.subr.bf16.mxu0 0
    %117 = vmatpush1.bf16.msra.mxu0 %v100
    %118 = vmatprep.subr.bf16.mxu0 0
    %119 = vmatpush2.bf16.msra.mxu0 0
    %120 = vmatprep.subr.bf16.mxu0 0
    %121 = vmatpush2.bf16.msra.mxu0 0
    %122 = vmatprep.subr.bf16.mxu0 0
    %123 = vmatpush2.bf16.msra.mxu0 0
    %124 = vmatprep.subr.bf16.mxu0 0
    %125 = vmatpush2.bf16.msra.mxu0 0
    %126 = vmatprep.subr.bf16.mxu0 0
    %127 = vmatpush2.bf16.msra.mxu0 0
    %128 = vmatprep.subr.bf16.mxu0 0
    %129 = vmatpush2.bf16.msra.mxu0 0
    %130 = vmatprep.subr.bf16.mxu0 0
    %131 = vmatpush2.bf16.msra.mxu0 0
    %132 = vmatprep.subr.bf16.mxu0 0
    %133 = vmatpush2.bf16.msra.mxu0 0
    %134 = vmatprep.mubr.bf16.mxu0 0
    %135 = vmatmul.mubr.bf16.gmra.mxu0 %v90
    %v136 = vpop.f32.mrf.mxu0
    %v137 = vadd.f32 %v86, %v136
    %v138 = vpop.f32.mrf.mxu0
    %v139 = vpop.f32.mrf.mxu0
    %v140 = vadd.f32 %v86, %v139
    %v141 = vpop.f32.mrf.mxu0
    %142 = vmatprep.mubr.bf16.mxu0 0
    %143 = vmatmul.mubr.bf16.gmra.mxu0 %v93
    %v144 = vpop.f32.mrf.mxu0
    %v145 = vadd.f32 %v86, %v144
    %v146 = vpop.f32.mrf.mxu0
    %v147 = vpop.f32.mrf.mxu0
    %v148 = vadd.f32 %v86, %v147
    %v149 = vpop.f32.mrf.mxu0
    %150 = vdwg.mxu0
    %v151 = vmax.f32 %v137, 0.0
    %v152 = vmax.f32 %v140, 0.0
    %v153 = vmax.f32 %v145, 0.0
    %v154 = vmax.f32 %v148, 0.0
    %v155 = vld [vmem:[%s7] sm:$0xf]
    %v156 = vld [vmem:[%s7 + $0x4] sm:$0xf]
    %v157 = vld [vmem:[%s7 + $0x8] sm:$0xf]
    %v158 = vld [vmem:[%s7 + $0xc] sm:$0xf]
    %v159 = vpack.c.bf16 %v152, %v151
    %v160 = vpack.c.bf16 %v154, %v153
    %v161 = vld [vmem:[%s8] sm:$0x1]
    %v163 = vlaneseq
    %v164 = vshrl.u32 %v163, 7
    %v165 = vsub.s32 0, %v164
    %v166 = vrot.slane %v161, %v165
    %v172 = vunpack.c.l.b16 %v155
    %v173 = vunpack.c.l.b16 %v156
    %v174 = vunpack.c.l.b16 %v157
    %v175 = vunpack.c.l.b16 %v158
    %v176 = vpack.c.b16 %v173, %v172
    %v177 = vpack.c.b16 %v175, %v174
    %vm180 = vcmask 261120
    %v182 = vsel %vm180, %v159, 0
    %v185 = vsel %vm180, %v160, 0
    %187 = vmatprep.subr.bf16.mxu0 0
    %188 = vmatpush1.bf16.msra.mxu0 0
    %189 = vmatprep.subr.bf16.mxu0 0
    %190 = vmatpush1.bf16.msra.mxu0 0
    %191 = vmatprep.subr.bf16.mxu0 0
    %192 = vmatpush1.bf16.msra.mxu0 0
    %193 = vmatprep.subr.bf16.mxu0 0
    %194 = vmatpush1.bf16.msra.mxu0 0
    %195 = vmatprep.subr.bf16.mxu0 0
    %196 = vmatpush1.bf16.msra.mxu0 0
    %197 = vmatprep.subr.bf16.mxu0 0
    %198 = vmatpush1.bf16.msra.mxu0 0
    %199 = vmatprep.subr.bf16.mxu0 0
    %200 = vmatpush1.bf16.msra.mxu0 %v177
    %201 = vmatprep.subr.bf16.mxu0 0
    %202 = vmatpush1.bf16.msra.mxu0 %v176
    %203 = vmatprep.subr.bf16.mxu0 0
    %204 = vmatpush2.bf16.msra.mxu0 0
    %205 = vmatprep.subr.bf16.mxu0 0
    %206 = vmatpush2.bf16.msra.mxu0 0
    %207 = vmatprep.subr.bf16.mxu0 0
    %208 = vmatpush2.bf16.msra.mxu0 0
    %209 = vmatprep.subr.bf16.mxu0 0
    %210 = vmatpush2.bf16.msra.mxu0 0
    %211 = vmatprep.subr.bf16.mxu0 0
    %212 = vmatpush2.bf16.msra.mxu0 0
    %213 = vmatprep.subr.bf16.mxu0 0
    %214 = vmatpush2.bf16.msra.mxu0 0
    %215 = vmatprep.subr.bf16.mxu0 0
    %216 = vmatpush2.bf16.msra.mxu0 0
    %217 = vmatprep.subr.bf16.mxu0 0
    %218 = vmatpush2.bf16.msra.mxu0 0
    %219 = vmatprep.mubr.bf16.mxu0 0
    %220 = vmatmul.mubr.bf16.gmra.mxu0 %v182
    %v221 = vpop.f32.mrf.mxu0
    %v222 = vadd.f32 %v166, %v221
    %v223 = vpop.f32.mrf.mxu0
    %v224 = vpop.f32.mrf.mxu0
    %v225 = vadd.f32 %v166, %v224
    %v226 = vpop.f32.mrf.mxu0
    %227 = vmatprep.mubr.bf16.mxu0 0
    %228 = vmatmul.mubr.bf16.gmra.mxu0 %v185
    %v229 = vpop.f32.mrf.mxu0
    %v230 = vadd.f32 %v166, %v229
    %v231 = vpop.f32.mrf.mxu0
    %v232 = vpop.f32.mrf.mxu0
    %v233 = vadd.f32 %v166, %v232
    %v234 = vpop.f32.mrf.mxu0
    %235 = vdwg.mxu0
    %v236 = vsel %vm180, %v151, 0.0
    %v237 = vsel %vm180, %v152, 0.0
    %v238 = vadd.f32 %v236, %v237
    %v239 = vrot.slane %v238, 4
    %v240 = vadd.f32 %v238, %v239
    %v241 = vrot.slane %v240, 2
    %v242 = vadd.f32 %v240, %v241
    %v243 = vrot.slane %v242, 1
    %v244 = vadd.f32 %v242, %v243
    %v245 = vsel %vm180, %v153, 0.0
    %v246 = vsel %vm180, %v154, 0.0
    %v247 = vadd.f32 %v245, %v246
    %v248 = vrot.slane %v247, 4
    %v249 = vadd.f32 %v247, %v248
    %v250 = vrot.slane %v249, 2
    %v251 = vadd.f32 %v249, %v250
    %v252 = vrot.slane %v251, 1
    %v253 = vadd.f32 %v251, %v252
    %v254 = vrcp.pop 16.0
    %v255 = vmul.f32 %v244, %v254
    %v256 = vmul.f32 %v253, %v254
    %v257 = vld [vmem:[%s5] sm:$0xf]
    %v258 = vld [vmem:[%s5 + $0x4] sm:$0xf]
    %v259 = vld [vmem:[%s5 + $0x8] sm:$0xf]
    %v260 = vld [vmem:[%s5 + $0xc] sm:$0xf]
    %v261 = vpack.c.bf16 %v255, %v255
    %v262 = vpack.c.bf16 %v256, %v256
    %v263 = vld [vmem:[%s6] sm:$0x1]
    %v265 = vlaneseq
    %v266 = vshrl.u32 %v265, 7
    %v267 = vsub.s32 0, %v266
    %v268 = vrot.slane %v263, %v267
    %v272 = vunpack.c.l.b16 %v261
    %v273 = vunpack.c.l.b16 %v262
    %vm274 = vcmask 1041409
    %v275 = vsel %vm274, %v273, %v272
    %v276 = vpack.c.b16 %v275, %v275
    %v281 = vunpack.c.l.b16 %v257
    %v282 = vunpack.c.l.b16 %v258
    %v283 = vunpack.c.l.b16 %v259
    %v284 = vunpack.c.l.b16 %v260
    %v285 = vpack.c.b16 %v282, %v281
    %v286 = vpack.c.b16 %v284, %v283
    %v290 = vsel %vm180, %v276, 0
    %292 = vmatprep.subr.bf16.mxu0 0
    %293 = vmatpush1.bf16.msra.mxu0 0
    %294 = vmatprep.subr.bf16.mxu0 0
    %295 = vmatpush1.bf16.msra.mxu0 0
    %296 = vmatprep.subr.bf16.mxu0 0
    %297 = vmatpush1.bf16.msra.mxu0 0
    %298 = vmatprep.subr.bf16.mxu0 0
    %299 = vmatpush1.bf16.msra.mxu0 0
    %300 = vmatprep.subr.bf16.mxu0 0
    %301 = vmatpush1.bf16.msra.mxu0 0
    %302 = vmatprep.subr.bf16.mxu0 0
    %303 = vmatpush1.bf16.msra.mxu0 0
    %304 = vmatprep.subr.bf16.mxu0 0
    %305 = vmatpush1.bf16.msra.mxu0 %v286
    %306 = vmatprep.subr.bf16.mxu0 0
    %307 = vmatpush1.bf16.msra.mxu0 %v285
    %308 = vmatprep.subr.bf16.mxu0 0
    %309 = vmatpush2.bf16.msra.mxu0 0
    %310 = vmatprep.subr.bf16.mxu0 0
    %311 = vmatpush2.bf16.msra.mxu0 0
    %312 = vmatprep.subr.bf16.mxu0 0
    %313 = vmatpush2.bf16.msra.mxu0 0
    %314 = vmatprep.subr.bf16.mxu0 0
    %315 = vmatpush2.bf16.msra.mxu0 0
    %316 = vmatprep.subr.bf16.mxu0 0
    %317 = vmatpush2.bf16.msra.mxu0 0
    %318 = vmatprep.subr.bf16.mxu0 0
    %319 = vmatpush2.bf16.msra.mxu0 0
    %320 = vmatprep.subr.bf16.mxu0 0
    %321 = vmatpush2.bf16.msra.mxu0 0
    %322 = vmatprep.subr.bf16.mxu0 0
    %323 = vmatpush2.bf16.msra.mxu0 0
    %324 = vmatprep.mubr.bf16.mxu0 0
    %325 = vmatmul.mubr.bf16.gmra.mxu0 %v290
    %v326 = vpop.f32.mrf.mxu0
    %v327 = vadd.f32 %v268, %v326
    %v328 = vpop.f32.mrf.mxu0
    %v329 = vpop.f32.mrf.mxu0
    %v330 = vpop.f32.mrf.mxu0
    %331 = vdwg.mxu0
    %vm332 = vcmask 254976
    %333 = vst.msk [vmem:[#allocation2] sm:$0x3] %vm332, %v327
    %v334 = vld [vmem:[%s9] sm:$0x1]
    %v335 = vlaneseq
    %v336 = vand.u32 %v335, 127
    %337 = vst [vmem:[#allocation7] sm:$0x3] 0.0
    %v338 = vld [vmem:[%s1] sm:$0x3]
    %339 = vset.pattern.permute.xlu0 0
    %340 = vperm.xlu0 %339, %v338
    %v341 = vpop.permute.xlu0 %340
    %vm342 = vcmp.eq.s32.totalorder %v336, %v341
    %v343 = vsel %vm342, 1, 0
    %v344 = vcvt.s32.f32 %v343
    %345 = vst [vmem:[#allocation3] sm:$0x3] %v344
    %v346 = vld [vmem:[#allocation2] sm:$0x3]
    %v347 = vld [vmem:[#allocation3] sm:$0x3]
    %v348 = vld [vmem:[%s12] sm:$0xf]
    %v349 = vld [vmem:[%s12 + $0x4] sm:$0xf]
    %v350 = vld [vmem:[%s12 + $0x8] sm:$0xf]
    %v351 = vld [vmem:[%s12 + $0xc] sm:$0xf]
    %v352 = vld [vmem:[%s12 + $0x10] sm:$0xf]
    %v353 = vld [vmem:[%s12 + $0x14] sm:$0xf]
    %v354 = vld [vmem:[%s12 + $0x18] sm:$0xf]
    %v355 = vld [vmem:[%s12 + $0x1c] sm:$0xf]
    %v356 = vld [vmem:[%s12 + $0x20] sm:$0xf]
    %v357 = vld [vmem:[%s12 + $0x24] sm:$0xf]
    %v358 = vld [vmem:[%s12 + $0x28] sm:$0xf]
    %v359 = vld [vmem:[%s12 + $0x2c] sm:$0xf]
    %v360 = vld [vmem:[%s12 + $0x30] sm:$0xf]
    %v361 = vld [vmem:[%s12 + $0x34] sm:$0xf]
    %v362 = vld [vmem:[%s12 + $0x38] sm:$0xf]
    %v363 = vld [vmem:[%s12 + $0x3c] sm:$0xf]
    %v364 = vpack.c.bf16 %v347, %v347
    %v381 = vunpack.c.l.b16 %v348
    %v382 = vunpack.c.l.b16 %v349
    %v383 = vunpack.c.l.b16 %v350
    %v384 = vunpack.c.l.b16 %v351
    %v385 = vunpack.c.l.b16 %v352
    %v386 = vunpack.c.l.b16 %v353
    %v387 = vunpack.c.l.b16 %v354
    %v388 = vunpack.c.l.b16 %v355
    %v389 = vunpack.c.l.b16 %v356
    %v390 = vunpack.c.l.b16 %v357
    %v391 = vunpack.c.l.b16 %v358
    %v392 = vunpack.c.l.b16 %v359
    %v393 = vunpack.c.l.b16 %v360
    %v394 = vunpack.c.l.b16 %v361
    %v395 = vunpack.c.l.b16 %v362
    %v396 = vunpack.c.l.b16 %v363
    %v397 = vpack.c.b16 %v382, %v381
    %v398 = vpack.c.b16 %v384, %v383
    %v399 = vpack.c.b16 %v386, %v385
    %v400 = vpack.c.b16 %v388, %v387
    %v401 = vpack.c.b16 %v390, %v389
    %v402 = vpack.c.b16 %v392, %v391
    %v403 = vpack.c.b16 %v394, %v393
    %v404 = vpack.c.b16 %v396, %v395
    %413 = vmatprep.subr.bf16.mxu0 0
    %414 = vmatpush1.bf16.msra.mxu0 %v404
    %415 = vmatprep.subr.bf16.mxu0 0
    %416 = vmatpush1.bf16.msra.mxu0 %v403
    %417 = vmatprep.subr.bf16.mxu0 0
    %418 = vmatpush1.bf16.msra.mxu0 %v402
    %419 = vmatprep.subr.bf16.mxu0 0
    %420 = vmatpush1.bf16.msra.mxu0 %v401
    %421 = vmatprep.subr.bf16.mxu0 0
    %422 = vmatpush1.bf16.msra.mxu0 %v400
    %423 = vmatprep.subr.bf16.mxu0 0
    %424 = vmatpush1.bf16.msra.mxu0 %v399
    %425 = vmatprep.subr.bf16.mxu0 0
    %426 = vmatpush1.bf16.msra.mxu0 %v398
    %427 = vmatprep.subr.bf16.mxu0 0
    %428 = vmatpush1.bf16.msra.mxu0 %v397
    %429 = vmatprep.subr.bf16.mxu0 0
    %430 = vmatpush2.bf16.msra.mxu0 0
    %431 = vmatprep.subr.bf16.mxu0 0
    %432 = vmatpush2.bf16.msra.mxu0 0
    %433 = vmatprep.subr.bf16.mxu0 0
    %434 = vmatpush2.bf16.msra.mxu0 0
    %435 = vmatprep.subr.bf16.mxu0 0
    %436 = vmatpush2.bf16.msra.mxu0 0
    %437 = vmatprep.subr.bf16.mxu0 0
    %438 = vmatpush2.bf16.msra.mxu0 0
    %439 = vmatprep.subr.bf16.mxu0 0
    %440 = vmatpush2.bf16.msra.mxu0 0
    %441 = vmatprep.subr.bf16.mxu0 0
    %442 = vmatpush2.bf16.msra.mxu0 0
    %443 = vmatprep.subr.bf16.mxu0 0
    %444 = vmatpush2.bf16.msra.mxu0 0
    %445 = vmatprep.mubr.bf16.mxu0 0
    %446 = vmatmul.mubr.bf16.gmra.mxu0 %v364
    %v447 = vpop.f32.mrf.mxu0
    %v448 = vadd.f32 0.0, %v447
    %v449 = vpop.f32.mrf.mxu0
    %v450 = vpop.f32.mrf.mxu0
    %v451 = vpop.f32.mrf.mxu0
    %452 = vdwg.mxu0
    %v453 = vld [vmem:[%s10] sm:$0xf]
    %v454 = vld [vmem:[%s10 + $0x4] sm:$0xf]
    %v455 = vld [vmem:[%s10 + $0x8] sm:$0xf]
    %v456 = vld [vmem:[%s10 + $0xc] sm:$0xf]
    %v457 = vpack.c.bf16 %v346, %v346
    %v458 = vld [vmem:[%s11] sm:$0x1]
    %v460 = vlaneseq
    %v461 = vshrl.u32 %v460, 7
    %v462 = vsub.s32 0, %v461
    %v463 = vrot.slane %v458, %v462
    %v469 = vunpack.c.l.b16 %v453
    %v470 = vunpack.c.l.b16 %v454
    %v471 = vunpack.c.l.b16 %v455
    %v472 = vunpack.c.l.b16 %v456
    %v473 = vpack.c.b16 %v470, %v469
    %v474 = vpack.c.b16 %v472, %v471
    %v478 = vsel %vm180, %v457, 0
    %480 = vmatprep.subr.bf16.mxu0 0
    %481 = vmatpush1.bf16.msra.mxu0 0
    %482 = vmatprep.subr.bf16.mxu0 0
    %483 = vmatpush1.bf16.msra.mxu0 0
    %484 = vmatprep.subr.bf16.mxu0 0
    %485 = vmatpush1.bf16.msra.mxu0 0
    %486 = vmatprep.subr.bf16.mxu0 0
    %487 = vmatpush1.bf16.msra.mxu0 0
    %488 = vmatprep.subr.bf16.mxu0 0
    %489 = vmatpush1.bf16.msra.mxu0 0
    %490 = vmatprep.subr.bf16.mxu0 0
    %491 = vmatpush1.bf16.msra.mxu0 0
    %492 = vmatprep.subr.bf16.mxu0 0
    %493 = vmatpush1.bf16.msra.mxu0 %v474
    %494 = vmatprep.subr.bf16.mxu0 0
    %495 = vmatpush1.bf16.msra.mxu0 %v473
    %496 = vmatprep.subr.bf16.mxu0 0
    %497 = vmatpush2.bf16.msra.mxu0 0
    %498 = vmatprep.subr.bf16.mxu0 0
    %499 = vmatpush2.bf16.msra.mxu0 0
    %500 = vmatprep.subr.bf16.mxu0 0
    %501 = vmatpush2.bf16.msra.mxu0 0
    %502 = vmatprep.subr.bf16.mxu0 0
    %503 = vmatpush2.bf16.msra.mxu0 0
    %504 = vmatprep.subr.bf16.mxu0 0
    %505 = vmatpush2.bf16.msra.mxu0 0
    %506 = vmatprep.subr.bf16.mxu0 0
    %507 = vmatpush2.bf16.msra.mxu0 0
    %508 = vmatprep.subr.bf16.mxu0 0
    %509 = vmatpush2.bf16.msra.mxu0 0
    %510 = vmatprep.subr.bf16.mxu0 0
    %511 = vmatpush2.bf16.msra.mxu0 0
    %512 = vmatprep.mubr.bf16.mxu0 0
    %513 = vmatmul.mubr.bf16.gmra.mxu0 %v478
    %v514 = vpop.f32.mrf.mxu0
    %v515 = vadd.f32 %v463, %v514
    %v516 = vpop.f32.mrf.mxu0
    %v517 = vpop.f32.mrf.mxu0
    %v518 = vpop.f32.mrf.mxu0
    %519 = vdwg.mxu0
    %v522 = vunpack.c.l.s4 1966171168
    %v523 = vunpack.c.0.s8 %v522
    %v524 = vlaneseq
    %v525 = vshrl.u32 %v524, 7
    %v526 = vsub.s32 %v523, %v525
    %v527 = vrot.slane %v515, %v526
    %v528 = vcombine.high %v527, %v527
    %v530 = vunpack.c.l.s4 1966171168
    %v531 = vunpack.c.0.s8 %v530
    %v532 = vlaneseq
    %v533 = vshrl.u32 %v532, 7
    %v534 = vsub.s32 %v531, %v533
    %v535 = vrot.slane %v527, %v534
    %v537 = vunpack.c.l.s4 1966171168
    %v538 = vunpack.c.0.s8 %v537
    %v539 = vlaneseq
    %v540 = vshrl.u32 %v539, 7
    %v541 = vsub.s32 %v538, %v540
    %v542 = vrot.slane %v528, %v541
    %v543 = vlaneseq
    %v544 = vshrl.u32 %v543, 7
    %v545 = vsub.s32 0, %v544
    %v546 = vrot.slane %v535, %v545
    %v547 = vlaneseq
    %v548 = vshrl.u32 %v547, 7
    %v549 = vsub.s32 0, %v548
    %v550 = vrot.slane %v542, %v549
    %v553 = vadd.f32 %v222, %v546
    %v554 = vadd.f32 %v225, %v546
    %v555 = vadd.f32 %v230, %v550
    %v556 = vadd.f32 %v233, %v550
    %v557 = vtanh.pop %v553
    %v558 = vtanh.pop %v554
    %v559 = vtanh.pop %v555
    %v560 = vtanh.pop %v556
    %v562 = vlaneseq
    %v563 = vshrl.u32 %v562, 7
    %v564 = vsub.s32 0, %v563
    %v565 = vrot.slane %v334, %v564
    %v567 = vmul.f32 %v557, %v565
    %v568 = vmul.f32 %v558, %v565
    %v569 = vmul.f32 %v559, %v565
    %v570 = vmul.f32 %v560, %v565
    %v571 = vsel %vm180, %v567, 0.0
    %572 = vadd.xlane.f32.xlu0 %v571
    %v573 = vpop.xlane.xlu0 %572
    %v574 = vsel %vm180, %v568, 0.0
    %575 = vadd.xlane.f32.xlu0 %v574
    %v576 = vpop.xlane.xlu0 %575
    %v577 = vsel %vm180, %v569, 0.0
    %578 = vadd.xlane.f32.xlu0 %v577
    %v579 = vpop.xlane.xlu0 %578
    %v580 = vsel %vm180, %v570, 0.0
    %581 = vadd.xlane.f32.xlu0 %v580
    %v582 = vpop.xlane.xlu0 %581
    %v587 = vlaneseq
    %v588 = vshrl.u32 %v587, 7
    %v589 = vsub.s32 %v336, %v588
    %v590 = vrot.slane %v573, %v589
    %v591 = vadd.s32 %v336, 4294967288
    %v592 = vlaneseq
    %v593 = vshrl.u32 %v592, 7
    %v594 = vsub.s32 %v591, %v593
    %v595 = vrot.slane %v576, %v594
    %vm596 = vcmask 130112
    %v597 = vsel %vm596, %v595, %v590
    %v598 = vlaneseq
    %v599 = vshrl.u32 %v598, 7
    %v600 = vsub.s32 %v336, %v599
    %v601 = vrot.slane %v579, %v600
    %v602 = vlaneseq
    %v603 = vshrl.u32 %v602, 7
    %v604 = vsub.s32 %v591, %v603
    %v605 = vrot.slane %v582, %v604
    %v606 = vsel %vm596, %v605, %v601
    %v607 = vsel %vm274, %v606, %v597
    %vm609 = vcmask 123904
    %v610 = vsel %vm609, %v607, -inf
    %611 = vmax.xlane.f32.xlu0 %v610
    %v612 = vpop.xlane.xlu0 %611
    %v614 = vlaneseq
    %v615 = vshrl.u32 %v614, 7
    %v616 = vsub.s32 0, %v615
    %v617 = vrot.slane %v612, %v616
    %v618 = vlaneseq
    %v619 = vshrl.u32 %v618, 7
    %v620 = vsub.s32 1, %v619
    %v621 = vrot.slane %v612, %v620
    %v624 = vsub.f32 %v573, %v617
    %v625 = vsub.f32 %v576, %v617
    %v626 = vsub.f32 %v579, %v621
    %v627 = vsub.f32 %v582, %v621
    %v628 = vmul.f32 %v624, 1.442695
    %v629 = vpow.pop %v628
    %v630 = vmul.f32 %v625, 1.442695
    %v631 = vpow.pop %v630
    %v632 = vmul.f32 %v626, 1.442695
    %v633 = vpow.pop %v632
    %v634 = vmul.f32 %v627, 1.442695
    %v635 = vpow.pop %v634
    %640 = vset.pattern.permute.xlu0 0
    %641 = vperm.xlu0 %640, %v629
    %v642 = vpop.permute.xlu0 %641
    %643 = vset.pattern.permute.xlu0 0
    %644 = vperm.xlu0 %643, %v631
    %v645 = vpop.permute.xlu0 %644
    %646 = vset.pattern.permute.xlu0 0
    %647 = vperm.xlu0 %646, %v633
    %v648 = vpop.permute.xlu0 %647
    %649 = vset.pattern.permute.xlu0 0
    %650 = vperm.xlu0 %649, %v635
    %v651 = vpop.permute.xlu0 %650
    %v652 = vlaneseq
    %v653 = vshrl.u32 %v652, 7
    %v654 = vsub.s32 %v336, %v653
    %v655 = vrot.slane %v642, %v654
    %v656 = vlaneseq
    %v657 = vshrl.u32 %v656, 7
    %v658 = vsub.s32 %v591, %v657
    %v659 = vrot.slane %v645, %v658
    %v660 = vsel %vm596, %v659, %v655
    %v661 = vlaneseq
    %v662 = vshrl.u32 %v661, 7
    %v663 = vsub.s32 %v336, %v662
    %v664 = vrot.slane %v648, %v663
    %v665 = vlaneseq
    %v666 = vshrl.u32 %v665, 7
    %v667 = vsub.s32 %v591, %v666
    %v668 = vrot.slane %v651, %v667
    %v669 = vsel %vm596, %v668, %v664
    %v670 = vsel %vm274, %v669, %v660
    %v672 = vsel %vm609, %v670, 0.0
    %673 = vadd.xlane.f32.xlu0 %v672
    %v674 = vpop.xlane.xlu0 %673
    %v675 = vrcp.pop %v674
    %v677 = vlaneseq
    %v678 = vshrl.u32 %v677, 7
    %v679 = vsub.s32 0, %v678
    %v680 = vrot.slane %v675, %v679
    %v681 = vlaneseq
    %v682 = vshrl.u32 %v681, 7
    %v683 = vsub.s32 1, %v682
    %v684 = vrot.slane %v675, %v683
    %v687 = vmul.f32 %v629, %v680
    %v688 = vmul.f32 %v631, %v680
    %v689 = vmul.f32 %v633, %v684
    %v690 = vmul.f32 %v635, %v684
    %692 = vset.pattern.permute.xlu0 0
    %693 = vperm.xlu0 %692, %v687
    %v694 = vpop.permute.xlu0 %693
    %697 = vset.pattern.permute.xlu0 0
    %698 = vperm.xlu0 %697, %v688
    %v699 = vpop.permute.xlu0 %698
    %702 = vset.pattern.permute.xlu0 0
    %703 = vperm.xlu0 %702, %v689
    %v704 = vpop.permute.xlu0 %703
    %707 = vset.pattern.permute.xlu0 0
    %708 = vperm.xlu0 %707, %v690
    %v709 = vpop.permute.xlu0 %708
    %v711 = vmul.f32 %v694, %v151
    %v712 = vmul.f32 %v699, %v152
    %v713 = vmul.f32 %v704, %v153
    %v714 = vmul.f32 %v709, %v154
    %v715 = vsel %vm180, %v711, 0.0
    %v716 = vsel %vm180, %v712, 0.0
    %v717 = vadd.f32 %v715, %v716
    %v718 = vrot.slane %v717, 4
    %v719 = vadd.f32 %v717, %v718
    %v720 = vrot.slane %v719, 2
    %v721 = vadd.f32 %v719, %v720
    %v722 = vrot.slane %v721, 1
    %v723 = vadd.f32 %v721, %v722
    %v724 = vsel %vm180, %v713, 0.0
    %v725 = vsel %vm180, %v714, 0.0
    %v726 = vadd.f32 %v724, %v725
    %v727 = vrot.slane %v726, 4
    %v728 = vadd.f32 %v726, %v727
    %v729 = vrot.slane %v728, 2
    %v730 = vadd.f32 %v728, %v729
    %v731 = vrot.slane %v730, 1
    %v732 = vadd.f32 %v730, %v731
    %v733 = vld [vmem:[%s13] sm:$0xff]
    %v734 = vld [vmem:[%s13 + $0x8] sm:$0xff]
    %v735 = vpack.c.bf16 %v448, %v448
    %v738 = vunpack.c.l.b16 %v733
    %v739 = vunpack.c.h.b16 %v733
    %v740 = vunpack.c.l.b16 %v734
    %v741 = vunpack.c.h.b16 %v734
    %v742 = vpack.c.b16 %v740, %v738
    %v743 = vpack.c.b16 %v741, %v739
    %vm746 = vcmask 130048
    %v748 = vsel %vm746, %v735, 0
    %750 = vmatprep.subr.bf16.mxu0 0
    %751 = vmatpush1.bf16.msra.mxu0 0
    %752 = vmatprep.subr.bf16.mxu0 0
    %753 = vmatpush1.bf16.msra.mxu0 0
    %754 = vmatprep.subr.bf16.mxu0 0
    %755 = vmatpush1.bf16.msra.mxu0 0
    %756 = vmatprep.subr.bf16.mxu0 0
    %757 = vmatpush1.bf16.msra.mxu0 0
    %758 = vmatprep.subr.bf16.mxu0 0
    %759 = vmatpush1.bf16.msra.mxu0 0
    %760 = vmatprep.subr.bf16.mxu0 0
    %761 = vmatpush1.bf16.msra.mxu0 0
    %762 = vmatprep.subr.bf16.mxu0 0
    %763 = vmatpush1.bf16.msra.mxu0 0
    %764 = vmatprep.subr.bf16.mxu0 %v743
    %765 = vmatpush1.bf16.msra.mxu0 %v742
    %766 = vmatprep.subr.bf16.mxu0 0
    %767 = vmatpush2.bf16.msra.mxu0 0
    %768 = vmatprep.subr.bf16.mxu0 0
    %769 = vmatpush2.bf16.msra.mxu0 0
    %770 = vmatprep.subr.bf16.mxu0 0
    %771 = vmatpush2.bf16.msra.mxu0 0
    %772 = vmatprep.subr.bf16.mxu0 0
    %773 = vmatpush2.bf16.msra.mxu0 0
    %774 = vmatprep.subr.bf16.mxu0 0
    %775 = vmatpush2.bf16.msra.mxu0 0
    %776 = vmatprep.subr.bf16.mxu0 0
    %777 = vmatpush2.bf16.msra.mxu0 0
    %778 = vmatprep.subr.bf16.mxu0 0
    %779 = vmatpush2.bf16.msra.mxu0 0
    %780 = vmatprep.subr.bf16.mxu0 0
    %781 = vmatpush2.bf16.msra.mxu0 0
    %782 = vmatprep.mubr.bf16.mxu0 0
    %783 = vmatmul.mubr.bf16.gmra.mxu0 %v748
    %v784 = vpop.f32.mrf.mxu0
    %v785 = vadd.f32 0.0, %v784
    %v786 = vpop.f32.mrf.mxu0
    %v787 = vadd.f32 0.0, %v786
    %v788 = vpop.f32.mrf.mxu0
    %v789 = vpop.f32.mrf.mxu0
    %790 = vdwg.mxu0
    %v791 = vld [vmem:[%s14] sm:$0xff]
    %v792 = vld [vmem:[%s14 + $0x8] sm:$0xff]
    %v793 = vld [vmem:[%s14 + $0x10] sm:$0xff]
    %v794 = vld [vmem:[%s14 + $0x18] sm:$0xff]
    %v795 = vpack.c.bf16 %v723, %v723
    %v796 = vpack.c.bf16 %v732, %v732
    %v799 = vunpack.c.l.b16 %v795
    %v800 = vunpack.c.l.b16 %v796
    %v801 = vsel %vm274, %v800, %v799
    %v802 = vpack.c.b16 %v801, %v801
    %v807 = vunpack.c.l.b16 %v791
    %v808 = vunpack.c.h.b16 %v791
    %v809 = vunpack.c.l.b16 %v792
    %v810 = vunpack.c.h.b16 %v792
    %v811 = vunpack.c.l.b16 %v793
    %v812 = vunpack.c.h.b16 %v793
    %v813 = vunpack.c.l.b16 %v794
    %v814 = vunpack.c.h.b16 %v794
    %v815 = vpack.c.b16 %v809, %v807
    %v816 = vpack.c.b16 %v810, %v808
    %v817 = vpack.c.b16 %v813, %v811
    %v818 = vpack.c.b16 %v814, %v812
    %v824 = vsel %vm180, %v802, 0
    %826 = vmatprep.subr.bf16.mxu0 0
    %827 = vmatpush1.bf16.msra.mxu0 0
    %828 = vmatprep.subr.bf16.mxu0 0
    %829 = vmatpush1.bf16.msra.mxu0 0
    %830 = vmatprep.subr.bf16.mxu0 0
    %831 = vmatpush1.bf16.msra.mxu0 0
    %832 = vmatprep.subr.bf16.mxu0 0
    %833 = vmatpush1.bf16.msra.mxu0 0
    %834 = vmatprep.subr.bf16.mxu0 0
    %835 = vmatpush1.bf16.msra.mxu0 0
    %836 = vmatprep.subr.bf16.mxu0 0
    %837 = vmatpush1.bf16.msra.mxu0 0
    %838 = vmatprep.subr.bf16.mxu0 %v818
    %839 = vmatpush1.bf16.msra.mxu0 %v817
    %840 = vmatprep.subr.bf16.mxu0 %v816
    %841 = vmatpush1.bf16.msra.mxu0 %v815
    %842 = vmatprep.subr.bf16.mxu0 0
    %843 = vmatpush2.bf16.msra.mxu0 0
    %844 = vmatprep.subr.bf16.mxu0 0
    %845 = vmatpush2.bf16.msra.mxu0 0
    %846 = vmatprep.subr.bf16.mxu0 0
    %847 = vmatpush2.bf16.msra.mxu0 0
    %848 = vmatprep.subr.bf16.mxu0 0
    %849 = vmatpush2.bf16.msra.mxu0 0
    %850 = vmatprep.subr.bf16.mxu0 0
    %851 = vmatpush2.bf16.msra.mxu0 0
    %852 = vmatprep.subr.bf16.mxu0 0
    %853 = vmatpush2.bf16.msra.mxu0 0
    %854 = vmatprep.subr.bf16.mxu0 0
    %855 = vmatpush2.bf16.msra.mxu0 0
    %856 = vmatprep.subr.bf16.mxu0 0
    %857 = vmatpush2.bf16.msra.mxu0 0
    %858 = vmatprep.mubr.bf16.mxu0 0
    %859 = vmatmul.mubr.bf16.gmra.mxu0 %v824
    %v860 = vpop.f32.mrf.mxu0
    %v861 = vadd.f32 0.0, %v860
    %v862 = vpop.f32.mrf.mxu0
    %v863 = vadd.f32 0.0, %v862
    %v864 = vpop.f32.mrf.mxu0
    %v865 = vpop.f32.mrf.mxu0
    %866 = vdwg.mxu0
    %v867 = vadd.f32 %v787, %v863
    %v868 = vld [vmem:[%s15] sm:$0x1]
    %v870 = vlaneseq
    %v871 = vshrl.u32 %v870, 7
    %v872 = vsub.s32 0, %v871
    %v873 = vrot.slane %v868, %v872
    %v875 = vadd.f32 %v867, %v873
    %876 = vrot.lane.b32.xlu0 %v515, 96
    %v877 = vpop.permute.xlu0 %876
    %v879 = vadd.f32 %v875, %v877
    %v880 = vxor.u32 %v879, 2147483648
    %v881 = vmul.f32 %v880, 1.442695
    %v882 = vpow.pop %v881
    %v883 = vadd.f32 %v882, 1.0
    %v884 = vrcp.pop %v883
    %v885 = vmul.f32 1.0, %v884
    %886 = vrot.lane.b32.xlu0 %v515, 32
    %v887 = vpop.permute.xlu0 %886
    %v889 = vmul.f32 %v885, %v887
    %891 = vrot.lane.b32.xlu0 %v889, 64
    %v892 = vpop.permute.xlu0 %891
    %v894 = vadd.f32 %v875, %v892
    %v895 = vtanh.pop %v894
    %v896 = vsub.f32 1.0, %v885
    %898 = vrot.lane.b32.xlu0 %v895, 96
    %v899 = vpop.permute.xlu0 %898
    %v901 = vmul.f32 %v896, %v899
    %903 = vrot.lane.b32.xlu0 %v346, 32
    %v904 = vpop.permute.xlu0 %903
    %v906 = vmul.f32 %v885, %v904
    %v907 = vadd.f32 %v901, %v906
    %v908 = vld [vmem:[%s16] sm:$0xf]
    %v909 = vld [vmem:[%s16 + $0x4] sm:$0xf]
    %v910 = vld [vmem:[%s16 + $0x8] sm:$0xf]
    %v911 = vld [vmem:[%s16 + $0xc] sm:$0xf]
    %v912 = vpack.c.bf16 %v907, %v907
    %914 = vrot.lane.b32.xlu0 %v912, 96
    %v915 = vpop.permute.xlu0 %914
    %v920 = vunpack.c.l.b16 %v908
    %v921 = vunpack.c.l.b16 %v909
    %v922 = vunpack.c.l.b16 %v910
    %v923 = vunpack.c.l.b16 %v911
    %v924 = vpack.c.b16 %v921, %v920
    %v925 = vpack.c.b16 %v923, %v922
    %v929 = vsel %vm180, %v915, 0
    %931 = vmatprep.subr.bf16.mxu0 0
    %932 = vmatpush1.bf16.msra.mxu0 0
    %933 = vmatprep.subr.bf16.mxu0 0
    %934 = vmatpush1.bf16.msra.mxu0 0
    %935 = vmatprep.subr.bf16.mxu0 0
    %936 = vmatpush1.bf16.msra.mxu0 0
    %937 = vmatprep.subr.bf16.mxu0 0
    %938 = vmatpush1.bf16.msra.mxu0 0
    %939 = vmatprep.subr.bf16.mxu0 0
    %940 = vmatpush1.bf16.msra.mxu0 0
    %941 = vmatprep.subr.bf16.mxu0 0
    %942 = vmatpush1.bf16.msra.mxu0 0
    %943 = vmatprep.subr.bf16.mxu0 0
    %944 = vmatpush1.bf16.msra.mxu0 %v925
    %945 = vmatprep.subr.bf16.mxu0 0
    %946 = vmatpush1.bf16.msra.mxu0 %v924
    %947 = vmatprep.subr.bf16.mxu0 0
    %948 = vmatpush2.bf16.msra.mxu0 0
    %949 = vmatprep.subr.bf16.mxu0 0
    %950 = vmatpush2.bf16.msra.mxu0 0
    %951 = vmatprep.subr.bf16.mxu0 0
    %952 = vmatpush2.bf16.msra.mxu0 0
    %953 = vmatprep.subr.bf16.mxu0 0
    %954 = vmatpush2.bf16.msra.mxu0 0
    %955 = vmatprep.subr.bf16.mxu0 0
    %956 = vmatpush2.bf16.msra.mxu0 0
    %957 = vmatprep.subr.bf16.mxu0 0
    %958 = vmatpush2.bf16.msra.mxu0 0
    %959 = vmatprep.subr.bf16.mxu0 0
    %960 = vmatpush2.bf16.msra.mxu0 0
    %961 = vmatprep.subr.bf16.mxu0 0
    %962 = vmatpush2.bf16.msra.mxu0 0
    %963 = vmatprep.mubr.bf16.mxu0 0
    %964 = vmatmul.mubr.bf16.gmra.mxu0 %v929
    %v965 = vpop.f32.mrf.mxu0
    %v966 = vadd.f32 %v785, %v965
    %v967 = vpop.f32.mrf.mxu0
    %v968 = vpop.f32.mrf.mxu0
    %v969 = vpop.f32.mrf.mxu0
    %970 = vdwg.mxu0
    %v971 = vadd.f32 %v966, %v861
    %v972 = vld [vmem:[%s17] sm:$0x1]
    %v974 = vlaneseq
    %v975 = vshrl.u32 %v974, 7
    %v976 = vsub.s32 0, %v975
    %v977 = vrot.slane %v972, %v976
    %v979 = vadd.f32 %v971, %v977
    %s980 = scalar_lea.vmem [#allocation7], 2
    %981 = vst [vmem:[%s980] sm:$0x3] %v979
    %983 = vrot.lane.b32.xlu0 %v907, 96
    %v984 = vpop.permute.xlu0 %983
    %986 = vst.msk [vmem:[#allocation2] sm:$0x3] %vm332, %v984
    %s987 = sld [smem:[#allocation4 + $0x1]]
    %p988 = scmp.eq.s32.totalorder %s987, 1
    // Predicated region
    $region78: #{seq2seq_forward.1} parent=1 // pred_check
      %p989 = pneg %p988
    $region79: #{seq2seq_forward.1} parent=1 // pred_check_branch
      %991 = sbr.rel (%p989) target = $region81
    $region80: #{seq2seq_forward.1} parent=1 // pred_region
      %s992 = scalar_lea.vmem %s1, 2
      %v993 = vld [vmem:[%s992] sm:$0x3]
      %994 = vset.pattern.permute.xlu0 0
      %995 = vperm.xlu0 %994, %v993
      %v996 = vpop.permute.xlu0 %995
      %vm997 = vcmp.eq.s32.totalorder %v336, %v996
      %v998 = vsel %vm997, 1, 0
      %v999 = vcvt.s32.f32 %v998
      %1000 = vst [vmem:[#allocation3] sm:$0x3] %v999
    $region81: #{seq2seq_forward.1} parent=1 // pred_fallthru
      _
    %p1001 = scmp.eq.s32.totalorder %s987, 0
    // Predicated region
    $region82: #{seq2seq_forward.1} parent=1 // pred_check
      %p1002 = pneg %p1001
    $region83: #{seq2seq_forward.1} parent=1 // pred_check_branch
      %1004 = sbr.rel (%p1002) target = $region85
    $region84: #{seq2seq_forward.1} parent=1 // pred_region
      %v1005 = vsel %vm96, %v979, -inf
      %1006 = vmax.xlane.f32.xlu0 %v1005
      %v1007 = vpop.xlane.xlu0 %1006
      %vm1008 = vcmp.eq.f32.partialorder %v979, %v1007
      %v1009 = vsel %vm1008, %v336, 128
      %v1010 = vsel %vm96, %v1009, 2147483647
      %v1011 = vand.u32 %v1010, 65535
      %v1012 = vshra.s32 %v1010, 16
      %v1013 = vcvt.s32.f32 %v1011
      %v1014 = vcvt.s32.f32 %v1012
      %1015 = vmin.xlane.f32.xlu0 %v1014
      %v1016 = vpop.xlane.xlu0 %1015
      %vm1017 = vcmp.eq.f32.partialorder %v1014, %v1016
      %v1018 = vsel %vm1017, %v1013, inf
      %1019 = vmin.xlane.f32.xlu0 %v1018
      %v1020 = vpop.xlane.xlu0 %1019
      %v1021 = vcvt.f32.s32 %v1020
      %v1022 = vcvt.f32.s32 %v1016
      %v1023 = vshll.u32 %v1022, 16
      %v1024 = vadd.s32 %v1023, %v1021
      %vm1025 = vcmp.eq.s32.totalorder %v336, %v1024
      %v1026 = vsel %vm1025, 1, 0
      %v1027 = vcvt.s32.f32 %v1026
      %1028 = vst [vmem:[#allocation3] sm:$0x3] %v1027
    $region85: #{seq2seq_forward.1} parent=1 // pred_fallthru
      _
    %v1029 = vld [vmem:[#allocation2] sm:$0x3]
    %v1030 = vld [vmem:[#allocation3] sm:$0x3]
    %v1031 = vld [vmem:[%s12] sm:$0xf]
    %v1032 = vld [vmem:[%s12 + $0x4] sm:$0xf]
    %v1033 = vld [vmem:[%s12 + $0x8] sm:$0xf]
    %v1034 = vld [vmem:[%s12 + $0xc] sm:$0xf]
    %v1035 = vld [vmem:[%s12 + $0x10] sm:$0xf]
    %v1036 = vld [vmem:[%s12 + $0x14] sm:$0xf]
    %v1037 = vld [vmem:[%s12 + $0x18] sm:$0xf]
    %v1038 = vld [vmem:[%s12 + $0x1c] sm:$0xf]
    %v1039 = vld [vmem:[%s12 + $0x20] sm:$0xf]
    %v1040 = vld [vmem:[%s12 + $0x24] sm:$0xf]
    %v1041 = vld [vmem:[%s12 + $0x28] sm:$0xf]
    %v1042 = vld [vmem:[%s12 + $0x2c] sm:$0xf]
    %v1043 = vld [vmem:[%s12 + $0x30] sm:$0xf]
    %v1044 = vld [vmem:[%s12 + $0x34] sm:$0xf]
    %v1045 = vld [vmem:[%s12 + $0x38] sm:$0xf]
    %v1046 = vld [vmem:[%s12 + $0x3c] sm:$0xf]
    %v1047 = vpack.c.bf16 %v1030, %v1030
    %v1064 = vunpack.c.l.b16 %v1031
    %v1065 = vunpack.c.l.b16 %v1032
    %v1066 = vunpack.c.l.b16 %v1033
    %v1067 = vunpack.c.l.b16 %v1034
    %v1068 = vunpack.c.l.b16 %v1035
    %v1069 = vunpack.c.l.b16 %v1036
    %v1070 = vunpack.c.l.b16 %v1037
    %v1071 = vunpack.c.l.b16 %v1038
    %v1072 = vunpack.c.l.b16 %v1039
    %v1073 = vunpack.c.l.b16 %v1040
    %v1074 = vunpack.c.l.b16 %v1041
    %v1075 = vunpack.c.l.b16 %v1042
    %v1076 = vunpack.c.l.b16 %v1043
    %v1077 = vunpack.c.l.b16 %v1044
    %v1078 = vunpack.c.l.b16 %v1045
    %v1079 = vunpack.c.l.b16 %v1046
    %v1080 = vpack.c.b16 %v1065, %v1064
    %v1081 = vpack.c.b16 %v1067, %v1066
    %v1082 = vpack.c.b16 %v1069, %v1068
    %v1083 = vpack.c.b16 %v1071, %v1070
    %v1084 = vpack.c.b16 %v1073, %v1072
    %v1085 = vpack.c.b16 %v1075, %v1074
    %v1086 = vpack.c.b16 %v1077, %v1076
    %v1087 = vpack.c.b16 %v1079, %v1078
    %1096 = vmatprep.subr.bf16.mxu0 0
    %1097 = vmatpush1.bf16.msra.mxu0 %v1087
    %1098 = vmatprep.subr.bf16.mxu0 0
    %1099 = vmatpush1.bf16.msra.mxu0 %v1086
    %1100 = vmatprep.subr.bf16.mxu0 0
    %1101 = vmatpush1.bf16.msra.mxu0 %v1085
    %1102 = vmatprep.subr.bf16.mxu0 0
    %1103 = vmatpush1.bf16.msra.mxu0 %v1084
    %1104 = vmatprep.subr.bf16.mxu0 0
    %1105 = vmatpush1.bf16.msra.mxu0 %v1083
    %1106 = vmatprep.subr.bf16.mxu0 0
    %1107 = vmatpush1.bf16.msra.mxu0 %v1082
    %1108 = vmatprep.subr.bf16.mxu0 0
    %1109 = vmatpush1.bf16.msra.mxu0 %v1081
    %1110 = vmatprep.subr.bf16.mxu0 0
    %1111 = vmatpush1.bf16.msra.mxu0 %v1080
    %1112 = vmatprep.subr.bf16.mxu0 0
    %1113 = vmatpush2.bf16.msra.mxu0 0
    %1114 = vmatprep.subr.bf16.mxu0 0
    %1115 = vmatpush2.bf16.msra.mxu0 0
    %1116 = vmatprep.subr.bf16.mxu0 0
    %1117 = vmatpush2.bf16.msra.mxu0 0
    %1118 = vmatprep.subr.bf16.mxu0 0
    %1119 = vmatpush2.bf16.msra.mxu0 0
    %1120 = vmatprep.subr.bf16.mxu0 0
    %1121 = vmatpush2.bf16.msra.mxu0 0
    %1122 = vmatprep.subr.bf16.mxu0 0
    %1123 = vmatpush2.bf16.msra.mxu0 0
    %1124 = vmatprep.subr.bf16.mxu0 0
    %1125 = vmatpush2.bf16.msra.mxu0 0
    %1126 = vmatprep.subr.bf16.mxu0 0
    %1127 = vmatpush2.bf16.msra.mxu0 0
    %1128 = vmatprep.mubr.bf16.mxu0 0
    %1129 = vmatmul.mubr.bf16.gmra.mxu0 %v1047
    %v1130 = vpop.f32.mrf.mxu0
    %v1131 = vadd.f32 0.0, %v1130
    %v1132 = vpop.f32.mrf.mxu0
    %v1133 = vpop.f32.mrf.mxu0
    %v1134 = vpop.f32.mrf.mxu0
    %1135 = vdwg.mxu0
    %v1136 = vld [vmem:[%s10] sm:$0xf]
    %v1137 = vld [vmem:[%s10 + $0x4] sm:$0xf]
    %v1138 = vld [vmem:[%s10 + $0x8] sm:$0xf]
    %v1139 = vld [vmem:[%s10 + $0xc] sm:$0xf]
    %v1140 = vpack.c.bf16 %v1029, %v1029
    %v1141 = vld [vmem:[%s11] sm:$0x1]
    %v1143 = vlaneseq
    %v1144 = vshrl.u32 %v1143, 7
    %v1145 = vsub.s32 0, %v1144
    %v1146 = vrot.slane %v1141, %v1145
    %v1152 = vunpack.c.l.b16 %v1136
    %v1153 = vunpack.c.l.b16 %v1137
    %v1154 = vunpack.c.l.b16 %v1138
    %v1155 = vunpack.c.l.b16 %v1139
    %v1156 = vpack.c.b16 %v1153, %v1152
    %v1157 = vpack.c.b16 %v1155, %v1154
    %v1161 = vsel %vm180, %v1140, 0
    %1163 = vmatprep.subr.bf16.mxu0 0
    %1164 = vmatpush1.bf16.msra.mxu0 0
    %1165 = vmatprep.subr.bf16.mxu0 0
    %1166 = vmatpush1.bf16.msra.mxu0 0
    %1167 = vmatprep.subr.bf16.mxu0 0
    %1168 = vmatpush1.bf16.msra.mxu0 0
    %1169 = vmatprep.subr.bf16.mxu0 0
    %1170 = vmatpush1.bf16.msra.mxu0 0
    %1171 = vmatprep.subr.bf16.mxu0 0
    %1172 = vmatpush1.bf16.msra.mxu0 0
    %1173 = vmatprep.subr.bf16.mxu0 0
    %1174 = vmatpush1.bf16.msra.mxu0 0
    %1175 = vmatprep.subr.bf16.mxu0 0
    %1176 = vmatpush1.bf16.msra.mxu0 %v1157
    %1177 = vmatprep.subr.bf16.mxu0 0
    %1178 = vmatpush1.bf16.msra.mxu0 %v1156
    %1179 = vmatprep.subr.bf16.mxu0 0
    %1180 = vmatpush2.bf16.msra.mxu0 0
    %1181 = vmatprep.subr.bf16.mxu0 0
    %1182 = vmatpush2.bf16.msra.mxu0 0
    %1183 = vmatprep.subr.bf16.mxu0 0
    %1184 = vmatpush2.bf16.msra.mxu0 0
    %1185 = vmatprep.subr.bf16.mxu0 0
    %1186 = vmatpush2.bf16.msra.mxu0 0
    %1187 = vmatprep.subr.bf16.mxu0 0
    %1188 = vmatpush2.bf16.msra.mxu0 0
    %1189 = vmatprep.subr.bf16.mxu0 0
    %1190 = vmatpush2.bf16.msra.mxu0 0
    %1191 = vmatprep.subr.bf16.mxu0 0
    %1192 = vmatpush2.bf16.msra.mxu0 0
    %1193 = vmatprep.subr.bf16.mxu0 0
    %1194 = vmatpush2.bf16.msra.mxu0 0
    %1195 = vmatprep.mubr.bf16.mxu0 0
    %1196 = vmatmul.mubr.bf16.gmra.mxu0 %v1161
    %v1197 = vpop.f32.mrf.mxu0
    %v1198 = vadd.f32 %v1146, %v1197
    %v1199 = vpop.f32.mrf.mxu0
    %v1200 = vpop.f32.mrf.mxu0
    %v1201 = vpop.f32.mrf.mxu0
    %1202 = vdwg.mxu0
    %v1205 = vunpack.c.l.s4 1966171168
    %v1206 = vunpack.c.0.s8 %v1205
    %v1207 = vlaneseq
    %v1208 = vshrl.u32 %v1207, 7
    %v1209 = vsub.s32 %v1206, %v1208
    %v1210 = vrot.slane %v1198, %v1209
    %v1211 = vcombine.high %v1210, %v1210
    %v1213 = vunpack.c.l.s4 1966171168
    %v1214 = vunpack.c.0.s8 %v1213
    %v1215 = vlaneseq
    %v1216 = vshrl.u32 %v1215, 7
    %v1217 = vsub.s32 %v1214, %v1216
    %v1218 = vrot.slane %v1210, %v1217
    %v1220 = vunpack.c.l.s4 1966171168
    %v1221 = vunpack.c.0.s8 %v1220
    %v1222 = vlaneseq
    %v1223 = vshrl.u32 %v1222, 7
    %v1224 = vsub.s32 %v1221, %v1223
    %v1225 = vrot.slane %v1211, %v1224
    %v1226 = vlaneseq
    %v1227 = vshrl.u32 %v1226, 7
    %v1228 = vsub.s32 0, %v1227
    %v1229 = vrot.slane %v1218, %v1228
    %v1230 = vlaneseq
    %v1231 = vshrl.u32 %v1230, 7
    %v1232 = vsub.s32 0, %v1231
    %v1233 = vrot.slane %v1225, %v1232
    %v1236 = vadd.f32 %v222, %v1229
    %v1237 = vadd.f32 %v225, %v1229
    %v1238 = vadd.f32 %v230, %v1233
    %v1239 = vadd.f32 %v233, %v1233
    %v1240 = vtanh.pop %v1236
    %v1241 = vtanh.pop %v1237
    %v1242 = vtanh.pop %v1238
    %v1243 = vtanh.pop %v1239
    %v1244 = vmul.f32 %v1240, %v565
    %v1245 = vmul.f32 %v1241, %v565
    %v1246 = vmul.f32 %v1242, %v565
    %v1247 = vmul.f32 %v1243, %v565
    %v1248 = vsel %vm180, %v1244, 0.0
    %1249 = vadd.xlane.f32.xlu0 %v1248
    %v1250 = vpop.xlane.xlu0 %1249
    %v1251 = vsel %vm180, %v1245, 0.0
    %1252 = vadd.xlane.f32.xlu0 %v1251
    %v1253 = vpop.xlane.xlu0 %1252
    %v1254 = vsel %vm180, %v1246, 0.0
    %1255 = vadd.xlane.f32.xlu0 %v1254
    %v1256 = vpop.xlane.xlu0 %1255
    %v1257 = vsel %vm180, %v1247, 0.0
    %1258 = vadd.xlane.f32.xlu0 %v1257
    %v1259 = vpop.xlane.xlu0 %1258
    %v1264 = vlaneseq
    %v1265 = vshrl.u32 %v1264, 7
    %v1266 = vsub.s32 %v336, %v1265
    %v1267 = vrot.slane %v1250, %v1266
    %v1268 = vlaneseq
    %v1269 = vshrl.u32 %v1268, 7
    %v1270 = vsub.s32 %v591, %v1269
    %v1271 = vrot.slane %v1253, %v1270
    %v1272 = vsel %vm596, %v1271, %v1267
    %v1273 = vlaneseq
    %v1274 = vshrl.u32 %v1273, 7
    %v1275 = vsub.s32 %v336, %v1274
    %v1276 = vrot.slane %v1256, %v1275
    %v1277 = vlaneseq
    %v1278 = vshrl.u32 %v1277, 7
    %v1279 = vsub.s32 %v591, %v1278
    %v1280 = vrot.slane %v1259, %v1279
    %v1281 = vsel %vm596, %v1280, %v1276
    %v1282 = vsel %vm274, %v1281, %v1272
    %v1284 = vsel %vm609, %v1282, -inf
    %1285 = vmax.xlane.f32.xlu0 %v1284
    %v1286 = vpop.xlane.xlu0 %1285
    %v1288 = vlaneseq
    %v1289 = vshrl.u32 %v1288, 7
    %v1290 = vsub.s32 0, %v1289
    %v1291 = vrot.slane %v1286, %v1290
    %v1292 = vlaneseq
    %v1293 = vshrl.u32 %v1292, 7
    %v1294 = vsub.s32 1, %v1293
    %v1295 = vrot.slane %v1286, %v1294
    %v1298 = vsub.f32 %v1250, %v1291
    %v1299 = vsub.f32 %v1253, %v1291
    %v1300 = vsub.f32 %v1256, %v1295
    %v1301 = vsub.f32 %v1259, %v1295
    %v1302 = vmul.f32 %v1298, 1.442695
    %v1303 = vpow.pop %v1302
    %v1304 = vmul.f32 %v1299, 1.442695
    %v1305 = vpow.pop %v1304
    %v1306 = vmul.f32 %v1300, 1.442695
    %v1307 = vpow.pop %v1306
    %v1308 = vmul.f32 %v1301, 1.442695
    %v1309 = vpow.pop %v1308
    %1314 = vset.pattern.permute.xlu0 0
    %1315 = vperm.xlu0 %1314, %v1303
    %v1316 = vpop.permute.xlu0 %1315
    %1317 = vset.pattern.permute.xlu0 0
    %1318 = vperm.xlu0 %1317, %v1305
    %v1319 = vpop.permute.xlu0 %1318
    %1320 = vset.pattern.permute.xlu0 0
    %1321 = vperm.xlu0 %1320, %v1307
    %v1322 = vpop.permute.xlu0 %1321
    %1323 = vset.pattern.permute.xlu0 0
    %1324 = vperm.xlu0 %1323, %v1309
    %v1325 = vpop.permute.xlu0 %1324
    %v1326 = vlaneseq
    %v1327 = vshrl.u32 %v1326, 7
    %v1328 = vsub.s32 %v336, %v1327
    %v1329 = vrot.slane %v1316, %v1328
    %v1330 = vlaneseq
    %v1331 = vshrl.u32 %v1330, 7
    %v1332 = vsub.s32 %v591, %v1331
    %v1333 = vrot.slane %v1319, %v1332
    %v1334 = vsel %vm596, %v1333, %v1329
    %v1335 = vlaneseq
    %v1336 = vshrl.u32 %v1335, 7
    %v1337 = vsub.s32 %v336, %v1336
    %v1338 = vrot.slane %v1322, %v1337
    %v1339 = vlaneseq
    %v1340 = vshrl.u32 %v1339, 7
    %v1341 = vsub.s32 %v591, %v1340
    %v1342 = vrot.slane %v1325, %v1341
    %v1343 = vsel %vm596, %v1342, %v1338
    %v1344 = vsel %vm274, %v1343, %v1334
    %v1346 = vsel %vm609, %v1344, 0.0
    %1347 = vadd.xlane.f32.xlu0 %v1346
    %v1348 = vpop.xlane.xlu0 %1347
    %v1349 = vrcp.pop %v1348
    %v1351 = vlaneseq
    %v1352 = vshrl.u32 %v1351, 7
    %v1353 = vsub.s32 0, %v1352
    %v1354 = vrot.slane %v1349, %v1353
    %v1355 = vlaneseq
    %v1356 = vshrl.u32 %v1355, 7
    %v1357 = vsub.s32 1, %v1356
    %v1358 = vrot.slane %v1349, %v1357
    %v1361 = vmul.f32 %v1303, %v1354
    %v1362 = vmul.f32 %v1305, %v1354
    %v1363 = vmul.f32 %v1307, %v1358
    %v1364 = vmul.f32 %v1309, %v1358
    %1366 = vset.pattern.permute.xlu0 0
    %1367 = vperm.xlu0 %1366, %v1361
    %v1368 = vpop.permute.xlu0 %1367
    %1371 = vset.pattern.permute.xlu0 0
    %1372 = vperm.xlu0 %1371, %v1362
    %v1373 = vpop.permute.xlu0 %1372
    %1376 = vset.pattern.permute.xlu0 0
    %1377 = vperm.xlu0 %1376, %v1363
    %v1378 = vpop.permute.xlu0 %1377
    %1381 = vset.pattern.permute.xlu0 0
    %1382 = vperm.xlu0 %1381, %v1364
    %v1383 = vpop.permute.xlu0 %1382
    %v1385 = vmul.f32 %v1368, %v151
    %v1386 = vmul.f32 %v1373, %v152
    %v1387 = vmul.f32 %v1378, %v153
    %v1388 = vmul.f32 %v1383, %v154
    %v1389 = vsel %vm180, %v1385, 0.0
    %v1390 = vsel %vm180, %v1386, 0.0
    %v1391 = vadd.f32 %v1389, %v1390
    %v1392 = vrot.slane %v1391, 4
    %v1393 = vadd.f32 %v1391, %v1392
    %v1394 = vrot.slane %v1393, 2
    %v1395 = vadd.f32 %v1393, %v1394
    %v1396 = vrot.slane %v1395, 1
    %v1397 = vadd.f32 %v1395, %v1396
    %v1398 = vsel %vm180, %v1387, 0.0
    %v1399 = vsel %vm180, %v1388, 0.0
    %v1400 = vadd.f32 %v1398, %v1399
    %v1401 = vrot.slane %v1400, 4
    %v1402 = vadd.f32 %v1400, %v1401
    %v1403 = vrot.slane %v1402, 2
    %v1404 = vadd.f32 %v1402, %v1403
    %v1405 = vrot.slane %v1404, 1
    %v1406 = vadd.f32 %v1404, %v1405
    %v1407 = vld [vmem:[%s13] sm:$0xff]
    %v1408 = vld [vmem:[%s13 + $0x8] sm:$0xff]
    %v1409 = vpack.c.bf16 %v1131, %v1131
    %v1412 = vunpack.c.l.b16 %v1407
    %v1413 = vunpack.c.h.b16 %v1407
    %v1414 = vunpack.c.l.b16 %v1408
    %v1415 = vunpack.c.h.b16 %v1408
    %v1416 = vpack.c.b16 %v1414, %v1412
    %v1417 = vpack.c.b16 %v1415, %v1413
    %v1421 = vsel %vm746, %v1409, 0
    %1423 = vmatprep.subr.bf16.mxu0 0
    %1424 = vmatpush1.bf16.msra.mxu0 0
    %1425 = vmatprep.subr.bf16.mxu0 0
    %1426 = vmatpush1.bf16.msra.mxu0 0
    %1427 = vmatprep.subr.bf16.mxu0 0
    %1428 = vmatpush1.bf16.msra.mxu0 0
    %1429 = vmatprep.subr.bf16.mxu0 0
    %1430 = vmatpush1.bf16.msra.mxu0 0
    %1431 = vmatprep.subr.bf16.mxu0 0
    %1432 = vmatpush1.bf16.msra.mxu0 0
    %1433 = vmatprep.subr.bf16.mxu0 0
    %1434 = vmatpush1.bf16.msra.mxu0 0
    %1435 = vmatprep.subr.bf16.mxu0 0
    %1436 = vmatpush1.bf16.msra.mxu0 0
    %1437 = vmatprep.subr.bf16.mxu0 %v1417
    %1438 = vmatpush1.bf16.msra.mxu0 %v1416
    %1439 = vmatprep.subr.bf16.mxu0 0
    %1440 = vmatpush2.bf16.msra.mxu0 0
    %1441 = vmatprep.subr.bf16.mxu0 0
    %1442 = vmatpush2.bf16.msra.mxu0 0
    %1443 = vmatprep.subr.bf16.mxu0 0
    %1444 = vmatpush2.bf16.msra.mxu0 0
    %1445 = vmatprep.subr.bf16.mxu0 0
    %1446 = vmatpush2.bf16.msra.mxu0 0
    %1447 = vmatprep.subr.bf16.mxu0 0
    %1448 = vmatpush2.bf16.msra.mxu0 0
    %1449 = vmatprep.subr.bf16.mxu0 0
    %1450 = vmatpush2.bf16.msra.mxu0 0
    %1451 = vmatprep.subr.bf16.mxu0 0
    %1452 = vmatpush2.bf16.msra.mxu0 0
    %1453 = vmatprep.subr.bf16.mxu0 0
    %1454 = vmatpush2.bf16.msra.mxu0 0
    %1455 = vmatprep.mubr.bf16.mxu0 0
    %1456 = vmatmul.mubr.bf16.gmra.mxu0 %v1421
    %v1457 = vpop.f32.mrf.mxu0
    %v1458 = vadd.f32 0.0, %v1457
    %v1459 = vpop.f32.mrf.mxu0
    %v1460 = vadd.f32 0.0, %v1459
    %v1461 = vpop.f32.mrf.mxu0
    %v1462 = vpop.f32.mrf.mxu0
    %1463 = vdwg.mxu0
    %v1464 = vld [vmem:[%s14] sm:$0xff]
    %v1465 = vld [vmem:[%s14 + $0x8] sm:$0xff]
    %v1466 = vld [vmem:[%s14 + $0x10] sm:$0xff]
    %v1467 = vld [vmem:[%s14 + $0x18] sm:$0xff]
    %v1468 = vpack.c.bf16 %v1397, %v1397
    %v1469 = vpack.c.bf16 %v1406, %v1406
    %v1472 = vunpack.c.l.b16 %v1468
    %v1473 = vunpack.c.l.b16 %v1469
    %v1474 = vsel %vm274, %v1473, %v1472
    %v1475 = vpack.c.b16 %v1474, %v1474
    %v1480 = vunpack.c.l.b16 %v1464
    %v1481 = vunpack.c.h.b16 %v1464
    %v1482 = vunpack.c.l.b16 %v1465
    %v1483 = vunpack.c.h.b16 %v1465
    %v1484 = vunpack.c.l.b16 %v1466
    %v1485 = vunpack.c.h.b16 %v1466
    %v1486 = vunpack.c.l.b16 %v1467
    %v1487 = vunpack.c.h.b16 %v1467
    %v1488 = vpack.c.b16 %v1482, %v1480
    %v1489 = vpack.c.b16 %v1483, %v1481
    %v1490 = vpack.c.b16 %v1486, %v1484
    %v1491 = vpack.c.b16 %v1487, %v1485
    %v1497 = vsel %vm180, %v1475, 0
    %1499 = vmatprep.subr.bf16.mxu0 0
    %1500 = vmatpush1.bf16.msra.mxu0 0
    %1501 = vmatprep.subr.bf16.mxu0 0
    %1502 = vmatpush1.bf16.msra.mxu0 0
    %1503 = vmatprep.subr.bf16.mxu0 0
    %1504 = vmatpush1.bf16.msra.mxu0 0
    %1505 = vmatprep.subr.bf16.mxu0 0
    %1506 = vmatpush1.bf16.msra.mxu0 0
    %1507 = vmatprep.subr.bf16.mxu0 0
    %1508 = vmatpush1.bf16.msra.mxu0 0
    %1509 = vmatprep.subr.bf16.mxu0 0
    %1510 = vmatpush1.bf16.msra.mxu0 0
    %1511 = vmatprep.subr.bf16.mxu0 %v1491
    %1512 = vmatpush1.bf16.msra.mxu0 %v1490
    %1513 = vmatprep.subr.bf16.mxu0 %v1489
    %1514 = vmatpush1.bf16.msra.mxu0 %v1488
    %1515 = vmatprep.subr.bf16.mxu0 0
    %1516 = vmatpush2.bf16.msra.mxu0 0
    %1517 = vmatprep.subr.bf16.mxu0 0
    %1518 = vmatpush2.bf16.msra.mxu0 0
    %1519 = vmatprep.subr.bf16.mxu0 0
    %1520 = vmatpush2.bf16.msra.mxu0 0
    %1521 = vmatprep.subr.bf16.mxu0 0
    %1522 = vmatpush2.bf16.msra.mxu0 0
    %1523 = vmatprep.subr.bf16.mxu0 0
    %1524 = vmatpush2.bf16.msra.mxu0 0
    %1525 = vmatprep.subr.bf16.mxu0 0
    %1526 = vmatpush2.bf16.msra.mxu0 0
    %1527 = vmatprep.subr.bf16.mxu0 0
    %1528 = vmatpush2.bf16.msra.mxu0 0
    %1529 = vmatprep.subr.bf16.mxu0 0
    %1530 = vmatpush2.bf16.msra.mxu0 0
    %1531 = vmatprep.mubr.bf16.mxu0 0
    %1532 = vmatmul.mubr.bf16.gmra.mxu0 %v1497
    %v1533 = vpop.f32.mrf.mxu0
    %v1534 = vadd.f32 0.0, %v1533
    %v1535 = vpop.f32.mrf.mxu0
    %v1536 = vadd.f32 0.0, %v1535
    %v1537 = vpop.f32.mrf.mxu0
    %v1538 = vpop.f32.mrf.mxu0
    %1539 = vdwg.mxu0
    %v1540 = vadd.f32 %v1460, %v1536
    %v1541 = vld [vmem:[%s15] sm:$0x1]
    %v1543 = vlaneseq
    %v1544 = vshrl.u32 %v1543, 7
    %v1545 = vsub.s32 0, %v1544
    %v1546 = vrot.slane %v1541, %v1545
    %v1548 = vadd.f32 %v1540, %v1546
    %1549 = vrot.lane.b32.xlu0 %v1198, 96
    %v1550 = vpop.permute.xlu0 %1549
    %v1552 = vadd.f32 %v1548, %v1550
    %v1553 = vxor.u32 %v1552, 2147483648
    %v1554 = vmul.f32 %v1553, 1.442695
    %v1555 = vpow.pop %v1554
    %v1556 = vadd.f32 %v1555, 1.0
    %v1557 = vrcp.pop %v1556
    %v1558 = vmul.f32 1.0, %v1557
    %1559 = vrot.lane.b32.xlu0 %v1198, 32
    %v1560 = vpop.permute.xlu0 %1559
    %v1562 = vmul.f32 %v1558, %v1560
    %1564 = vrot.lane.b32.xlu0 %v1562, 64
    %v1565 = vpop.permute.xlu0 %1564
    %v1567 = vadd.f32 %v1548, %v1565
    %v1568 = vtanh.pop %v1567
    %v1569 = vsub.f32 1.0, %v1558
    %1571 = vrot.lane.b32.xlu0 %v1568, 96
    %v1572 = vpop.permute.xlu0 %1571
    %v1574 = vmul.f32 %v1569, %v1572
    %1576 = vrot.lane.b32.xlu0 %v1029, 32
    %v1577 = vpop.permute.xlu0 %1576
    %v1579 = vmul.f32 %v1558, %v1577
    %v1580 = vadd.f32 %v1574, %v1579
    %v1581 = vld [vmem:[%s16] sm:$0xf]
    %v1582 = vld [vmem:[%s16 + $0x4] sm:$0xf]
    %v1583 = vld [vmem:[%s16 + $0x8] sm:$0xf]
    %v1584 = vld [vmem:[%s16 + $0xc] sm:$0xf]
    %v1585 = vpack.c.bf16 %v1580, %v1580
    %1587 = vrot.lane.b32.xlu0 %v1585, 96
    %v1588 = vpop.permute.xlu0 %1587
    %v1593 = vunpack.c.l.b16 %v1581
    %v1594 = vunpack.c.l.b16 %v1582
    %v1595 = vunpack.c.l.b16 %v1583
    %v1596 = vunpack.c.l.b16 %v1584
    %v1597 = vpack.c.b16 %v1594, %v1593
    %v1598 = vpack.c.b16 %v1596, %v1595
    %v1602 = vsel %vm180, %v1588, 0
    %1604 = vmatprep.subr.bf16.mxu0 0
    %1605 = vmatpush1.bf16.msra.mxu0 0
    %1606 = vmatprep.subr.bf16.mxu0 0
    %1607 = vmatpush1.bf16.msra.mxu0 0
    %1608 = vmatprep.subr.bf16.mxu0 0
    %1609 = vmatpush1.bf16.msra.mxu0 0
    %1610 = vmatprep.subr.bf16.mxu0 0
    %1611 = vmatpush1.bf16.msra.mxu0 0
    %1612 = vmatprep.subr.bf16.mxu0 0
    %1613 = vmatpush1.bf16.msra.mxu0 0
    %1614 = vmatprep.subr.bf16.mxu0 0
    %1615 = vmatpush1.bf16.msra.mxu0 0
    %1616 = vmatprep.subr.bf16.mxu0 0
    %1617 = vmatpush1.bf16.msra.mxu0 %v1598
    %1618 = vmatprep.subr.bf16.mxu0 0
    %1619 = vmatpush1.bf16.msra.mxu0 %v1597
    %1620 = vmatprep.subr.bf16.mxu0 0
    %1621 = vmatpush2.bf16.msra.mxu0 0
    %1622 = vmatprep.subr.bf16.mxu0 0
    %1623 = vmatpush2.bf16.msra.mxu0 0
    %1624 = vmatprep.subr.bf16.mxu0 0
    %1625 = vmatpush2.bf16.msra.mxu0 0
    %1626 = vmatprep.subr.bf16.mxu0 0
    %1627 = vmatpush2.bf16.msra.mxu0 0
    %1628 = vmatprep.subr.bf16.mxu0 0
    %1629 = vmatpush2.bf16.msra.mxu0 0
    %1630 = vmatprep.subr.bf16.mxu0 0
    %1631 = vmatpush2.bf16.msra.mxu0 0
    %1632 = vmatprep.subr.bf16.mxu0 0
    %1633 = vmatpush2.bf16.msra.mxu0 0
    %1634 = vmatprep.subr.bf16.mxu0 0
    %1635 = vmatpush2.bf16.msra.mxu0 0
    %1636 = vmatprep.mubr.bf16.mxu0 0
    %1637 = vmatmul.mubr.bf16.gmra.mxu0 %v1602
    %v1638 = vpop.f32.mrf.mxu0
    %v1639 = vadd.f32 %v1458, %v1638
    %v1640 = vpop.f32.mrf.mxu0
    %v1641 = vpop.f32.mrf.mxu0
    %v1642 = vpop.f32.mrf.mxu0
    %1643 = vdwg.mxu0
    %v1644 = vadd.f32 %v1639, %v1534
    %v1645 = vld [vmem:[%s17] sm:$0x1]
    %v1647 = vlaneseq
    %v1648 = vshrl.u32 %v1647, 7
    %v1649 = vsub.s32 0, %v1648
    %v1650 = vrot.slane %v1645, %v1649
    %v1652 = vadd.f32 %v1644, %v1650
    %s1653 = scalar_lea.vmem [#allocation7], 4
    %1654 = vst [vmem:[%s1653] sm:$0x3] %v1652
    %1656 = vrot.lane.b32.xlu0 %v1580, 96
    %v1657 = vpop.permute.xlu0 %1656
    %1659 = vst.msk [vmem:[#allocation2] sm:$0x3] %vm332, %v1657
    %s1660 = sld [smem:[#allocation4 + $0x2]]
    %p1661 = scmp.eq.s32.totalorder %s1660, 1
    // Predicated region
    $region86: #{seq2seq_forward.1} parent=1 // pred_check
      %p1662 = pneg %p1661
    $region87: #{seq2seq_forward.1} parent=1 // pred_check_branch
      %1664 = sbr.rel (%p1662) target = $region89
    $region88: #{seq2seq_forward.1} parent=1 // pred_region
      %s1665 = scalar_lea.vmem %s1, 4
      %v1666 = vld [vmem:[%s1665] sm:$0x3]
      %1667 = vset.pattern.permute.xlu0 0
      %1668 = vperm.xlu0 %1667, %v1666
      %v1669 = vpop.permute.xlu0 %1668
      %vm1670 = vcmp.eq.s32.totalorder %v336, %v1669
      %v1671 = vsel %vm1670, 1, 0
      %v1672 = vcvt.s32.f32 %v1671
      %1673 = vst [vmem:[#allocation3] sm:$0x3] %v1672
    $region89: #{seq2seq_forward.1} parent=1 // pred_fallthru
      _
    %p1674 = scmp.eq.s32.totalorder %s1660, 0
    // Predicated region
    $region90: #{seq2seq_forward.1} parent=1 // pred_check
      %p1675 = pneg %p1674
    $region91: #{seq2seq_forward.1} parent=1 // pred_check_branch
      %1677 = sbr.rel (%p1675) target = $region93
    $region92: #{seq2seq_forward.1} parent=1 // pred_region
      %v1678 = vsel %vm96, %v1652, -inf
      %1679 = vmax.xlane.f32.xlu0 %v1678
      %v1680 = vpop.xlane.xlu0 %1679
      %vm1681 = vcmp.eq.f32.partialorder %v1652, %v1680
      %v1682 = vsel %vm1681, %v336, 128
      %v1683 = vsel %vm96, %v1682, 2147483647
      %v1684 = vand.u32 %v1683, 65535
      %v1685 = vshra.s32 %v1683, 16
      %v1686 = vcvt.s32.f32 %v1684
      %v1687 = vcvt.s32.f32 %v1685
      %1688 = vmin.xlane.f32.xlu0 %v1687
      %v1689 = vpop.xlane.xlu0 %1688
      %vm1690 = vcmp.eq.f32.partialorder %v1687, %v1689
      %v1691 = vsel %vm1690, %v1686, inf
      %1692 = vmin.xlane.f32.xlu0 %v1691
      %v1693 = vpop.xlane.xlu0 %1692
      %v1694 = vcvt.f32.s32 %v1693
      %v1695 = vcvt.f32.s32 %v1689
      %v1696 = vshll.u32 %v1695, 16
      %v1697 = vadd.s32 %v1696, %v1694
      %vm1698 = vcmp.eq.s32.totalorder %v336, %v1697
      %v1699 = vsel %vm1698, 1, 0
      %v1700 = vcvt.s32.f32 %v1699
      %1701 = vst [vmem:[#allocation3] sm:$0x3] %v1700
    $region93: #{seq2seq_forward.1} parent=1 // pred_fallthru
      _
    %v1702 = vld [vmem:[#allocation2] sm:$0x3]
    %v1703 = vld [vmem:[#allocation3] sm:$0x3]
    %v1704 = vld [vmem:[%s12] sm:$0xf]
    %v1705 = vld [vmem:[%s12 + $0x4] sm:$0xf]
    %v1706 = vld [vmem:[%s12 + $0x8] sm:$0xf]
    %v1707 = vld [vmem:[%s12 + $0xc] sm:$0xf]
    %v1708 = vld [vmem:[%s12 + $0x10] sm:$0xf]
    %v1709 = vld [vmem:[%s12 + $0x14] sm:$0xf]
    %v1710 = vld [vmem:[%s12 + $0x18] sm:$0xf]
    %v1711 = vld [vmem:[%s12 + $0x1c] sm:$0xf]
    %v1712 = vld [vmem:[%s12 + $0x20] sm:$0xf]
    %v1713 = vld [vmem:[%s12 + $0x24] sm:$0xf]
    %v1714 = vld [vmem:[%s12 + $0x28] sm:$0xf]
    %v1715 = vld [vmem:[%s12 + $0x2c] sm:$0xf]
    %v1716 = vld [vmem:[%s12 + $0x30] sm:$0xf]
    %v1717 = vld [vmem:[%s12 + $0x34] sm:$0xf]
    %v1718 = vld [vmem:[%s12 + $0x38] sm:$0xf]
    %v1719 = vld [vmem:[%s12 + $0x3c] sm:$0xf]
    %v1720 = vpack.c.bf16 %v1703, %v1703
    %v1737 = vunpack.c.l.b16 %v1704
    %v1738 = vunpack.c.l.b16 %v1705
    %v1739 = vunpack.c.l.b16 %v1706
    %v1740 = vunpack.c.l.b16 %v1707
    %v1741 = vunpack.c.l.b16 %v1708
    %v1742 = vunpack.c.l.b16 %v1709
    %v1743 = vunpack.c.l.b16 %v1710
    %v1744 = vunpack.c.l.b16 %v1711
    %v1745 = vunpack.c.l.b16 %v1712
    %v1746 = vunpack.c.l.b16 %v1713
    %v1747 = vunpack.c.l.b16 %v1714
    %v1748 = vunpack.c.l.b16 %v1715
    %v1749 = vunpack.c.l.b16 %v1716
    %v1750 = vunpack.c.l.b16 %v1717
    %v1751 = vunpack.c.l.b16 %v1718
    %v1752 = vunpack.c.l.b16 %v1719
    %v1753 = vpack.c.b16 %v1738, %v1737
    %v1754 = vpack.c.b16 %v1740, %v1739
    %v1755 = vpack.c.b16 %v1742, %v1741
    %v1756 = vpack.c.b16 %v1744, %v1743
    %v1757 = vpack.c.b16 %v1746, %v1745
    %v1758 = vpack.c.b16 %v1748, %v1747
    %v1759 = vpack.c.b16 %v1750, %v1749
    %v1760 = vpack.c.b16 %v1752, %v1751
    %1769 = vmatprep.subr.bf16.mxu0 0
    %1770 = vmatpush1.bf16.msra.mxu0 %v1760
    %1771 = vmatprep.subr.bf16.mxu0 0
    %1772 = vmatpush1.bf16.msra.mxu0 %v1759
    %1773 = vmatprep.subr.bf16.mxu0 0
    %1774 = vmatpush1.bf16.msra.mxu0 %v1758
    %1775 = vmatprep.subr.bf16.mxu0 0
    %1776 = vmatpush1.bf16.msra.mxu0 %v1757
    %1777 = vmatprep.subr.bf16.mxu0 0
    %1778 = vmatpush1.bf16.msra.mxu0 %v1756
    %1779 = vmatprep.subr.bf16.mxu0 0
    %1780 = vmatpush1.bf16.msra.mxu0 %v1755
    %1781 = vmatprep.subr.bf16.mxu0 0
    %1782 = vmatpush1.bf16.msra.mxu0 %v1754
    %1783 = vmatprep.subr.bf16.mxu0 0
    %1784 = vmatpush1.bf16.msra.mxu0 %v1753
    %1785 = vmatprep.subr.bf16.mxu0 0
    %1786 = vmatpush2.bf16.msra.mxu0 0
    %1787 = vmatprep.subr.bf16.mxu0 0
    %1788 = vmatpush2.bf16.msra.mxu0 0
    %1789 = vmatprep.subr.bf16.mxu0 0
    %1790 = vmatpush2.bf16.msra.mxu0 0
    %1791 = vmatprep.subr.bf16.mxu0 0
    %1792 = vmatpush2.bf16.msra.mxu0 0
    %1793 = vmatprep.subr.bf16.mxu0 0
    %1794 = vmatpush2.bf16.msra.mxu0 0
    %1795 = vmatprep.subr.bf16.mxu0 0
    %1796 = vmatpush2.bf16.msra.mxu0 0
    %1797 = vmatprep.subr.bf16.mxu0 0
    %1798 = vmatpush2.bf16.msra.mxu0 0
    %1799 = vmatprep.subr.bf16.mxu0 0
    %1800 = vmatpush2.bf16.msra.mxu0 0
    %1801 = vmatprep.mubr.bf16.mxu0 0
    %1802 = vmatmul.mubr.bf16.gmra.mxu0 %v1720
    %v1803 = vpop.f32.mrf.mxu0
    %v1804 = vadd.f32 0.0, %v1803
    %v1805 = vpop.f32.mrf.mxu0
    %v1806 = vpop.f32.mrf.mxu0
    %v1807 = vpop.f32.mrf.mxu0
    %1808 = vdwg.mxu0
    %v1809 = vld [vmem:[%s10] sm:$0xf]
    %v1810 = vld [vmem:[%s10 + $0x4] sm:$0xf]
    %v1811 = vld [vmem:[%s10 + $0x8] sm:$0xf]
    %v1812 = vld [vmem:[%s10 + $0xc] sm:$0xf]
    %v1813 = vpack.c.bf16 %v1702, %v1702
    %v1814 = vld [vmem:[%s11] sm:$0x1]
    %v1816 = vlaneseq
    %v1817 = vshrl.u32 %v1816, 7
    %v1818 = vsub.s32 0, %v1817
    %v1819 = vrot.slane %v1814, %v1818
    %v1825 = vunpack.c.l.b16 %v1809
    %v1826 = vunpack.c.l.b16 %v1810
    %v1827 = vunpack.c.l.b16 %v1811
    %v1828 = vunpack.c.l.b16 %v1812
    %v1829 = vpack.c.b16 %v1826, %v1825
    %v1830 = vpack.c.b16 %v1828, %v1827
    %v1834 = vsel %vm180, %v1813, 0
    %1836 = vmatprep.subr.bf16.mxu0 0
    %1837 = vmatpush1.bf16.msra.mxu0 0
    %1838 = vmatprep.subr.bf16.mxu0 0
    %1839 = vmatpush1.bf16.msra.mxu0 0
    %1840 = vmatprep.subr.bf16.mxu0 0
    %1841 = vmatpush1.bf16.msra.mxu0 0
    %1842 = vmatprep.subr.bf16.mxu0 0
    %1843 = vmatpush1.bf16.msra.mxu0 0
    %1844 = vmatprep.subr.bf16.mxu0 0
    %1845 = vmatpush1.bf16.msra.mxu0 0
    %1846 = vmatprep.subr.bf16.mxu0 0
    %1847 = vmatpush1.bf16.msra.mxu0 0
    %1848 = vmatprep.subr.bf16.mxu0 0
    %1849 = vmatpush1.bf16.msra.mxu0 %v1830
    %1850 = vmatprep.subr.bf16.mxu0 0
    %1851 = vmatpush1.bf16.msra.mxu0 %v1829
    %1852 = vmatprep.subr.bf16.mxu0 0
    %1853 = vmatpush2.bf16.msra.mxu0 0
    %1854 = vmatprep.subr.bf16.mxu0 0
    %1855 = vmatpush2.bf16.msra.mxu0 0
    %1856 = vmatprep.subr.bf16.mxu0 0
    %1857 = vmatpush2.bf16.msra.mxu0 0
    %1858 = vmatprep.subr.bf16.mxu0 0
    %1859 = vmatpush2.bf16.msra.mxu0 0
    %1860 = vmatprep.subr.bf16.mxu0 0
    %1861 = vmatpush2.bf16.msra.mxu0 0
    %1862 = vmatprep.subr.bf16.mxu0 0
    %1863 = vmatpush2.bf16.msra.mxu0 0
    %1864 = vmatprep.subr.bf16.mxu0 0
    %1865 = vmatpush2.bf16.msra.mxu0 0
    %1866 = vmatprep.subr.bf16.mxu0 0
    %1867 = vmatpush2.bf16.msra.mxu0 0
    %1868 = vmatprep.mubr.bf16.mxu0 0
    %1869 = vmatmul.mubr.bf16.gmra.mxu0 %v1834
    %v1870 = vpop.f32.mrf.mxu0
    %v1871 = vadd.f32 %v1819, %v1870
    %v1872 = vpop.f32.mrf.mxu0
    %v1873 = vpop.f32.mrf.mxu0
    %v1874 = vpop.f32.mrf.mxu0
    %1875 = vdwg.mxu0
    %v1878 = vunpack.c.l.s4 1966171168
    %v1879 = vunpack.c.0.s8 %v1878
    %v1880 = vlaneseq
    %v1881 = vshrl.u32 %v1880, 7
    %v1882 = vsub.s32 %v1879, %v1881
    %v1883 = vrot.slane %v1871, %v1882
    %v1884 = vcombine.high %v1883, %v1883
    %v1886 = vunpack.c.l.s4 1966171168
    %v1887 = vunpack.c.0.s8 %v1886
    %v1888 = vlaneseq
    %v1889 = vshrl.u32 %v1888, 7
    %v1890 = vsub.s32 %v1887, %v1889
    %v1891 = vrot.slane %v1883, %v1890
    %v1893 = vunpack.c.l.s4 1966171168
    %v1894 = vunpack.c.0.s8 %v1893
    %v1895 = vlaneseq
    %v1896 = vshrl.u32 %v1895, 7
    %v1897 = vsub.s32 %v1894, %v1896
    %v1898 = vrot.slane %v1884, %v1897
    %v1899 = vlaneseq
    %v1900 = vshrl.u32 %v1899, 7
    %v1901 = vsub.s32 0, %v1900
    %v1902 = vrot.slane %v1891, %v1901
    %v1903 = vlaneseq
    %v1904 = vshrl.u32 %v1903, 7
    %v1905 = vsub.s32 0, %v1904
    %v1906 = vrot.slane %v1898, %v1905
    %v1909 = vadd.f32 %v222, %v1902
    %v1910 = vadd.f32 %v225, %v1902
    %v1911 = vadd.f32 %v230, %v1906
    %v1912 = vadd.f32 %v233, %v1906
    %v1913 = vtanh.pop %v1909
    %v1914 = vtanh.pop %v1910
    %v1915 = vtanh.pop %v1911
    %v1916 = vtanh.pop %v1912
    %v1917 = vmul.f32 %v1913, %v565
    %v1918 = vmul.f32 %v1914, %v565
    %v1919 = vmul.f32 %v1915, %v565
    %v1920 = vmul.f32 %v1916, %v565
    %v1921 = vsel %vm180, %v1917, 0.0
    %1922 = vadd.xlane.f32.xlu0 %v1921
    %v1923 = vpop.xlane.xlu0 %1922
    %v1924 = vsel %vm180, %v1918, 0.0
    %1925 = vadd.xlane.f32.xlu0 %v1924
    %v1926 = vpop.xlane.xlu0 %1925
    %v1927 = vsel %vm180, %v1919, 0.0
    %1928 = vadd.xlane.f32.xlu0 %v1927
    %v1929 = vpop.xlane.xlu0 %1928
    %v1930 = vsel %vm180, %v1920, 0.0
    %1931 = vadd.xlane.f32.xlu0 %v1930
    %v1932 = vpop.xlane.xlu0 %1931
    %v1937 = vlaneseq
    %v1938 = vshrl.u32 %v1937, 7
    %v1939 = vsub.s32 %v336, %v1938
    %v1940 = vrot.slane %v1923, %v1939
    %v1941 = vlaneseq
    %v1942 = vshrl.u32 %v1941, 7
    %v1943 = vsub.s32 %v591, %v1942
    %v1944 = vrot.slane %v1926, %v1943
    %v1945 = vsel %vm596, %v1944, %v1940
    %v1946 = vlaneseq
    %v1947 = vshrl.u32 %v1946, 7
    %v1948 = vsub.s32 %v336, %v1947
    %v1949 = vrot.slane %v1929, %v1948
    %v1950 = vlaneseq
    %v1951 = vshrl.u32 %v1950, 7
    %v1952 = vsub.s32 %v591, %v1951
    %v1953 = vrot.slane %v1932, %v1952
    %v1954 = vsel %vm596, %v1953, %v1949
    %v1955 = vsel %vm274, %v1954, %v1945
    %v1957 = vsel %vm609, %v1955, -inf
    %1958 = vmax.xlane.f32.xlu0 %v1957
    %v1959 = vpop.xlane.xlu0 %1958
    %v1961 = vlaneseq
    %v1962 = vshrl.u32 %v1961, 7
    %v1963 = vsub.s32 0, %v1962
    %v1964 = vrot.slane %v1959, %v1963
    %v1965 = vlaneseq
    %v1966 = vshrl.u32 %v1965, 7
    %v1967 = vsub.s32 1, %v1966
    %v1968 = vrot.slane %v1959, %v1967
    %v1971 = vsub.f32 %v1923, %v1964
    %v1972 = vsub.f32 %v1926, %v1964
    %v1973 = vsub.f32 %v1929, %v1968
    %v1974 = vsub.f32 %v1932, %v1968
    %v1975 = vmul.f32 %v1971, 1.442695
    %v1976 = vpow.pop %v1975
    %v1977 = vmul.f32 %v1972, 1.442695
    %v1978 = vpow.pop %v1977
    %v1979 = vmul.f32 %v1973, 1.442695
    %v1980 = vpow.pop %v1979
    %v1981 = vmul.f32 %v1974, 1.442695
    %v1982 = vpow.pop %v1981
    %1987 = vset.pattern.permute.xlu0 0
    %1988 = vperm.xlu0 %1987, %v1976
    %v1989 = vpop.permute.xlu0 %1988
    %1990 = vset.pattern.permute.xlu0 0
    %1991 = vperm.xlu0 %1990, %v1978
    %v1992 = vpop.permute.xlu0 %1991
    %1993 = vset.pattern.permute.xlu0 0
    %1994 = vperm.xlu0 %1993, %v1980
    %v1995 = vpop.permute.xlu0 %1994
    %1996 = vset.pattern.permute.xlu0 0
    %1997 = vperm.xlu0 %1996, %v1982
    %v1998 = vpop.permute.xlu0 %1997
    %v1999 = vlaneseq
    %v2000 = vshrl.u32 %v1999, 7
    %v2001 = vsub.s32 %v336, %v2000
    %v2002 = vrot.slane %v1989, %v2001
    %v2003 = vlaneseq
    %v2004 = vshrl.u32 %v2003, 7
    %v2005 = vsub.s32 %v591, %v2004
    %v2006 = vrot.slane %v1992, %v2005
    %v2007 = vsel %vm596, %v2006, %v2002
    %v2008 = vlaneseq
    %v2009 = vshrl.u32 %v2008, 7
    %v2010 = vsub.s32 %v336, %v2009
    %v2011 = vrot.slane %v1995, %v2010
    %v2012 = vlaneseq
    %v2013 = vshrl.u32 %v2012, 7
    %v2014 = vsub.s32 %v591, %v2013
    %v2015 = vrot.slane %v1998, %v2014
    %v2016 = vsel %vm596, %v2015, %v2011
    %v2017 = vsel %vm274, %v2016, %v2007
    %v2019 = vsel %vm609, %v2017, 0.0
    %2020 = vadd.xlane.f32.xlu0 %v2019
    %v2021 = vpop.xlane.xlu0 %2020
    %v2022 = vrcp.pop %v2021
    %v2024 = vlaneseq
    %v2025 = vshrl.u32 %v2024, 7
    %v2026 = vsub.s32 0, %v2025
    %v2027 = vrot.slane %v2022, %v2026
    %v2028 = vlaneseq
    %v2029 = vshrl.u32 %v2028, 7
    %v2030 = vsub.s32 1, %v2029
    %v2031 = vrot.slane %v2022, %v2030
    %v2034 = vmul.f32 %v1976, %v2027
    %v2035 = vmul.f32 %v1978, %v2027
    %v2036 = vmul.f32 %v1980, %v2031
    %v2037 = vmul.f32 %v1982, %v2031
    %2039 = vset.pattern.permute.xlu0 0
    %2040 = vperm.xlu0 %2039, %v2034
    %v2041 = vpop.permute.xlu0 %2040
    %2044 = vset.pattern.permute.xlu0 0
    %2045 = vperm.xlu0 %2044, %v2035
    %v2046 = vpop.permute.xlu0 %2045
    %2049 = vset.pattern.permute.xlu0 0
    %2050 = vperm.xlu0 %2049, %v2036
    %v2051 = vpop.permute.xlu0 %2050
    %2054 = vset.pattern.permute.xlu0 0
    %2055 = vperm.xlu0 %2054, %v2037
    %v2056 = vpop.permute.xlu0 %2055
    %v2058 = vmul.f32 %v2041, %v151
    %v2059 = vmul.f32 %v2046, %v152
    %v2060 = vmul.f32 %v2051, %v153
    %v2061 = vmul.f32 %v2056, %v154
    %v2062 = vsel %vm180, %v2058, 0.0
    %v2063 = vsel %vm180, %v2059, 0.0
    %v2064 = vadd.f32 %v2062, %v2063
    %v2065 = vrot.slane %v2064, 4
    %v2066 = vadd.f32 %v2064, %v2065
    %v2067 = vrot.slane %v2066, 2
    %v2068 = vadd.f32 %v2066, %v2067
    %v2069 = vrot.slane %v2068, 1
    %v2070 = vadd.f32 %v2068, %v2069
    %v2071 = vsel %vm180, %v2060, 0.0
    %v2072 = vsel %vm180, %v2061, 0.0
    %v2073 = vadd.f32 %v2071, %v2072
    %v2074 = vrot.slane %v2073, 4
    %v2075 = vadd.f32 %v2073, %v2074
    %v2076 = vrot.slane %v2075, 2
    %v2077 = vadd.f32 %v2075, %v2076
    %v2078 = vrot.slane %v2077, 1
    %v2079 = vadd.f32 %v2077, %v2078
    %v2080 = vld [vmem:[%s13] sm:$0xff]
    %v2081 = vld [vmem:[%s13 + $0x8] sm:$0xff]
    %v2082 = vpack.c.bf16 %v1804, %v1804
    %v2085 = vunpack.c.l.b16 %v2080
    %v2086 = vunpack.c.h.b16 %v2080
    %v2087 = vunpack.c.l.b16 %v2081
    %v2088 = vunpack.c.h.b16 %v2081
    %v2089 = vpack.c.b16 %v2087, %v2085
    %v2090 = vpack.c.b16 %v2088, %v2086
    %v2094 = vsel %vm746, %v2082, 0
    %2096 = vmatprep.subr.bf16.mxu0 0
    %2097 = vmatpush1.bf16.msra.mxu0 0
    %2098 = vmatprep.subr.bf16.mxu0 0
    %2099 = vmatpush1.bf16.msra.mxu0 0
    %2100 = vmatprep.subr.bf16.mxu0 0
    %2101 = vmatpush1.bf16.msra.mxu0 0
    %2102 = vmatprep.subr.bf16.mxu0 0
    %2103 = vmatpush1.bf16.msra.mxu0 0
    %2104 = vmatprep.subr.bf16.mxu0 0
    %2105 = vmatpush1.bf16.msra.mxu0 0
    %2106 = vmatprep.subr.bf16.mxu0 0
    %2107 = vmatpush1.bf16.msra.mxu0 0
    %2108 = vmatprep.subr.bf16.mxu0 0
    %2109 = vmatpush1.bf16.msra.mxu0 0
    %2110 = vmatprep.subr.bf16.mxu0 %v2090
    %2111 = vmatpush1.bf16.msra.mxu0 %v2089
    %2112 = vmatprep.subr.bf16.mxu0 0
    %2113 = vmatpush2.bf16.msra.mxu0 0
    %2114 = vmatprep.subr.bf16.mxu0 0
    %2115 = vmatpush2.bf16.msra.mxu0 0
    %2116 = vmatprep.subr.bf16.mxu0 0
    %2117 = vmatpush2.bf16.msra.mxu0 0
    %2118 = vmatprep.subr.bf16.mxu0 0
    %2119 = vmatpush2.bf16.msra.mxu0 0
    %2120 = vmatprep.subr.bf16.mxu0 0
    %2121 = vmatpush2.bf16.msra.mxu0 0
    %2122 = vmatprep.subr.bf16.mxu0 0
    %2123 = vmatpush2.bf16.msra.mxu0 0
    %2124 = vmatprep.subr.bf16.mxu0 0
    %2125 = vmatpush2.bf16.msra.mxu0 0
    %2126 = vmatprep.subr.bf16.mxu0 0
    %2127 = vmatpush2.bf16.msra.mxu0 0
    %2128 = vmatprep.mubr.bf16.mxu0 0
    %2129 = vmatmul.mubr.bf16.gmra.mxu0 %v2094
    %v2130 = vpop.f32.mrf.mxu0
    %v2131 = vadd.f32 0.0, %v2130
    %v2132 = vpop.f32.mrf.mxu0
    %v2133 = vadd.f32 0.0, %v2132
    %v2134 = vpop.f32.mrf.mxu0
    %v2135 = vpop.f32.mrf.mxu0
    %2136 = vdwg.mxu0
    %v2137 = vld [vmem:[%s14] sm:$0xff]
    %v2138 = vld [vmem:[%s14 + $0x8] sm:$0xff]
    %v2139 = vld [vmem:[%s14 + $0x10] sm:$0xff]
    %v2140 = vld [vmem:[%s14 + $0x18] sm:$0xff]
    %v2141 = vpack.c.bf16 %v2070, %v2070
    %v2142 = vpack.c.bf16 %v2079, %v2079
    %v2145 = vunpack.c.l.b16 %v2141
    %v2146 = vunpack.c.l.b16 %v2142
    %v2147 = vsel %vm274, %v2146, %v2145
    %v2148 = vpack.c.b16 %v2147, %v2147
    %v2153 = vunpack.c.l.b16 %v2137
    %v2154 = vunpack.c.h.b16 %v2137
    %v2155 = vunpack.c.l.b16 %v2138
    %v2156 = vunpack.c.h.b16 %v2138
    %v2157 = vunpack.c.l.b16 %v2139
    %v2158 = vunpack.c.h.b16 %v2139
    %v2159 = vunpack.c.l.b16 %v2140
    %v2160 = vunpack.c.h.b16 %v2140
    %v2161 = vpack.c.b16 %v2155, %v2153
    %v2162 = vpack.c.b16 %v2156, %v2154
    %v2163 = vpack.c.b16 %v2159, %v2157
    %v2164 = vpack.c.b16 %v2160, %v2158
    %v2170 = vsel %vm180, %v2148, 0
    %2172 = vmatprep.subr.bf16.mxu0 0
    %2173 = vmatpush1.bf16.msra.mxu0 0
    %2174 = vmatprep.subr.bf16.mxu0 0
    %2175 = vmatpush1.bf16.msra.mxu0 0
    %2176 = vmatprep.subr.bf16.mxu0 0
    %2177 = vmatpush1.bf16.msra.mxu0 0
    %2178 = vmatprep.subr.bf16.mxu0 0
    %2179 = vmatpush1.bf16.msra.mxu0 0
    %2180 = vmatprep.subr.bf16.mxu0 0
    %2181 = vmatpush1.bf16.msra.mxu0 0
    %2182 = vmatprep.subr.bf16.mxu0 0
    %2183 = vmatpush1.bf16.msra.mxu0 0
    %2184 = vmatprep.subr.bf16.mxu0 %v2164
    %2185 = vmatpush1.bf16.msra.mxu0 %v2163
    %2186 = vmatprep.subr.bf16.mxu0 %v2162
    %2187 = vmatpush1.bf16.msra.mxu0 %v2161
    %2188 = vmatprep.subr.bf16.mxu0 0
    %2189 = vmatpush2.bf16.msra.mxu0 0
    %2190 = vmatprep.subr.bf16.mxu0 0
    %2191 = vmatpush2.bf16.msra.mxu0 0
    %2192 = vmatprep.subr.bf16.mxu0 0
    %2193 = vmatpush2.bf16.msra.mxu0 0
    %2194 = vmatprep.subr.bf16.mxu0 0
    %2195 = vmatpush2.bf16.msra.mxu0 0
    %2196 = vmatprep.subr.bf16.mxu0 0
    %2197 = vmatpush2.bf16.msra.mxu0 0
    %2198 = vmatprep.subr.bf16.mxu0 0
    %2199 = vmatpush2.bf16.msra.mxu0 0
    %2200 = vmatprep.subr.bf16.mxu0 0
    %2201 = vmatpush2.bf16.msra.mxu0 0
    %2202 = vmatprep.subr.bf16.mxu0 0
    %2203 = vmatpush2.bf16.msra.mxu0 0
    %2204 = vmatprep.mubr.bf16.mxu0 0
    %2205 = vmatmul.mubr.bf16.gmra.mxu0 %v2170
    %v2206 = vpop.f32.mrf.mxu0
    %v2207 = vadd.f32 0.0, %v2206
    %v2208 = vpop.f32.mrf.mxu0
    %v2209 = vadd.f32 0.0, %v2208
    %v2210 = vpop.f32.mrf.mxu0
    %v2211 = vpop.f32.mrf.mxu0
    %2212 = vdwg.mxu0
    %v2213 = vadd.f32 %v2133, %v2209
    %v2214 = vld [vmem:[%s15] sm:$0x1]
    %v2216 = vlaneseq
    %v2217 = vshrl.u32 %v2216, 7
    %v2218 = vsub.s32 0, %v2217
    %v2219 = vrot.slane %v2214, %v2218
    %v2221 = vadd.f32 %v2213, %v2219
    %2222 = vrot.lane.b32.xlu0 %v1871, 96
    %v2223 = vpop.permute.xlu0 %2222
    %v2225 = vadd.f32 %v2221, %v2223
    %v2226 = vxor.u32 %v2225, 2147483648
    %v2227 = vmul.f32 %v2226, 1.442695
    %v2228 = vpow.pop %v2227
    %v2229 = vadd.f32 %v2228, 1.0
    %v2230 = vrcp.pop %v2229
    %v2231 = vmul.f32 1.0, %v2230
    %2232 = vrot.lane.b32.xlu0 %v1871, 32
    %v2233 = vpop.permute.xlu0 %2232
    %v2235 = vmul.f32 %v2231, %v2233
    %2237 = vrot.lane.b32.xlu0 %v2235, 64
    %v2238 = vpop.permute.xlu0 %2237
    %v2240 = vadd.f32 %v2221, %v2238
    %v2241 = vtanh.pop %v2240
    %v2242 = vsub.f32 1.0, %v2231
    %2244 = vrot.lane.b32.xlu0 %v2241, 96
    %v2245 = vpop.permute.xlu0 %2244
    %v2247 = vmul.f32 %v2242, %v2245
    %2249 = vrot.lane.b32.xlu0 %v1702, 32
    %v2250 = vpop.permute.xlu0 %2249
    %v2252 = vmul.f32 %v2231, %v2250
    %v2253 = vadd.f32 %v2247, %v2252
    %v2254 = vld [vmem:[%s16] sm:$0xf]
    %v2255 = vld [vmem:[%s16 + $0x4] sm:$0xf]
    %v2256 = vld [vmem:[%s16 + $0x8] sm:$0xf]
    %v2257 = vld [vmem:[%s16 + $0xc] sm:$0xf]
    %v2258 = vpack.c.bf16 %v2253, %v2253
    %2260 = vrot.lane.b32.xlu0 %v2258, 96
    %v2261 = vpop.permute.xlu0 %2260
    %v2266 = vunpack.c.l.b16 %v2254
    %v2267 = vunpack.c.l.b16 %v2255
    %v2268 = vunpack.c.l.b16 %v2256
    %v2269 = vunpack.c.l.b16 %v2257
    %v2270 = vpack.c.b16 %v2267, %v2266
    %v2271 = vpack.c.b16 %v2269, %v2268
    %v2275 = vsel %vm180, %v2261, 0
    %2277 = vmatprep.subr.bf16.mxu0 0
    %2278 = vmatpush1.bf16.msra.mxu0 0
    %2279 = vmatprep.subr.bf16.mxu0 0
    %2280 = vmatpush1.bf16.msra.mxu0 0
    %2281 = vmatprep.subr.bf16.mxu0 0
    %2282 = vmatpush1.bf16.msra.mxu0 0
    %2283 = vmatprep.subr.bf16.mxu0 0
    %2284 = vmatpush1.bf16.msra.mxu0 0
    %2285 = vmatprep.subr.bf16.mxu0 0
    %2286 = vmatpush1.bf16.msra.mxu0 0
    %2287 = vmatprep.subr.bf16.mxu0 0
    %2288 = vmatpush1.bf16.msra.mxu0 0
    %2289 = vmatprep.subr.bf16.mxu0 0
    %2290 = vmatpush1.bf16.msra.mxu0 %v2271
    %2291 = vmatprep.subr.bf16.mxu0 0
    %2292 = vmatpush1.bf16.msra.mxu0 %v2270
    %2293 = vmatprep.subr.bf16.mxu0 0
    %2294 = vmatpush2.bf16.msra.mxu0 0
    %2295 = vmatprep.subr.bf16.mxu0 0
    %2296 = vmatpush2.bf16.msra.mxu0 0
    %2297 = vmatprep.subr.bf16.mxu0 0
    %2298 = vmatpush2.bf16.msra.mxu0 0
    %2299 = vmatprep.subr.bf16.mxu0 0
    %2300 = vmatpush2.bf16.msra.mxu0 0
    %2301 = vmatprep.subr.bf16.mxu0 0
    %2302 = vmatpush2.bf16.msra.mxu0 0
    %2303 = vmatprep.subr.bf16.mxu0 0
    %2304 = vmatpush2.bf16.msra.mxu0 0
    %2305 = vmatprep.subr.bf16.mxu0 0
    %2306 = vmatpush2.bf16.msra.mxu0 0
    %2307 = vmatprep.subr.bf16.mxu0 0
    %2308 = vmatpush2.bf16.msra.mxu0 0
    %2309 = vmatprep.mubr.bf16.mxu0 0
    %2310 = vmatmul.mubr.bf16.gmra.mxu0 %v2275
    %v2311 = vpop.f32.mrf.mxu0
    %v2312 = vadd.f32 %v2131, %v2311
    %v2313 = vpop.f32.mrf.mxu0
    %v2314 = vpop.f32.mrf.mxu0
    %v2315 = vpop.f32.mrf.mxu0
    %2316 = vdwg.mxu0
    %v2317 = vadd.f32 %v2312, %v2207
    %v2318 = vld [vmem:[%s17] sm:$0x1]
    %v2320 = vlaneseq
    %v2321 = vshrl.u32 %v2320, 7
    %v2322 = vsub.s32 0, %v2321
    %v2323 = vrot.slane %v2318, %v2322
    %v2325 = vadd.f32 %v2317, %v2323
    %s2326 = scalar_lea.vmem [#allocation7], 6
    %2327 = vst [vmem:[%s2326] sm:$0x3] %v2325
    %2329 = vrot.lane.b32.xlu0 %v2253, 96
    %v2330 = vpop.permute.xlu0 %2329
    %2332 = vst.msk [vmem:[#allocation2] sm:$0x3] %vm332, %v2330
    %s2333 = sld [smem:[#allocation4 + $0x3]]
    %p2334 = scmp.eq.s32.totalorder %s2333, 1
    // Predicated region
    $region94: #{seq2seq_forward.1} parent=1 // pred_check
      %p2335 = pneg %p2334
    $region95: #{seq2seq_forward.1} parent=1 // pred_check_branch
      %2337 = sbr.rel (%p2335) target = $region97
    $region96: #{seq2seq_forward.1} parent=1 // pred_region
      %s2338 = scalar_lea.vmem %s1, 6
      %v2339 = vld [vmem:[%s2338] sm:$0x3]
      %2340 = vset.pattern.permute.xlu0 0
      %2341 = vperm.xlu0 %2340, %v2339
      %v2342 = vpop.permute.xlu0 %2341
      %vm2343 = vcmp.eq.s32.totalorder %v336, %v2342
      %v2344 = vsel %vm2343, 1, 0
      %v2345 = vcvt.s32.f32 %v2344
      %2346 = vst [vmem:[#allocation3] sm:$0x3] %v2345
    $region97: #{seq2seq_forward.1} parent=1 // pred_fallthru
      _
    %p2347 = scmp.eq.s32.totalorder %s2333, 0
    // Predicated region
    $region98: #{seq2seq_forward.1} parent=1 // pred_check
      %p2348 = pneg %p2347
    $region99: #{seq2seq_forward.1} parent=1 // pred_check_branch
      %2350 = sbr.rel (%p2348) target = $region101
    $region100: #{seq2seq_forward.1} parent=1 // pred_region
      %v2351 = vsel %vm96, %v2325, -inf
      %2352 = vmax.xlane.f32.xlu0 %v2351
      %v2353 = vpop.xlane.xlu0 %2352
      %vm2354 = vcmp.eq.f32.partialorder %v2325, %v2353
      %v2355 = vsel %vm2354, %v336, 128
      %v2356 = vsel %vm96, %v2355, 2147483647
      %v2357 = vand.u32 %v2356, 65535
      %v2358 = vshra.s32 %v2356, 16
      %v2359 = vcvt.s32.f32 %v2357
      %v2360 = vcvt.s32.f32 %v2358
      %2361 = vmin.xlane.f32.xlu0 %v2360
      %v2362 = vpop.xlane.xlu0 %2361
      %vm2363 = vcmp.eq.f32.partialorder %v2360, %v2362
      %v2364 = vsel %vm2363, %v2359, inf
      %2365 = vmin.xlane.f32.xlu0 %v2364
      %v2366 = vpop.xlane.xlu0 %2365
      %v2367 = vcvt.f32.s32 %v2366
      %v2368 = vcvt.f32.s32 %v2362
      %v2369 = vshll.u32 %v2368, 16
      %v2370 = vadd.s32 %v2369, %v2367
      %vm2371 = vcmp.eq.s32.totalorder %v336, %v2370
      %v2372 = vsel %vm2371, 1, 0
      %v2373 = vcvt.s32.f32 %v2372
      %2374 = vst [vmem:[#allocation3] sm:$0x3] %v2373
    $region101: #{seq2seq_forward.1} parent=1 // pred_fallthru
      _
    %v2375 = vld [vmem:[#allocation2] sm:$0x3]
    %v2376 = vld [vmem:[#allocation3] sm:$0x3]
    %v2377 = vld [vmem:[%s12] sm:$0xf]
    %v2378 = vld [vmem:[%s12 + $0x4] sm:$0xf]
    %v2379 = vld [vmem:[%s12 + $0x8] sm:$0xf]
    %v2380 = vld [vmem:[%s12 + $0xc] sm:$0xf]
    %v2381 = vld [vmem:[%s12 + $0x10] sm:$0xf]
    %v2382 = vld [vmem:[%s12 + $0x14] sm:$0xf]
    %v2383 = vld [vmem:[%s12 + $0x18] sm:$0xf]
    %v2384 = vld [vmem:[%s12 + $0x1c] sm:$0xf]
    %v2385 = vld [vmem:[%s12 + $0x20] sm:$0xf]
    %v2386 = vld [vmem:[%s12 + $0x24] sm:$0xf]
    %v2387 = vld [vmem:[%s12 + $0x28] sm:$0xf]
    %v2388 = vld [vmem:[%s12 + $0x2c] sm:$0xf]
    %v2389 = vld [vmem:[%s12 + $0x30] sm:$0xf]
    %v2390 = vld [vmem:[%s12 + $0x34] sm:$0xf]
    %v2391 = vld [vmem:[%s12 + $0x38] sm:$0xf]
    %v2392 = vld [vmem:[%s12 + $0x3c] sm:$0xf]
    %v2393 = vpack.c.bf16 %v2376, %v2376
    %v2410 = vunpack.c.l.b16 %v2377
    %v2411 = vunpack.c.l.b16 %v2378
    %v2412 = vunpack.c.l.b16 %v2379
    %v2413 = vunpack.c.l.b16 %v2380
    %v2414 = vunpack.c.l.b16 %v2381
    %v2415 = vunpack.c.l.b16 %v2382
    %v2416 = vunpack.c.l.b16 %v2383
    %v2417 = vunpack.c.l.b16 %v2384
    %v2418 = vunpack.c.l.b16 %v2385
    %v2419 = vunpack.c.l.b16 %v2386
    %v2420 = vunpack.c.l.b16 %v2387
    %v2421 = vunpack.c.l.b16 %v2388
    %v2422 = vunpack.c.l.b16 %v2389
    %v2423 = vunpack.c.l.b16 %v2390
    %v2424 = vunpack.c.l.b16 %v2391
    %v2425 = vunpack.c.l.b16 %v2392
    %v2426 = vpack.c.b16 %v2411, %v2410
    %v2427 = vpack.c.b16 %v2413, %v2412
    %v2428 = vpack.c.b16 %v2415, %v2414
    %v2429 = vpack.c.b16 %v2417, %v2416
    %v2430 = vpack.c.b16 %v2419, %v2418
    %v2431 = vpack.c.b16 %v2421, %v2420
    %v2432 = vpack.c.b16 %v2423, %v2422
    %v2433 = vpack.c.b16 %v2425, %v2424
    %2442 = vmatprep.subr.bf16.mxu0 0
    %2443 = vmatpush1.bf16.msra.mxu0 %v2433
    %2444 = vmatprep.subr.bf16.mxu0 0
    %2445 = vmatpush1.bf16.msra.mxu0 %v2432
    %2446 = vmatprep.subr.bf16.mxu0 0
    %2447 = vmatpush1.bf16.msra.mxu0 %v2431
    %2448 = vmatprep.subr.bf16.mxu0 0
    %2449 = vmatpush1.bf16.msra.mxu0 %v2430
    %2450 = vmatprep.subr.bf16.mxu0 0
    %2451 = vmatpush1.bf16.msra.mxu0 %v2429
    %2452 = vmatprep.subr.bf16.mxu0 0
    %2453 = vmatpush1.bf16.msra.mxu0 %v2428
    %2454 = vmatprep.subr.bf16.mxu0 0
    %2455 = vmatpush1.bf16.msra.mxu0 %v2427
    %2456 = vmatprep.subr.bf16.mxu0 0
    %2457 = vmatpush1.bf16.msra.mxu0 %v2426
    %2458 = vmatprep.subr.bf16.mxu0 0
    %2459 = vmatpush2.bf16.msra.mxu0 0
    %2460 = vmatprep.subr.bf16.mxu0 0
    %2461 = vmatpush2.bf16.msra.mxu0 0
    %2462 = vmatprep.subr.bf16.mxu0 0
    %2463 = vmatpush2.bf16.msra.mxu0 0
    %2464 = vmatprep.subr.bf16.mxu0 0
    %2465 = vmatpush2.bf16.msra.mxu0 0
    %2466 = vmatprep.subr.bf16.mxu0 0
    %2467 = vmatpush2.bf16.msra.mxu0 0
    %2468 = vmatprep.subr.bf16.mxu0 0
    %2469 = vmatpush2.bf16.msra.mxu0 0
    %2470 = vmatprep.subr.bf16.mxu0 0
    %2471 = vmatpush2.bf16.msra.mxu0 0
    %2472 = vmatprep.subr.bf16.mxu0 0
    %2473 = vmatpush2.bf16.msra.mxu0 0
    %2474 = vmatprep.mubr.bf16.mxu0 0
    %2475 = vmatmul.mubr.bf16.gmra.mxu0 %v2393
    %v2476 = vpop.f32.mrf.mxu0
    %v2477 = vadd.f32 0.0, %v2476
    %v2478 = vpop.f32.mrf.mxu0
    %v2479 = vpop.f32.mrf.mxu0
    %v2480 = vpop.f32.mrf.mxu0
    %2481 = vdwg.mxu0
    %v2482 = vld [vmem:[%s10] sm:$0xf]
    %v2483 = vld [vmem:[%s10 + $0x4] sm:$0xf]
    %v2484 = vld [vmem:[%s10 + $0x8] sm:$0xf]
    %v2485 = vld [vmem:[%s10 + $0xc] sm:$0xf]
    %v2486 = vpack.c.bf16 %v2375, %v2375
    %v2487 = vld [vmem:[%s11] sm:$0x1]
    %v2489 = vlaneseq
    %v2490 = vshrl.u32 %v2489, 7
    %v2491 = vsub.s32 0, %v2490
    %v2492 = vrot.slane %v2487, %v2491
    %v2498 = vunpack.c.l.b16 %v2482
    %v2499 = vunpack.c.l.b16 %v2483
    %v2500 = vunpack.c.l.b16 %v2484
    %v2501 = vunpack.c.l.b16 %v2485
    %v2502 = vpack.c.b16 %v2499, %v2498
    %v2503 = vpack.c.b16 %v2501, %v2500
    %v2507 = vsel %vm180, %v2486, 0
    %2509 = vmatprep.subr.bf16.mxu0 0
    %2510 = vmatpush1.bf16.msra.mxu0 0
    %2511 = vmatprep.subr.bf16.mxu0 0
    %2512 = vmatpush1.bf16.msra.mxu0 0
    %2513 = vmatprep.subr.bf16.mxu0 0
    %2514 = vmatpush1.bf16.msra.mxu0 0
    %2515 = vmatprep.subr.bf16.mxu0 0
    %2516 = vmatpush1.bf16.msra.mxu0 0
    %2517 = vmatprep.subr.bf16.mxu0 0
    %2518 = vmatpush1.bf16.msra.mxu0 0
    %2519 = vmatprep.subr.bf16.mxu0 0
    %2520 = vmatpush1.bf16.msra.mxu0 0
    %2521 = vmatprep.subr.bf16.mxu0 0
    %2522 = vmatpush1.bf16.msra.mxu0 %v2503
    %2523 = vmatprep.subr.bf16.mxu0 0
    %2524 = vmatpush1.bf16.msra.mxu0 %v2502
    %2525 = vmatprep.subr.bf16.mxu0 0
    %2526 = vmatpush2.bf16.msra.mxu0 0
    %2527 = vmatprep.subr.bf16.mxu0 0
    %2528 = vmatpush2.bf16.msra.mxu0 0
    %2529 = vmatprep.subr.bf16.mxu0 0
    %2530 = vmatpush2.bf16.msra.mxu0 0
    %2531 = vmatprep.subr.bf16.mxu0 0
    %2532 = vmatpush2.bf16.msra.mxu0 0
    %2533 = vmatprep.subr.bf16.mxu0 0
    %2534 = vmatpush2.bf16.msra.mxu0 0
    %2535 = vmatprep.subr.bf16.mxu0 0
    %2536 = vmatpush2.bf16.msra.mxu0 0
    %2537 = vmatprep.subr.bf16.mxu0 0
    %2538 = vmatpush2.bf16.msra.mxu0 0
    %2539 = vmatprep.subr.bf16.mxu0 0
    %2540 = vmatpush2.bf16.msra.mxu0 0
    %2541 = vmatprep.mubr.bf16.mxu0 0
    %2542 = vmatmul.mubr.bf16.gmra.mxu0 %v2507
    %v2543 = vpop.f32.mrf.mxu0
    %v2544 = vadd.f32 %v2492, %v2543
    %v2545 = vpop.f32.mrf.mxu0
    %v2546 = vpop.f32.mrf.mxu0
    %v2547 = vpop.f32.mrf.mxu0
    %2548 = vdwg.mxu0
    %v2551 = vunpack.c.l.s4 1966171168
    %v2552 = vunpack.c.0.s8 %v2551
    %v2553 = vlaneseq
    %v2554 = vshrl.u32 %v2553, 7
    %v2555 = vsub.s32 %v2552, %v2554
    %v2556 = vrot.slane %v2544, %v2555
    %v2557 = vcombine.high %v2556, %v2556
    %v2559 = vunpack.c.l.s4 1966171168
    %v2560 = vunpack.c.0.s8 %v2559
    %v2561 = vlaneseq
    %v2562 = vshrl.u32 %v2561, 7
    %v2563 = vsub.s32 %v2560, %v2562
    %v2564 = vrot.slane %v2556, %v2563
    %v2566 = vunpack.c.l.s4 1966171168
    %v2567 = vunpack.c.0.s8 %v2566
    %v2568 = vlaneseq
    %v2569 = vshrl.u32 %v2568, 7
    %v2570 = vsub.s32 %v2567, %v2569
    %v2571 = vrot.slane %v2557, %v2570
    %v2572 = vlaneseq
    %v2573 = vshrl.u32 %v2572, 7
    %v2574 = vsub.s32 0, %v2573
    %v2575 = vrot.slane %v2564, %v2574
    %v2576 = vlaneseq
    %v2577 = vshrl.u32 %v2576, 7
    %v2578 = vsub.s32 0, %v2577
    %v2579 = vrot.slane %v2571, %v2578
    %v2582 = vadd.f32 %v222, %v2575
    %v2583 = vadd.f32 %v225, %v2575
    %v2584 = vadd.f32 %v230, %v2579
    %v2585 = vadd.f32 %v233, %v2579
    %v2586 = vtanh.pop %v2582
    %v2587 = vtanh.pop %v2583
    %v2588 = vtanh.pop %v2584
    %v2589 = vtanh.pop %v2585
    %v2590 = vmul.f32 %v2586, %v565
    %v2591 = vmul.f32 %v2587, %v565
    %v2592 = vmul.f32 %v2588, %v565
    %v2593 = vmul.f32 %v2589, %v565
    %v2594 = vsel %vm180, %v2590, 0.0
    %2595 = vadd.xlane.f32.xlu0 %v2594
    %v2596 = vpop.xlane.xlu0 %2595
    %v2597 = vsel %vm180, %v2591, 0.0
    %2598 = vadd.xlane.f32.xlu0 %v2597
    %v2599 = vpop.xlane.xlu0 %2598
    %v2600 = vsel %vm180, %v2592, 0.0
    %2601 = vadd.xlane.f32.xlu0 %v2600
    %v2602 = vpop.xlane.xlu0 %2601
    %v2603 = vsel %vm180, %v2593, 0.0
    %2604 = vadd.xlane.f32.xlu0 %v2603
    %v2605 = vpop.xlane.xlu0 %2604
    %v2610 = vlaneseq
    %v2611 = vshrl.u32 %v2610, 7
    %v2612 = vsub.s32 %v336, %v2611
    %v2613 = vrot.slane %v2596, %v2612
    %v2614 = vlaneseq
    %v2615 = vshrl.u32 %v2614, 7
    %v2616 = vsub.s32 %v591, %v2615
    %v2617 = vrot.slane %v2599, %v2616
    %v2618 = vsel %vm596, %v2617, %v2613
    %v2619 = vlaneseq
    %v2620 = vshrl.u32 %v2619, 7
    %v2621 = vsub.s32 %v336, %v2620
    %v2622 = vrot.slane %v2602, %v2621
    %v2623 = vlaneseq
    %v2624 = vshrl.u32 %v2623, 7
    %v2625 = vsub.s32 %v591, %v2624
    %v2626 = vrot.slane %v2605, %v2625
    %v2627 = vsel %vm596, %v2626, %v2622
    %v2628 = vsel %vm274, %v2627, %v2618
    %v2630 = vsel %vm609, %v2628, -inf
    %2631 = vmax.xlane.f32.xlu0 %v2630
    %v2632 = vpop.xlane.xlu0 %2631
    %v2634 = vlaneseq
    %v2635 = vshrl.u32 %v2634, 7
    %v2636 = vsub.s32 0, %v2635
    %v2637 = vrot.slane %v2632, %v2636
    %v2638 = vlaneseq
    %v2639 = vshrl.u32 %v2638, 7
    %v2640 = vsub.s32 1, %v2639
    %v2641 = vrot.slane %v2632, %v2640
    %v2644 = vsub.f32 %v2596, %v2637
    %v2645 = vsub.f32 %v2599, %v2637
    %v2646 = vsub.f32 %v2602, %v2641
    %v2647 = vsub.f32 %v2605, %v2641
    %v2648 = vmul.f32 %v2644, 1.442695
    %v2649 = vpow.pop %v2648
    %v2650 = vmul.f32 %v2645, 1.442695
    %v2651 = vpow.pop %v2650
    %v2652 = vmul.f32 %v2646, 1.442695
    %v2653 = vpow.pop %v2652
    %v2654 = vmul.f32 %v2647, 1.442695
    %v2655 = vpow.pop %v2654
    %2660 = vset.pattern.permute.xlu0 0
    %2661 = vperm.xlu0 %2660, %v2649
    %v2662 = vpop.permute.xlu0 %2661
    %2663 = vset.pattern.permute.xlu0 0
    %2664 = vperm.xlu0 %2663, %v2651
    %v2665 = vpop.permute.xlu0 %2664
    %2666 = vset.pattern.permute.xlu0 0
    %2667 = vperm.xlu0 %2666, %v2653
    %v2668 = vpop.permute.xlu0 %2667
    %2669 = vset.pattern.permute.xlu0 0
    %2670 = vperm.xlu0 %2669, %v2655
    %v2671 = vpop.permute.xlu0 %2670
    %v2672 = vlaneseq
    %v2673 = vshrl.u32 %v2672, 7
    %v2674 = vsub.s32 %v336, %v2673
    %v2675 = vrot.slane %v2662, %v2674
    %v2676 = vlaneseq
    %v2677 = vshrl.u32 %v2676, 7
    %v2678 = vsub.s32 %v591, %v2677
    %v2679 = vrot.slane %v2665, %v2678
    %v2680 = vsel %vm596, %v2679, %v2675
    %v2681 = vlaneseq
    %v2682 = vshrl.u32 %v2681, 7
    %v2683 = vsub.s32 %v336, %v2682
    %v2684 = vrot.slane %v2668, %v2683
    %v2685 = vlaneseq
    %v2686 = vshrl.u32 %v2685, 7
    %v2687 = vsub.s32 %v591, %v2686
    %v2688 = vrot.slane %v2671, %v2687
    %v2689 = vsel %vm596, %v2688, %v2684
    %v2690 = vsel %vm274, %v2689, %v2680
    %v2692 = vsel %vm609, %v2690, 0.0
    %2693 = vadd.xlane.f32.xlu0 %v2692
    %v2694 = vpop.xlane.xlu0 %2693
    %v2695 = vrcp.pop %v2694
    %v2697 = vlaneseq
    %v2698 = vshrl.u32 %v2697, 7
    %v2699 = vsub.s32 0, %v2698
    %v2700 = vrot.slane %v2695, %v2699
    %v2701 = vlaneseq
    %v2702 = vshrl.u32 %v2701, 7
    %v2703 = vsub.s32 1, %v2702
    %v2704 = vrot.slane %v2695, %v2703
    %v2707 = vmul.f32 %v2649, %v2700
    %v2708 = vmul.f32 %v2651, %v2700
    %v2709 = vmul.f32 %v2653, %v2704
    %v2710 = vmul.f32 %v2655, %v2704
    %2712 = vset.pattern.permute.xlu0 0
    %2713 = vperm.xlu0 %2712, %v2707
    %v2714 = vpop.permute.xlu0 %2713
    %2717 = vset.pattern.permute.xlu0 0
    %2718 = vperm.xlu0 %2717, %v2708
    %v2719 = vpop.permute.xlu0 %2718
    %2722 = vset.pattern.permute.xlu0 0
    %2723 = vperm.xlu0 %2722, %v2709
    %v2724 = vpop.permute.xlu0 %2723
    %2727 = vset.pattern.permute.xlu0 0
    %2728 = vperm.xlu0 %2727, %v2710
    %v2729 = vpop.permute.xlu0 %2728
    %v2731 = vmul.f32 %v2714, %v151
    %v2732 = vmul.f32 %v2719, %v152
    %v2733 = vmul.f32 %v2724, %v153
    %v2734 = vmul.f32 %v2729, %v154
    %v2735 = vsel %vm180, %v2731, 0.0
    %v2736 = vsel %vm180, %v2732, 0.0
    %v2737 = vadd.f32 %v2735, %v2736
    %v2738 = vrot.slane %v2737, 4
    %v2739 = vadd.f32 %v2737, %v2738
    %v2740 = vrot.slane %v2739, 2
    %v2741 = vadd.f32 %v2739, %v2740
    %v2742 = vrot.slane %v2741, 1
    %v2743 = vadd.f32 %v2741, %v2742
    %v2744 = vsel %vm180, %v2733, 0.0
    %v2745 = vsel %vm180, %v2734, 0.0
    %v2746 = vadd.f32 %v2744, %v2745
    %v2747 = vrot.slane %v2746, 4
    %v2748 = vadd.f32 %v2746, %v2747
    %v2749 = vrot.slane %v2748, 2
    %v2750 = vadd.f32 %v2748, %v2749
    %v2751 = vrot.slane %v2750, 1
    %v2752 = vadd.f32 %v2750, %v2751
    %v2753 = vld [vmem:[%s13] sm:$0xff]
    %v2754 = vld [vmem:[%s13 + $0x8] sm:$0xff]
    %v2755 = vpack.c.bf16 %v2477, %v2477
    %v2758 = vunpack.c.l.b16 %v2753
    %v2759 = vunpack.c.h.b16 %v2753
    %v2760 = vunpack.c.l.b16 %v2754
    %v2761 = vunpack.c.h.b16 %v2754
    %v2762 = vpack.c.b16 %v2760, %v2758
    %v2763 = vpack.c.b16 %v2761, %v2759
    %v2767 = vsel %vm746, %v2755, 0
    %2769 = vmatprep.subr.bf16.mxu0 0
    %2770 = vmatpush1.bf16.msra.mxu0 0
    %2771 = vmatprep.subr.bf16.mxu0 0
    %2772 = vmatpush1.bf16.msra.mxu0 0
    %2773 = vmatprep.subr.bf16.mxu0 0
    %2774 = vmatpush1.bf16.msra.mxu0 0
    %2775 = vmatprep.subr.bf16.mxu0 0
    %2776 = vmatpush1.bf16.msra.mxu0 0
    %2777 = vmatprep.subr.bf16.mxu0 0
    %2778 = vmatpush1.bf16.msra.mxu0 0
    %2779 = vmatprep.subr.bf16.mxu0 0
    %2780 = vmatpush1.bf16.msra.mxu0 0
    %2781 = vmatprep.subr.bf16.mxu0 0
    %2782 = vmatpush1.bf16.msra.mxu0 0
    %2783 = vmatprep.subr.bf16.mxu0 %v2763
    %2784 = vmatpush1.bf16.msra.mxu0 %v2762
    %2785 = vmatprep.subr.bf16.mxu0 0
    %2786 = vmatpush2.bf16.msra.mxu0 0
    %2787 = vmatprep.subr.bf16.mxu0 0
    %2788 = vmatpush2.bf16.msra.mxu0 0
    %2789 = vmatprep.subr.bf16.mxu0 0
    %2790 = vmatpush2.bf16.msra.mxu0 0
    %2791 = vmatprep.subr.bf16.mxu0 0
    %2792 = vmatpush2.bf16.msra.mxu0 0
    %2793 = vmatprep.subr.bf16.mxu0 0
    %2794 = vmatpush2.bf16.msra.mxu0 0
    %2795 = vmatprep.subr.bf16.mxu0 0
    %2796 = vmatpush2.bf16.msra.mxu0 0
    %2797 = vmatprep.subr.bf16.mxu0 0
    %2798 = vmatpush2.bf16.msra.mxu0 0
    %2799 = vmatprep.subr.bf16.mxu0 0
    %2800 = vmatpush2.bf16.msra.mxu0 0
    %2801 = vmatprep.mubr.bf16.mxu0 0
    %2802 = vmatmul.mubr.bf16.gmra.mxu0 %v2767
    %v2803 = vpop.f32.mrf.mxu0
    %v2804 = vadd.f32 0.0, %v2803
    %v2805 = vpop.f32.mrf.mxu0
    %v2806 = vadd.f32 0.0, %v2805
    %v2807 = vpop.f32.mrf.mxu0
    %v2808 = vpop.f32.mrf.mxu0
    %2809 = vdwg.mxu0
    %v2810 = vld [vmem:[%s14] sm:$0xff]
    %v2811 = vld [vmem:[%s14 + $0x8] sm:$0xff]
    %v2812 = vld [vmem:[%s14 + $0x10] sm:$0xff]
    %v2813 = vld [vmem:[%s14 + $0x18] sm:$0xff]
    %v2814 = vpack.c.bf16 %v2743, %v2743
    %v2815 = vpack.c.bf16 %v2752, %v2752
    %v2818 = vunpack.c.l.b16 %v2814
    %v2819 = vunpack.c.l.b16 %v2815
    %v2820 = vsel %vm274, %v2819, %v2818
    %v2821 = vpack.c.b16 %v2820, %v2820
    %v2826 = vunpack.c.l.b16 %v2810
    %v2827 = vunpack.c.h.b16 %v2810
    %v2828 = vunpack.c.l.b16 %v2811
    %v2829 = vunpack.c.h.b16 %v2811
    %v2830 = vunpack.c.l.b16 %v2812
    %v2831 = vunpack.c.h.b16 %v2812
    %v2832 = vunpack.c.l.b16 %v2813
    %v2833 = vunpack.c.h.b16 %v2813
    %v2834 = vpack.c.b16 %v2828, %v2826
    %v2835 = vpack.c.b16 %v2829, %v2827
    %v2836 = vpack.c.b16 %v2832, %v2830
    %v2837 = vpack.c.b16 %v2833, %v2831
    %v2843 = vsel %vm180, %v2821, 0
    %2845 = vmatprep.subr.bf16.mxu0 0
    %2846 = vmatpush1.bf16.msra.mxu0 0
    %2847 = vmatprep.subr.bf16.mxu0 0
    %2848 = vmatpush1.bf16.msra.mxu0 0
    %2849 = vmatprep.subr.bf16.mxu0 0
    %2850 = vmatpush1.bf16.msra.mxu0 0
    %2851 = vmatprep.subr.bf16.mxu0 0
    %2852 = vmatpush1.bf16.msra.mxu0 0
    %2853 = vmatprep.subr.bf16.mxu0 0
    %2854 = vmatpush1.bf16.msra.mxu0 0
    %2855 = vmatprep.subr.bf16.mxu0 0
    %2856 = vmatpush1.bf16.msra.mxu0 0
    %2857 = vmatprep.subr.bf16.mxu0 %v2837
    %2858 = vmatpush1.bf16.msra.mxu0 %v2836
    %2859 = vmatprep.subr.bf16.mxu0 %v2835
    %2860 = vmatpush1.bf16.msra.mxu0 %v2834
    %2861 = vmatprep.subr.bf16.mxu0 0
    %2862 = vmatpush2.bf16.msra.mxu0 0
    %2863 = vmatprep.subr.bf16.mxu0 0
    %2864 = vmatpush2.bf16.msra.mxu0 0
    %2865 = vmatprep.subr.bf16.mxu0 0
    %2866 = vmatpush2.bf16.msra.mxu0 0
    %2867 = vmatprep.subr.bf16.mxu0 0
    %2868 = vmatpush2.bf16.msra.mxu0 0
    %2869 = vmatprep.subr.bf16.mxu0 0
    %2870 = vmatpush2.bf16.msra.mxu0 0
    %2871 = vmatprep.subr.bf16.mxu0 0
    %2872 = vmatpush2.bf16.msra.mxu0 0
    %2873 = vmatprep.subr.bf16.mxu0 0
    %2874 = vmatpush2.bf16.msra.mxu0 0
    %2875 = vmatprep.subr.bf16.mxu0 0
    %2876 = vmatpush2.bf16.msra.mxu0 0
    %2877 = vmatprep.mubr.bf16.mxu0 0
    %2878 = vmatmul.mubr.bf16.gmra.mxu0 %v2843
    %v2879 = vpop.f32.mrf.mxu0
    %v2880 = vadd.f32 0.0, %v2879
    %v2881 = vpop.f32.mrf.mxu0
    %v2882 = vadd.f32 0.0, %v2881
    %v2883 = vpop.f32.mrf.mxu0
    %v2884 = vpop.f32.mrf.mxu0
    %2885 = vdwg.mxu0
    %v2886 = vadd.f32 %v2806, %v2882
    %v2887 = vld [vmem:[%s15] sm:$0x1]
    %v2889 = vlaneseq
    %v2890 = vshrl.u32 %v2889, 7
    %v2891 = vsub.s32 0, %v2890
    %v2892 = vrot.slane %v2887, %v2891
    %v2894 = vadd.f32 %v2886, %v2892
    %2895 = vrot.lane.b32.xlu0 %v2544, 96
    %v2896 = vpop.permute.xlu0 %2895
    %v2898 = vadd.f32 %v2894, %v2896
    %v2899 = vxor.u32 %v2898, 2147483648
    %v2900 = vmul.f32 %v2899, 1.442695
    %v2901 = vpow.pop %v2900
    %v2902 = vadd.f32 %v2901, 1.0
    %v2903 = vrcp.pop %v2902
    %v2904 = vmul.f32 1.0, %v2903
    %2905 = vrot.lane.b32.xlu0 %v2544, 32
    %v2906 = vpop.permute.xlu0 %2905
    %v2908 = vmul.f32 %v2904, %v2906
    %2910 = vrot.lane.b32.xlu0 %v2908, 64
    %v2911 = vpop.permute.xlu0 %2910
    %v2913 = vadd.f32 %v2894, %v2911
    %v2914 = vtanh.pop %v2913
    %v2915 = vsub.f32 1.0, %v2904
    %2917 = vrot.lane.b32.xlu0 %v2914, 96
    %v2918 = vpop.permute.xlu0 %2917
    %v2920 = vmul.f32 %v2915, %v2918
    %2922 = vrot.lane.b32.xlu0 %v2375, 32
    %v2923 = vpop.permute.xlu0 %2922
    %v2925 = vmul.f32 %v2904, %v2923
    %v2926 = vadd.f32 %v2920, %v2925
    %v2927 = vld [vmem:[%s16] sm:$0xf]
    %v2928 = vld [vmem:[%s16 + $0x4] sm:$0xf]
    %v2929 = vld [vmem:[%s16 + $0x8] sm:$0xf]
    %v2930 = vld [vmem:[%s16 + $0xc] sm:$0xf]
    %v2931 = vpack.c.bf16 %v2926, %v2926
    %2933 = vrot.lane.b32.xlu0 %v2931, 96
    %v2934 = vpop.permute.xlu0 %2933
    %v2939 = vunpack.c.l.b16 %v2927
    %v2940 = vunpack.c.l.b16 %v2928
    %v2941 = vunpack.c.l.b16 %v2929
    %v2942 = vunpack.c.l.b16 %v2930
    %v2943 = vpack.c.b16 %v2940, %v2939
    %v2944 = vpack.c.b16 %v2942, %v2941
    %v2948 = vsel %vm180, %v2934, 0
    %2950 = vmatprep.subr.bf16.mxu0 0
    %2951 = vmatpush1.bf16.msra.mxu0 0
    %2952 = vmatprep.subr.bf16.mxu0 0
    %2953 = vmatpush1.bf16.msra.mxu0 0
    %2954 = vmatprep.subr.bf16.mxu0 0
    %2955 = vmatpush1.bf16.msra.mxu0 0
    %2956 = vmatprep.subr.bf16.mxu0 0
    %2957 = vmatpush1.bf16.msra.mxu0 0
    %2958 = vmatprep.subr.bf16.mxu0 0
    %2959 = vmatpush1.bf16.msra.mxu0 0
    %2960 = vmatprep.subr.bf16.mxu0 0
    %2961 = vmatpush1.bf16.msra.mxu0 0
    %2962 = vmatprep.subr.bf16.mxu0 0
    %2963 = vmatpush1.bf16.msra.mxu0 %v2944
    %2964 = vmatprep.subr.bf16.mxu0 0
    %2965 = vmatpush1.bf16.msra.mxu0 %v2943
    %2966 = vmatprep.subr.bf16.mxu0 0
    %2967 = vmatpush2.bf16.msra.mxu0 0
    %2968 = vmatprep.subr.bf16.mxu0 0
    %2969 = vmatpush2.bf16.msra.mxu0 0
    %2970 = vmatprep.subr.bf16.mxu0 0
    %2971 = vmatpush2.bf16.msra.mxu0 0
    %2972 = vmatprep.subr.bf16.mxu0 0
    %2973 = vmatpush2.bf16.msra.mxu0 0
    %2974 = vmatprep.subr.bf16.mxu0 0
    %2975 = vmatpush2.bf16.msra.mxu0 0
    %2976 = vmatprep.subr.bf16.mxu0 0
    %2977 = vmatpush2.bf16.msra.mxu0 0
    %2978 = vmatprep.subr.bf16.mxu0 0
    %2979 = vmatpush2.bf16.msra.mxu0 0
    %2980 = vmatprep.subr.bf16.mxu0 0
    %2981 = vmatpush2.bf16.msra.mxu0 0
    %2982 = vmatprep.mubr.bf16.mxu0 0
    %2983 = vmatmul.mubr.bf16.gmra.mxu0 %v2948
    %v2984 = vpop.f32.mrf.mxu0
    %v2985 = vadd.f32 %v2804, %v2984
    %v2986 = vpop.f32.mrf.mxu0
    %v2987 = vpop.f32.mrf.mxu0
    %v2988 = vpop.f32.mrf.mxu0
    %2989 = vdwg.mxu0
    %v2990 = vadd.f32 %v2985, %v2880
    %v2991 = vld [vmem:[%s17] sm:$0x1]
    %v2993 = vlaneseq
    %v2994 = vshrl.u32 %v2993, 7
    %v2995 = vsub.s32 0, %v2994
    %v2996 = vrot.slane %v2991, %v2995
    %v2998 = vadd.f32 %v2990, %v2996
    %s2999 = scalar_lea.vmem [#allocation7], 8
    %3000 = vst [vmem:[%s2999] sm:$0x3] %v2998
    %3002 = vrot.lane.b32.xlu0 %v2926, 96
    %v3003 = vpop.permute.xlu0 %3002
    %3005 = vst.msk [vmem:[#allocation2] sm:$0x3] %vm332, %v3003
    %s3006 = sld [smem:[#allocation4 + $0x4]]
    %p3007 = scmp.eq.s32.totalorder %s3006, 1
    // Predicated region
    $region102: #{seq2seq_forward.1} parent=1 // pred_check
      %p3008 = pneg %p3007
    $region103: #{seq2seq_forward.1} parent=1 // pred_check_branch
      %3010 = sbr.rel (%p3008) target = $region105
    $region104: #{seq2seq_forward.1} parent=1 // pred_region
      %s3011 = scalar_lea.vmem %s1, 8
      %v3012 = vld [vmem:[%s3011] sm:$0x3]
      %3013 = vset.pattern.permute.xlu0 0
      %3014 = vperm.xlu0 %3013, %v3012
      %v3015 = vpop.permute.xlu0 %3014
      %vm3016 = vcmp.eq.s32.totalorder %v336, %v3015
      %v3017 = vsel %vm3016, 1, 0
      %v3018 = vcvt.s32.f32 %v3017
      %3019 = vst [vmem:[#allocation3] sm:$0x3] %v3018
    $region105: #{seq2seq_forward.1} parent=1 // pred_fallthru
      _
    %p3020 = scmp.eq.s32.totalorder %s3006, 0
    // Predicated region
    $region106: #{seq2seq_forward.1} parent=1 // pred_check
      %p3021 = pneg %p3020
    $region107: #{seq2seq_forward.1} parent=1 // pred_check_branch
      %3023 = sbr.rel (%p3021) target = $region109
    $region108: #{seq2seq_forward.1} parent=1 // pred_region
      %v3024 = vsel %vm96, %v2998, -inf
      %3025 = vmax.xlane.f32.xlu0 %v3024
      %v3026 = vpop.xlane.xlu0 %3025
      %vm3027 = vcmp.eq.f32.partialorder %v2998, %v3026
      %v3028 = vsel %vm3027, %v336, 128
      %v3029 = vsel %vm96, %v3028, 2147483647
      %v3030 = vand.u32 %v3029, 65535
      %v3031 = vshra.s32 %v3029, 16
      %v3032 = vcvt.s32.f32 %v3030
      %v3033 = vcvt.s32.f32 %v3031
      %3034 = vmin.xlane.f32.xlu0 %v3033
      %v3035 = vpop.xlane.xlu0 %3034
      %vm3036 = vcmp.eq.f32.partialorder %v3033, %v3035
      %v3037 = vsel %vm3036, %v3032, inf
      %3038 = vmin.xlane.f32.xlu0 %v3037
      %v3039 = vpop.xlane.xlu0 %3038
      %v3040 = vcvt.f32.s32 %v3039
      %v3041 = vcvt.f32.s32 %v3035
      %v3042 = vshll.u32 %v3041, 16
      %v3043 = vadd.s32 %v3042, %v3040
      %vm3044 = vcmp.eq.s32.totalorder %v336, %v3043
      %v3045 = vsel %vm3044, 1, 0
      %v3046 = vcvt.s32.f32 %v3045
      %3047 = vst [vmem:[#allocation3] sm:$0x3] %v3046
    $region109: #{seq2seq_forward.1} parent=1 // pred_fallthru
      _
    %v3048 = vld [vmem:[#allocation2] sm:$0x3]
    %v3049 = vld [vmem:[#allocation3] sm:$0x3]
    %v3050 = vld [vmem:[%s12] sm:$0xf]
    %v3051 = vld [vmem:[%s12 + $0x4] sm:$0xf]
    %v3052 = vld [vmem:[%s12 + $0x8] sm:$0xf]
    %v3053 = vld [vmem:[%s12 + $0xc] sm:$0xf]
    %v3054 = vld [vmem:[%s12 + $0x10] sm:$0xf]
    %v3055 = vld [vmem:[%s12 + $0x14] sm:$0xf]
    %v3056 = vld [vmem:[%s12 + $0x18] sm:$0xf]
    %v3057 = vld [vmem:[%s12 + $0x1c] sm:$0xf]
    %v3058 = vld [vmem:[%s12 + $0x20] sm:$0xf]
    %v3059 = vld [vmem:[%s12 + $0x24] sm:$0xf]
    %v3060 = vld [vmem:[%s12 + $0x28] sm:$0xf]
    %v3061 = vld [vmem:[%s12 + $0x2c] sm:$0xf]
    %v3062 = vld [vmem:[%s12 + $0x30] sm:$0xf]
    %v3063 = vld [vmem:[%s12 + $0x34] sm:$0xf]
    %v3064 = vld [vmem:[%s12 + $0x38] sm:$0xf]
    %v3065 = vld [vmem:[%s12 + $0x3c] sm:$0xf]
    %v3066 = vpack.c.bf16 %v3049, %v3049
    %v3083 = vunpack.c.l.b16 %v3050
    %v3084 = vunpack.c.l.b16 %v3051
    %v3085 = vunpack.c.l.b16 %v3052
    %v3086 = vunpack.c.l.b16 %v3053
    %v3087 = vunpack.c.l.b16 %v3054
    %v3088 = vunpack.c.l.b16 %v3055
    %v3089 = vunpack.c.l.b16 %v3056
    %v3090 = vunpack.c.l.b16 %v3057
    %v3091 = vunpack.c.l.b16 %v3058
    %v3092 = vunpack.c.l.b16 %v3059
    %v3093 = vunpack.c.l.b16 %v3060
    %v3094 = vunpack.c.l.b16 %v3061
    %v3095 = vunpack.c.l.b16 %v3062
    %v3096 = vunpack.c.l.b16 %v3063
    %v3097 = vunpack.c.l.b16 %v3064
    %v3098 = vunpack.c.l.b16 %v3065
    %v3099 = vpack.c.b16 %v3084, %v3083
    %v3100 = vpack.c.b16 %v3086, %v3085
    %v3101 = vpack.c.b16 %v3088, %v3087
    %v3102 = vpack.c.b16 %v3090, %v3089
    %v3103 = vpack.c.b16 %v3092, %v3091
    %v3104 = vpack.c.b16 %v3094, %v3093
    %v3105 = vpack.c.b16 %v3096, %v3095
    %v3106 = vpack.c.b16 %v3098, %v3097
    %3115 = vmatprep.subr.bf16.mxu0 0
    %3116 = vmatpush1.bf16.msra.mxu0 %v3106
    %3117 = vmatprep.subr.bf16.mxu0 0
    %3118 = vmatpush1.bf16.msra.mxu0 %v3105
    %3119 = vmatprep.subr.bf16.mxu0 0
    %3120 = vmatpush1.bf16.msra.mxu0 %v3104
    %3121 = vmatprep.subr.bf16.mxu0 0
    %3122 = vmatpush1.bf16.msra.mxu0 %v3103
    %3123 = vmatprep.subr.bf16.mxu0 0
    %3124 = vmatpush1.bf16.msra.mxu0 %v3102
    %3125 = vmatprep.subr.bf16.mxu0 0
    %3126 = vmatpush1.bf16.msra.mxu0 %v3101
    %3127 = vmatprep.subr.bf16.mxu0 0
    %3128 = vmatpush1.bf16.msra.mxu0 %v3100
    %3129 = vmatprep.subr.bf16.mxu0 0
    %3130 = vmatpush1.bf16.msra.mxu0 %v3099
    %3131 = vmatprep.subr.bf16.mxu0 0
    %3132 = vmatpush2.bf16.msra.mxu0 0
    %3133 = vmatprep.subr.bf16.mxu0 0
    %3134 = vmatpush2.bf16.msra.mxu0 0
    %3135 = vmatprep.subr.bf16.mxu0 0
    %3136 = vmatpush2.bf16.msra.mxu0 0
    %3137 = vmatprep.subr.bf16.mxu0 0
    %3138 = vmatpush2.bf16.msra.mxu0 0
    %3139 = vmatprep.subr.bf16.mxu0 0
    %3140 = vmatpush2.bf16.msra.mxu0 0
    %3141 = vmatprep.subr.bf16.mxu0 0
    %3142 = vmatpush2.bf16.msra.mxu0 0
    %3143 = vmatprep.subr.bf16.mxu0 0
    %3144 = vmatpush2.bf16.msra.mxu0 0
    %3145 = vmatprep.subr.bf16.mxu0 0
    %3146 = vmatpush2.bf16.msra.mxu0 0
    %3147 = vmatprep.mubr.bf16.mxu0 0
    %3148 = vmatmul.mubr.bf16.gmra.mxu0 %v3066
    %v3149 = vpop.f32.mrf.mxu0
    %v3150 = vadd.f32 0.0, %v3149
    %v3151 = vpop.f32.mrf.mxu0
    %v3152 = vpop.f32.mrf.mxu0
    %v3153 = vpop.f32.mrf.mxu0
    %3154 = vdwg.mxu0
    %v3155 = vld [vmem:[%s10] sm:$0xf]
    %v3156 = vld [vmem:[%s10 + $0x4] sm:$0xf]
    %v3157 = vld [vmem:[%s10 + $0x8] sm:$0xf]
    %v3158 = vld [vmem:[%s10 + $0xc] sm:$0xf]
    %v3159 = vpack.c.bf16 %v3048, %v3048
    %v3160 = vld [vmem:[%s11] sm:$0x1]
    %v3162 = vlaneseq
    %v3163 = vshrl.u32 %v3162, 7
    %v3164 = vsub.s32 0, %v3163
    %v3165 = vrot.slane %v3160, %v3164
    %v3171 = vunpack.c.l.b16 %v3155
    %v3172 = vunpack.c.l.b16 %v3156
    %v3173 = vunpack.c.l.b16 %v3157
    %v3174 = vunpack.c.l.b16 %v3158
    %v3175 = vpack.c.b16 %v3172, %v3171
    %v3176 = vpack.c.b16 %v3174, %v3173
    %v3180 = vsel %vm180, %v3159, 0
    %3182 = vmatprep.subr.bf16.mxu0 0
    %3183 = vmatpush1.bf16.msra.mxu0 0
    %3184 = vmatprep.subr.bf16.mxu0 0
    %3185 = vmatpush1.bf16.msra.mxu0 0
    %3186 = vmatprep.subr.bf16.mxu0 0
    %3187 = vmatpush1.bf16.msra.mxu0 0
    %3188 = vmatprep.subr.bf16.mxu0 0
    %3189 = vmatpush1.bf16.msra.mxu0 0
    %3190 = vmatprep.subr.bf16.mxu0 0
    %3191 = vmatpush1.bf16.msra.mxu0 0
    %3192 = vmatprep.subr.bf16.mxu0 0
    %3193 = vmatpush1.bf16.msra.mxu0 0
    %3194 = vmatprep.subr.bf16.mxu0 0
    %3195 = vmatpush1.bf16.msra.mxu0 %v3176
    %3196 = vmatprep.subr.bf16.mxu0 0
    %3197 = vmatpush1.bf16.msra.mxu0 %v3175
    %3198 = vmatprep.subr.bf16.mxu0 0
    %3199 = vmatpush2.bf16.msra.mxu0 0
    %3200 = vmatprep.subr.bf16.mxu0 0
    %3201 = vmatpush2.bf16.msra.mxu0 0
    %3202 = vmatprep.subr.bf16.mxu0 0
    %3203 = vmatpush2.bf16.msra.mxu0 0
    %3204 = vmatprep.subr.bf16.mxu0 0
    %3205 = vmatpush2.bf16.msra.mxu0 0
    %3206 = vmatprep.subr.bf16.mxu0 0
    %3207 = vmatpush2.bf16.msra.mxu0 0
    %3208 = vmatprep.subr.bf16.mxu0 0
    %3209 = vmatpush2.bf16.msra.mxu0 0
    %3210 = vmatprep.subr.bf16.mxu0 0
    %3211 = vmatpush2.bf16.msra.mxu0 0
    %3212 = vmatprep.subr.bf16.mxu0 0
    %3213 = vmatpush2.bf16.msra.mxu0 0
    %3214 = vmatprep.mubr.bf16.mxu0 0
    %3215 = vmatmul.mubr.bf16.gmra.mxu0 %v3180
    %v3216 = vpop.f32.mrf.mxu0
    %v3217 = vadd.f32 %v3165, %v3216
    %v3218 = vpop.f32.mrf.mxu0
    %v3219 = vpop.f32.mrf.mxu0
    %v3220 = vpop.f32.mrf.mxu0
    %3221 = vdwg.mxu0
    %v3224 = vunpack.c.l.s4 1966171168
    %v3225 = vunpack.c.0.s8 %v3224
    %v3226 = vlaneseq
    %v3227 = vshrl.u32 %v3226, 7
    %v3228 = vsub.s32 %v3225, %v3227
    %v3229 = vrot.slane %v3217, %v3228
    %v3230 = vcombine.high %v3229, %v3229
    %v3232 = vunpack.c.l.s4 1966171168
    %v3233 = vunpack.c.0.s8 %v3232
    %v3234 = vlaneseq
    %v3235 = vshrl.u32 %v3234, 7
    %v3236 = vsub.s32 %v3233, %v3235
    %v3237 = vrot.slane %v3229, %v3236
    %v3239 = vunpack.c.l.s4 1966171168
    %v3240 = vunpack.c.0.s8 %v3239
    %v3241 = vlaneseq
    %v3242 = vshrl.u32 %v3241, 7
    %v3243 = vsub.s32 %v3240, %v3242
    %v3244 = vrot.slane %v3230, %v3243
    %v3245 = vlaneseq
    %v3246 = vshrl.u32 %v3245, 7
    %v3247 = vsub.s32 0, %v3246
    %v3248 = vrot.slane %v3237, %v3247
    %v3249 = vlaneseq
    %v3250 = vshrl.u32 %v3249, 7
    %v3251 = vsub.s32 0, %v3250
    %v3252 = vrot.slane %v3244, %v3251
    %v3255 = vadd.f32 %v222, %v3248
    %v3256 = vadd.f32 %v225, %v3248
    %v3257 = vadd.f32 %v230, %v3252
    %v3258 = vadd.f32 %v233, %v3252
    %v3259 = vtanh.pop %v3255
    %v3260 = vtanh.pop %v3256
    %v3261 = vtanh.pop %v3257
    %v3262 = vtanh.pop %v3258
    %v3263 = vmul.f32 %v3259, %v565
    %v3264 = vmul.f32 %v3260, %v565
    %v3265 = vmul.f32 %v3261, %v565
    %v3266 = vmul.f32 %v3262, %v565
    %v3267 = vsel %vm180, %v3263, 0.0
    %3268 = vadd.xlane.f32.xlu0 %v3267
    %v3269 = vpop.xlane.xlu0 %3268
    %v3270 = vsel %vm180, %v3264, 0.0
    %3271 = vadd.xlane.f32.xlu0 %v3270
    %v3272 = vpop.xlane.xlu0 %3271
    %v3273 = vsel %vm180, %v3265, 0.0
    %3274 = vadd.xlane.f32.xlu0 %v3273
    %v3275 = vpop.xlane.xlu0 %3274
    %v3276 = vsel %vm180, %v3266, 0.0
    %3277 = vadd.xlane.f32.xlu0 %v3276
    %v3278 = vpop.xlane.xlu0 %3277
    %v3283 = vlaneseq
    %v3284 = vshrl.u32 %v3283, 7
    %v3285 = vsub.s32 %v336, %v3284
    %v3286 = vrot.slane %v3269, %v3285
    %v3287 = vlaneseq
    %v3288 = vshrl.u32 %v3287, 7
    %v3289 = vsub.s32 %v591, %v3288
    %v3290 = vrot.slane %v3272, %v3289
    %v3291 = vsel %vm596, %v3290, %v3286
    %v3292 = vlaneseq
    %v3293 = vshrl.u32 %v3292, 7
    %v3294 = vsub.s32 %v336, %v3293
    %v3295 = vrot.slane %v3275, %v3294
    %v3296 = vlaneseq
    %v3297 = vshrl.u32 %v3296, 7
    %v3298 = vsub.s32 %v591, %v3297
    %v3299 = vrot.slane %v3278, %v3298
    %v3300 = vsel %vm596, %v3299, %v3295
    %v3301 = vsel %vm274, %v3300, %v3291
    %v3303 = vsel %vm609, %v3301, -inf
    %3304 = vmax.xlane.f32.xlu0 %v3303
    %v3305 = vpop.xlane.xlu0 %3304
    %v3307 = vlaneseq
    %v3308 = vshrl.u32 %v3307, 7
    %v3309 = vsub.s32 0, %v3308
    %v3310 = vrot.slane %v3305, %v3309
    %v3311 = vlaneseq
    %v3312 = vshrl.u32 %v3311, 7
    %v3313 = vsub.s32 1, %v3312
    %v3314 = vrot.slane %v3305, %v3313
    %v3317 = vsub.f32 %v3269, %v3310
    %v3318 = vsub.f32 %v3272, %v3310
    %v3319 = vsub.f32 %v3275, %v3314
    %v3320 = vsub.f32 %v3278, %v3314
    %v3321 = vmul.f32 %v3317, 1.442695
    %v3322 = vpow.pop %v3321
    %v3323 = vmul.f32 %v3318, 1.442695
    %v3324 = vpow.pop %v3323
    %v3325 = vmul.f32 %v3319, 1.442695
    %v3326 = vpow.pop %v3325
    %v3327 = vmul.f32 %v3320, 1.442695
    %v3328 = vpow.pop %v3327
    %3333 = vset.pattern.permute.xlu0 0
    %3334 = vperm.xlu0 %3333, %v3322
    %v3335 = vpop.permute.xlu0 %3334
    %3336 = vset.pattern.permute.xlu0 0
    %3337 = vperm.xlu0 %3336, %v3324
    %v3338 = vpop.permute.xlu0 %3337
    %3339 = vset.pattern.permute.xlu0 0
    %3340 = vperm.xlu0 %3339, %v3326
    %v3341 = vpop.permute.xlu0 %3340
    %3342 = vset.pattern.permute.xlu0 0
    %3343 = vperm.xlu0 %3342, %v3328
    %v3344 = vpop.permute.xlu0 %3343
    %v3345 = vlaneseq
    %v3346 = vshrl.u32 %v3345, 7
    %v3347 = vsub.s32 %v336, %v3346
    %v3348 = vrot.slane %v3335, %v3347
    %v3349 = vlaneseq
    %v3350 = vshrl.u32 %v3349, 7
    %v3351 = vsub.s32 %v591, %v3350
    %v3352 = vrot.slane %v3338, %v3351
    %v3353 = vsel %vm596, %v3352, %v3348
    %v3354 = vlaneseq
    %v3355 = vshrl.u32 %v3354, 7
    %v3356 = vsub.s32 %v336, %v3355
    %v3357 = vrot.slane %v3341, %v3356
    %v3358 = vlaneseq
    %v3359 = vshrl.u32 %v3358, 7
    %v3360 = vsub.s32 %v591, %v3359
    %v3361 = vrot.slane %v3344, %v3360
    %v3362 = vsel %vm596, %v3361, %v3357
    %v3363 = vsel %vm274, %v3362, %v3353
    %v3365 = vsel %vm609, %v3363, 0.0
    %3366 = vadd.xlane.f32.xlu0 %v3365
    %v3367 = vpop.xlane.xlu0 %3366
    %v3368 = vrcp.pop %v3367
    %v3370 = vlaneseq
    %v3371 = vshrl.u32 %v3370, 7
    %v3372 = vsub.s32 0, %v3371
    %v3373 = vrot.slane %v3368, %v3372
    %v3374 = vlaneseq
    %v3375 = vshrl.u32 %v3374, 7
    %v3376 = vsub.s32 1, %v3375
    %v3377 = vrot.slane %v3368, %v3376
    %v3380 = vmul.f32 %v3322, %v3373
    %v3381 = vmul.f32 %v3324, %v3373
    %v3382 = vmul.f32 %v3326, %v3377
    %v3383 = vmul.f32 %v3328, %v3377
    %3385 = vset.pattern.permute.xlu0 0
    %3386 = vperm.xlu0 %3385, %v3380
    %v3387 = vpop.permute.xlu0 %3386
    %3390 = vset.pattern.permute.xlu0 0
    %3391 = vperm.xlu0 %3390, %v3381
    %v3392 = vpop.permute.xlu0 %3391
    %3395 = vset.pattern.permute.xlu0 0
    %3396 = vperm.xlu0 %3395, %v3382
    %v3397 = vpop.permute.xlu0 %3396
    %3400 = vset.pattern.permute.xlu0 0
    %3401 = vperm.xlu0 %3400, %v3383
    %v3402 = vpop.permute.xlu0 %3401
    %v3404 = vmul.f32 %v3387, %v151
    %v3405 = vmul.f32 %v3392, %v152
    %v3406 = vmul.f32 %v3397, %v153
    %v3407 = vmul.f32 %v3402, %v154
    %v3408 = vsel %vm180, %v3404, 0.0
    %v3409 = vsel %vm180, %v3405, 0.0
    %v3410 = vadd.f32 %v3408, %v3409
    %v3411 = vrot.slane %v3410, 4
    %v3412 = vadd.f32 %v3410, %v3411
    %v3413 = vrot.slane %v3412, 2
    %v3414 = vadd.f32 %v3412, %v3413
    %v3415 = vrot.slane %v3414, 1
    %v3416 = vadd.f32 %v3414, %v3415
    %v3417 = vsel %vm180, %v3406, 0.0
    %v3418 = vsel %vm180, %v3407, 0.0
    %v3419 = vadd.f32 %v3417, %v3418
    %v3420 = vrot.slane %v3419, 4
    %v3421 = vadd.f32 %v3419, %v3420
    %v3422 = vrot.slane %v3421, 2
    %v3423 = vadd.f32 %v3421, %v3422
    %v3424 = vrot.slane %v3423, 1
    %v3425 = vadd.f32 %v3423, %v3424
    %v3426 = vld [vmem:[%s13] sm:$0xff]
    %v3427 = vld [vmem:[%s13 + $0x8] sm:$0xff]
    %v3428 = vpack.c.bf16 %v3150, %v3150
    %v3431 = vunpack.c.l.b16 %v3426
    %v3432 = vunpack.c.h.b16 %v3426
    %v3433 = vunpack.c.l.b16 %v3427
    %v3434 = vunpack.c.h.b16 %v3427
    %v3435 = vpack.c.b16 %v3433, %v3431
    %v3436 = vpack.c.b16 %v3434, %v3432
    %v3440 = vsel %vm746, %v3428, 0
    %3442 = vmatprep.subr.bf16.mxu0 0
    %3443 = vmatpush1.bf16.msra.mxu0 0
    %3444 = vmatprep.subr.bf16.mxu0 0
    %3445 = vmatpush1.bf16.msra.mxu0 0
    %3446 = vmatprep.subr.bf16.mxu0 0
    %3447 = vmatpush1.bf16.msra.mxu0 0
    %3448 = vmatprep.subr.bf16.mxu0 0
    %3449 = vmatpush1.bf16.msra.mxu0 0
    %3450 = vmatprep.subr.bf16.mxu0 0
    %3451 = vmatpush1.bf16.msra.mxu0 0
    %3452 = vmatprep.subr.bf16.mxu0 0
    %3453 = vmatpush1.bf16.msra.mxu0 0
    %3454 = vmatprep.subr.bf16.mxu0 0
    %3455 = vmatpush1.bf16.msra.mxu0 0
    %3456 = vmatprep.subr.bf16.mxu0 %v3436
    %3457 = vmatpush1.bf16.msra.mxu0 %v3435
    %3458 = vmatprep.subr.bf16.mxu0 0
    %3459 = vmatpush2.bf16.msra.mxu0 0
    %3460 = vmatprep.subr.bf16.mxu0 0
    %3461 = vmatpush2.bf16.msra.mxu0 0
    %3462 = vmatprep.subr.bf16.mxu0 0
    %3463 = vmatpush2.bf16.msra.mxu0 0
    %3464 = vmatprep.subr.bf16.mxu0 0
    %3465 = vmatpush2.bf16.msra.mxu0 0
    %3466 = vmatprep.subr.bf16.mxu0 0
    %3467 = vmatpush2.bf16.msra.mxu0 0
    %3468 = vmatprep.subr.bf16.mxu0 0
    %3469 = vmatpush2.bf16.msra.mxu0 0
    %3470 = vmatprep.subr.bf16.mxu0 0
    %3471 = vmatpush2.bf16.msra.mxu0 0
    %3472 = vmatprep.subr.bf16.mxu0 0
    %3473 = vmatpush2.bf16.msra.mxu0 0
    %3474 = vmatprep.mubr.bf16.mxu0 0
    %3475 = vmatmul.mubr.bf16.gmra.mxu0 %v3440
    %v3476 = vpop.f32.mrf.mxu0
    %v3477 = vadd.f32 0.0, %v3476
    %v3478 = vpop.f32.mrf.mxu0
    %v3479 = vadd.f32 0.0, %v3478
    %v3480 = vpop.f32.mrf.mxu0
    %v3481 = vpop.f32.mrf.mxu0
    %3482 = vdwg.mxu0
    %v3483 = vld [vmem:[%s14] sm:$0xff]
    %v3484 = vld [vmem:[%s14 + $0x8] sm:$0xff]
    %v3485 = vld [vmem:[%s14 + $0x10] sm:$0xff]
    %v3486 = vld [vmem:[%s14 + $0x18] sm:$0xff]
    %v3487 = vpack.c.bf16 %v3416, %v3416
    %v3488 = vpack.c.bf16 %v3425, %v3425
    %v3491 = vunpack.c.l.b16 %v3487
    %v3492 = vunpack.c.l.b16 %v3488
    %v3493 = vsel %vm274, %v3492, %v3491
    %v3494 = vpack.c.b16 %v3493, %v3493
    %v3499 = vunpack.c.l.b16 %v3483
    %v3500 = vunpack.c.h.b16 %v3483
    %v3501 = vunpack.c.l.b16 %v3484
    %v3502 = vunpack.c.h.b16 %v3484
    %v3503 = vunpack.c.l.b16 %v3485
    %v3504 = vunpack.c.h.b16 %v3485
    %v3505 = vunpack.c.l.b16 %v3486
    %v3506 = vunpack.c.h.b16 %v3486
    %v3507 = vpack.c.b16 %v3501, %v3499
    %v3508 = vpack.c.b16 %v3502, %v3500
    %v3509 = vpack.c.b16 %v3505, %v3503
    %v3510 = vpack.c.b16 %v3506, %v3504
    %v3516 = vsel %vm180, %v3494, 0
    %3518 = vmatprep.subr.bf16.mxu0 0
    %3519 = vmatpush1.bf16.msra.mxu0 0
    %3520 = vmatprep.subr.bf16.mxu0 0
    %3521 = vmatpush1.bf16.msra.mxu0 0
    %3522 = vmatprep.subr.bf16.mxu0 0
    %3523 = vmatpush1.bf16.msra.mxu0 0
    %3524 = vmatprep.subr.bf16.mxu0 0
    %3525 = vmatpush1.bf16.msra.mxu0 0
    %3526 = vmatprep.subr.bf16.mxu0 0
    %3527 = vmatpush1.bf16.msra.mxu0 0
    %3528 = vmatprep.subr.bf16.mxu0 0
    %3529 = vmatpush1.bf16.msra.mxu0 0
    %3530 = vmatprep.subr.bf16.mxu0 %v3510
    %3531 = vmatpush1.bf16.msra.mxu0 %v3509
    %3532 = vmatprep.subr.bf16.mxu0 %v3508
    %3533 = vmatpush1.bf16.msra.mxu0 %v3507
    %3534 = vmatprep.subr.bf16.mxu0 0
    %3535 = vmatpush2.bf16.msra.mxu0 0
    %3536 = vmatprep.subr.bf16.mxu0 0
    %3537 = vmatpush2.bf16.msra.mxu0 0
    %3538 = vmatprep.subr.bf16.mxu0 0
    %3539 = vmatpush2.bf16.msra.mxu0 0
    %3540 = vmatprep.subr.bf16.mxu0 0
    %3541 = vmatpush2.bf16.msra.mxu0 0
    %3542 = vmatprep.subr.bf16.mxu0 0
    %3543 = vmatpush2.bf16.msra.mxu0 0
    %3544 = vmatprep.subr.bf16.mxu0 0
    %3545 = vmatpush2.bf16.msra.mxu0 0
    %3546 = vmatprep.subr.bf16.mxu0 0
    %3547 = vmatpush2.bf16.msra.mxu0 0
    %3548 = vmatprep.subr.bf16.mxu0 0
    %3549 = vmatpush2.bf16.msra.mxu0 0
    %3550 = vmatprep.mubr.bf16.mxu0 0
    %3551 = vmatmul.mubr.bf16.gmra.mxu0 %v3516
    %v3552 = vpop.f32.mrf.mxu0
    %v3553 = vadd.f32 0.0, %v3552
    %v3554 = vpop.f32.mrf.mxu0
    %v3555 = vadd.f32 0.0, %v3554
    %v3556 = vpop.f32.mrf.mxu0
    %v3557 = vpop.f32.mrf.mxu0
    %3558 = vdwg.mxu0
    %v3559 = vadd.f32 %v3479, %v3555
    %v3560 = vld [vmem:[%s15] sm:$0x1]
    %v3562 = vlaneseq
    %v3563 = vshrl.u32 %v3562, 7
    %v3564 = vsub.s32 0, %v3563
    %v3565 = vrot.slane %v3560, %v3564
    %v3567 = vadd.f32 %v3559, %v3565
    %3568 = vrot.lane.b32.xlu0 %v3217, 96
    %v3569 = vpop.permute.xlu0 %3568
    %v3571 = vadd.f32 %v3567, %v3569
    %v3572 = vxor.u32 %v3571, 2147483648
    %v3573 = vmul.f32 %v3572, 1.442695
    %v3574 = vpow.pop %v3573
    %v3575 = vadd.f32 %v3574, 1.0
    %v3576 = vrcp.pop %v3575
    %v3577 = vmul.f32 1.0, %v3576
    %3578 = vrot.lane.b32.xlu0 %v3217, 32
    %v3579 = vpop.permute.xlu0 %3578
    %v3581 = vmul.f32 %v3577, %v3579
    %3583 = vrot.lane.b32.xlu0 %v3581, 64
    %v3584 = vpop.permute.xlu0 %3583
    %v3586 = vadd.f32 %v3567, %v3584
    %v3587 = vtanh.pop %v3586
    %v3588 = vsub.f32 1.0, %v3577
    %3590 = vrot.lane.b32.xlu0 %v3587, 96
    %v3591 = vpop.permute.xlu0 %3590
    %v3593 = vmul.f32 %v3588, %v3591
    %3595 = vrot.lane.b32.xlu0 %v3048, 32
    %v3596 = vpop.permute.xlu0 %3595
    %v3598 = vmul.f32 %v3577, %v3596
    %v3599 = vadd.f32 %v3593, %v3598
    %v3600 = vld [vmem:[%s16] sm:$0xf]
    %v3601 = vld [vmem:[%s16 + $0x4] sm:$0xf]
    %v3602 = vld [vmem:[%s16 + $0x8] sm:$0xf]
    %v3603 = vld [vmem:[%s16 + $0xc] sm:$0xf]
    %v3604 = vpack.c.bf16 %v3599, %v3599
    %3606 = vrot.lane.b32.xlu0 %v3604, 96
    %v3607 = vpop.permute.xlu0 %3606
    %v3612 = vunpack.c.l.b16 %v3600
    %v3613 = vunpack.c.l.b16 %v3601
    %v3614 = vunpack.c.l.b16 %v3602
    %v3615 = vunpack.c.l.b16 %v3603
    %v3616 = vpack.c.b16 %v3613, %v3612
    %v3617 = vpack.c.b16 %v3615, %v3614
    %v3621 = vsel %vm180, %v3607, 0
    %3623 = vmatprep.subr.bf16.mxu0 0
    %3624 = vmatpush1.bf16.msra.mxu0 0
    %3625 = vmatprep.subr.bf16.mxu0 0
    %3626 = vmatpush1.bf16.msra.mxu0 0
    %3627 = vmatprep.subr.bf16.mxu0 0
    %3628 = vmatpush1.bf16.msra.mxu0 0
    %3629 = vmatprep.subr.bf16.mxu0 0
    %3630 = vmatpush1.bf16.msra.mxu0 0
    %3631 = vmatprep.subr.bf16.mxu0 0
    %3632 = vmatpush1.bf16.msra.mxu0 0
    %3633 = vmatprep.subr.bf16.mxu0 0
    %3634 = vmatpush1.bf16.msra.mxu0 0
    %3635 = vmatprep.subr.bf16.mxu0 0
    %3636 = vmatpush1.bf16.msra.mxu0 %v3617
    %3637 = vmatprep.subr.bf16.mxu0 0
    %3638 = vmatpush1.bf16.msra.mxu0 %v3616
    %3639 = vmatprep.subr.bf16.mxu0 0
    %3640 = vmatpush2.bf16.msra.mxu0 0
    %3641 = vmatprep.subr.bf16.mxu0 0
    %3642 = vmatpush2.bf16.msra.mxu0 0
    %3643 = vmatprep.subr.bf16.mxu0 0
    %3644 = vmatpush2.bf16.msra.mxu0 0
    %3645 = vmatprep.subr.bf16.mxu0 0
    %3646 = vmatpush2.bf16.msra.mxu0 0
    %3647 = vmatprep.subr.bf16.mxu0 0
    %3648 = vmatpush2.bf16.msra.mxu0 0
    %3649 = vmatprep.subr.bf16.mxu0 0
    %3650 = vmatpush2.bf16.msra.mxu0 0
    %3651 = vmatprep.subr.bf16.mxu0 0
    %3652 = vmatpush2.bf16.msra.mxu0 0
    %3653 = vmatprep.subr.bf16.mxu0 0
    %3654 = vmatpush2.bf16.msra.mxu0 0
    %3655 = vmatprep.mubr.bf16.mxu0 0
    %3656 = vmatmul.mubr.bf16.gmra.mxu0 %v3621
    %v3657 = vpop.f32.mrf.mxu0
    %v3658 = vadd.f32 %v3477, %v3657
    %v3659 = vpop.f32.mrf.mxu0
    %v3660 = vpop.f32.mrf.mxu0
    %v3661 = vpop.f32.mrf.mxu0
    %3662 = vdwg.mxu0
    %v3663 = vadd.f32 %v3658, %v3553
    %v3664 = vld [vmem:[%s17] sm:$0x1]
    %v3666 = vlaneseq
    %v3667 = vshrl.u32 %v3666, 7
    %v3668 = vsub.s32 0, %v3667
    %v3669 = vrot.slane %v3664, %v3668
    %v3671 = vadd.f32 %v3663, %v3669
    %s3672 = scalar_lea.vmem [#allocation7], 10
    %3673 = vst [vmem:[%s3672] sm:$0x3] %v3671
    %3675 = vrot.lane.b32.xlu0 %v3599, 96
    %v3676 = vpop.permute.xlu0 %3675
    %3678 = vst.msk [vmem:[#allocation2] sm:$0x3] %vm332, %v3676
    %s3679 = sld [smem:[#allocation4 + $0x5]]
    %p3680 = scmp.eq.s32.totalorder %s3679, 1
    // Predicated region
    $region110: #{seq2seq_forward.1} parent=1 // pred_check
      %p3681 = pneg %p3680
    $region111: #{seq2seq_forward.1} parent=1 // pred_check_branch
      %3683 = sbr.rel (%p3681) target = $region113
    $region112: #{seq2seq_forward.1} parent=1 // pred_region
      %s3684 = scalar_lea.vmem %s1, 10
      %v3685 = vld [vmem:[%s3684] sm:$0x3]
      %3686 = vset.pattern.permute.xlu0 0
      %3687 = vperm.xlu0 %3686, %v3685
      %v3688 = vpop.permute.xlu0 %3687
      %vm3689 = vcmp.eq.s32.totalorder %v336, %v3688
      %v3690 = vsel %vm3689, 1, 0
      %v3691 = vcvt.s32.f32 %v3690
      %3692 = vst [vmem:[#allocation3] sm:$0x3] %v3691
    $region113: #{seq2seq_forward.1} parent=1 // pred_fallthru
      _
    %p3693 = scmp.eq.s32.totalorder %s3679, 0
    // Predicated region
    $region114: #{seq2seq_forward.1} parent=1 // pred_check
      %p3694 = pneg %p3693
    $region115: #{seq2seq_forward.1} parent=1 // pred_check_branch
      %3696 = sbr.rel (%p3694) target = $region117
    $region116: #{seq2seq_forward.1} parent=1 // pred_region
      %v3697 = vsel %vm96, %v3671, -inf
      %3698 = vmax.xlane.f32.xlu0 %v3697
      %v3699 = vpop.xlane.xlu0 %3698
      %vm3700 = vcmp.eq.f32.partialorder %v3671, %v3699
      %v3701 = vsel %vm3700, %v336, 128
      %v3702 = vsel %vm96, %v3701, 2147483647
      %v3703 = vand.u32 %v3702, 65535
      %v3704 = vshra.s32 %v3702, 16
      %v3705 = vcvt.s32.f32 %v3703
      %v3706 = vcvt.s32.f32 %v3704
      %3707 = vmin.xlane.f32.xlu0 %v3706
      %v3708 = vpop.xlane.xlu0 %3707
      %vm3709 = vcmp.eq.f32.partialorder %v3706, %v3708
      %v3710 = vsel %vm3709, %v3705, inf
      %3711 = vmin.xlane.f32.xlu0 %v3710
      %v3712 = vpop.xlane.xlu0 %3711
      %v3713 = vcvt.f32.s32 %v3712
      %v3714 = vcvt.f32.s32 %v3708
      %v3715 = vshll.u32 %v3714, 16
      %v3716 = vadd.s32 %v3715, %v3713
      %vm3717 = vcmp.eq.s32.totalorder %v336, %v3716
      %v3718 = vsel %vm3717, 1, 0
      %v3719 = vcvt.s32.f32 %v3718
      %3720 = vst [vmem:[#allocation3] sm:$0x3] %v3719
    $region117: #{seq2seq_forward.1} parent=1 // pred_fallthru
      _
    // Predicated region
    $region118: #{seq2seq_forward.1} parent=1 // pred_check
      _
    $region119: #{seq2seq_forward.1} parent=1 // pred_check_branch
      %3722 = sbr.rel (0) target = $region121
    $region120: #{seq2seq_forward.1} parent=1 // pred_region
      %s3724 = ssub.s32 192, 192
      %3725 = vsyncadd [#allocation5], %s3724
      %s3726 = sshll.u32 [#allocation7], 4
      %s3727 = int_to_ptr.vmem [resolvable:$true] %s3726
      %3732 = dma.vmem_to_hbm [thread:$0]  %s3727, 192, %s18, [#allocation5], 32, 32, 2
    $region121: #{seq2seq_forward.1} parent=1 // pred_fallthru
      _
    // Predicated region
    $region122: #{seq2seq_forward.1} parent=1 // pred_check
      _
    $region123: #{seq2seq_forward.1} parent=1 // pred_check_branch
      %3734 = sbr.rel (0) target = $region125
    $region124: #{seq2seq_forward.1} parent=1 // pred_region
      %3735 = dma.done [#allocation5], 192
    $region125: #{seq2seq_forward.1} parent=1 // pred_fallthru
      _
    %3736 = vsyncpa [#allocation5], 1
    %3737 = vsyncpa [#allocation6], 1

</llo_original>
